<compile_context>
chip_gen: v7x
topology: tpu7x:2x2x1
jax: 0.10.0
libtpu: 0.0.40
codegen_flags: <defaults>
</compile_context>

<pallas_src>
import functools

import jax
import jax.numpy as jnp
from jax import lax
from jax.experimental import pallas as pl
from jax.experimental.pallas import tpu as pltpu

# ---- module constants (the PyTorch file references these globals) ----------
NUM_OCTAVES = 4
OCTAVE = 12
SEQ_LEN = 8
HIDDEN = 128          # nn.LSTM hidden_size (small, lane-aligned stand-in for 1000)
NOTE_IN = NUM_OCTAVES * 3


def _round_up(x, m):
    return (x + m - 1) // m * m


# ------------------------------- kernel helpers ------------------------------
def _lstm_cell(pre_gates, h, c, whh_ref):
    """One LSTM step. `pre_gates` already holds x@W_ih^T + (b_ih+b_hh) in f32.

    Only the recurrent matmul operands are bf16; accumulation and all gate
    element-wise math stay f32 (v5e has no bf16 VPU path anyway)."""
    H = whh_ref.shape[0]
    gates = pre_gates + jnp.dot(h.astype(jnp.bfloat16), whh_ref[...],
                                preferred_element_type=jnp.float32)
    i_g = jax.nn.sigmoid(gates[:, 0 * H:1 * H])
    f_g = jax.nn.sigmoid(gates[:, 1 * H:2 * H])
    g_g = jnp.tanh(gates[:, 2 * H:3 * H])
    o_g = jax.nn.sigmoid(gates[:, 3 * H:4 * H])
    c_new = f_g * c + i_g * g_g
    h_new = o_g * jnp.tanh(c_new)
    return h_new, c_new


def _recurrence(pre_ref, rows, num_steps, whh_ref, h0, c0, unroll=2):
    """Serial LSTM recurrence over `num_steps`.

    lax.fori_loop bounds the live set to one step's projection slice (the
    fully-unrolled Python loop let the compiler hoist every slice load and
    spill); the manual 2x body unroll keeps some scheduling slack without the
    vreg pressure of a full unroll.  Each slice read is contiguous and
    sublane-aligned (rows is a multiple of 8, start hinted via multiple_of)."""
    assert num_steps % unroll == 0 and rows % 8 == 0

    def body(i, carry):
        h, c = carry
        for u in range(unroll):
            start = pl.multiple_of((i * unroll + u) * rows, rows)
            h, c = _lstm_cell(pre_ref[pl.ds(start, rows), :], h, c, whh_ref)
        return h, c

    return lax.fori_loop(0, num_steps // unroll, body, (h0, c0))


# ------------------------------- kernel --------------------------------------
def _fused_kernel(x_ref, nwih_ref, nwhh_ref, nb_ref,
                  twih_ref, twhh_ref, tb_ref,
                  dw_ref, db_ref,
                  out_ref,
                  pre_n_ref, pre_t_ref,
                  *, batch_tile):
    """One batch-chunk end-to-end: note LSTM -> time LSTM -> dense + sigmoid.

    x_ref    : (OCTAVE*SEQ_LEN*batch_tile, NOTE_IN) bf16, rows (o, s, b) major
    nwih     : (NOTE_IN, 4H) bf16, nwhh: (H, 4H) bf16, nb: (1, 4H) f32
    twih     : (H, 4H) bf16,       twhh: (H, 4H) bf16, tb: (1, 4H) f32
    dw       : (1, H) f32, db: (1, 1) f32
    out_ref  : (batch_tile, 1) f32 probabilities
    pre_n_ref: VMEM (OCTAVE*SEQ_LEN*batch_tile, 4H) f32  hoisted note projection
    pre_t_ref: VMEM (SEQ_LEN*batch_tile, 4H) f32         hoisted time projection
    """
    H = nwhh_ref.shape[0]
    B1 = SEQ_LEN * batch_tile          # note-LSTM "batch" rows per chunk

    # -------- note LSTM (T = OCTAVE) ----------------------------------------
    # Hoisted input projection for all 12 steps: one bf16 MXU matmul, stored
    # in VMEM scratch so the serial loop only reads one slice per step.
    pre_n_ref[...] = (jnp.dot(x_ref[...], nwih_ref[...],
                              preferred_element_type=jnp.float32)
                      + nb_ref[...])

    zn = jnp.zeros((B1, H), jnp.float32)
    h, _ = _recurrence(pre_n_ref, B1, OCTAVE, nwhh_ref, zn, zn)

    # -------- time LSTM (T = SEQ_LEN) ---------------------------------------
    # Rows of h are (s, b) time-major within the chunk, so each step's
    # projection slice below is contiguous and sublane-aligned.
    pre_t_ref[...] = (jnp.dot(h.astype(jnp.bfloat16), twih_ref[...],
                              preferred_element_type=jnp.float32)
                      + tb_ref[...])

    zt = jnp.zeros((batch_tile, H), jnp.float32)
    ht, _ = _recurrence(pre_t_ref, batch_tile, SEQ_LEN, twhh_ref, zt, zt)

    # -------- dense(H -> 1) + sigmoid: VPU multiply + lane reduce ------------
    logit = jnp.sum(ht * dw_ref[...], axis=-1, keepdims=True) + db_ref[...]
    out_ref[...] = jax.nn.sigmoid(logit)


# ------------------------------ wrapper ---------------------------------------
def _fused_forward(x, params, batch_tile, n_chunks):
    H = HIDDEN
    B1 = SEQ_LEN * batch_tile
    batch_pad = n_chunks * batch_tile
    bf16 = jnp.bfloat16
    kernel = functools.partial(_fused_kernel, batch_tile=batch_tile)

    # Advisory cost estimate: the kernel is tiny and latency-bound, so this
    # lets XLA overlap surrounding ops instead of serializing on it.
    flops = 2 * (OCTAVE * batch_pad * SEQ_LEN * NOTE_IN * 4 * H
                 + (OCTAVE + 1) * batch_pad * SEQ_LEN * H * 4 * H
                 + SEQ_LEN * batch_pad * H * 4 * H)
    transcendentals = 5 * H * (OCTAVE * batch_pad * SEQ_LEN + SEQ_LEN * batch_pad)
    bytes_accessed = (int(x.size) * 2
                      + sum(int(p.size) for p in params.values()) * 4
                      + batch_pad * 4)

    def w_spec(shape):
        return pl.BlockSpec(shape, lambda c: (0, 0))   # weights stay resident

    return pl.pallas_call(
        kernel,
        out_shape=jax.ShapeDtypeStruct((batch_pad, 1), jnp.float32),
        grid_spec=pltpu.PrefetchScalarGridSpec(
            num_scalar_prefetch=0,
            grid=(n_chunks,),
            in_specs=[
                pl.BlockSpec((OCTAVE * B1, NOTE_IN), lambda c: (c, 0)),  # note inputs (bf16)
                w_spec((NOTE_IN, 4 * H)),     # note W_ih^T (bf16)
                w_spec((H, 4 * H)),           # note W_hh^T (bf16)
                w_spec((1, 4 * H)),           # note b_ih + b_hh (f32)
                w_spec((H, 4 * H)),           # time W_ih^T (bf16)
                w_spec((H, 4 * H)),           # time W_hh^T (bf16)
                w_spec((1, 4 * H)),           # time b_ih + b_hh (f32)
                w_spec((1, H)),               # dense w row (f32)
                w_spec((1, 1)),               # dense b (f32)
            ],
            out_specs=pl.BlockSpec((batch_tile, 1), lambda c: (c, 0)),
            scratch_shapes=[
                pltpu.VMEM((OCTAVE * B1, 4 * H), jnp.float32),   # hoisted note proj
                pltpu.VMEM((B1, 4 * H), jnp.float32),            # hoisted time proj
            ],
        ),
        compiler_params=pltpu.CompilerParams(
            dimension_semantics=("parallel",)),       # chunks shard across v7x cores
        cost_estimate=pl.CostEstimate(flops=flops,
                                      transcendentals=transcendentals,
                                      bytes_accessed=bytes_accessed),
    )(x,
      params["note_wih"].astype(bf16), params["note_whh"].astype(bf16),
      params["note_b"],
      params["time_wih"].astype(bf16), params["time_whh"].astype(bf16),
      params["time_b"],
      params["dense_w"], params["dense_b"])


@jax.jit
def lstm_baseline_forward(data, params):
    """Mirrors LstmBaseline.forward (the unused second arg `_` is dropped)."""
    batch = data.shape[0]

    # Batch-chunk tile: multiple of 8 (sublane alignment), capped at 32 so the
    # per-chunk VMEM scratch (~192 KiB per batch element, f32) plus weights and
    # double buffers fits comfortably inside the default scoped VMEM on every
    # generation (v5e 16 MiB / v6e 32 MiB / v7x 32 MiB of 64 MiB physical).
    batch_tile = min(_round_up(batch, 8), 32)
    batch_pad = _round_up(batch, batch_tile)
    n_chunks = batch_pad // batch_tile

    # (b,S,O*NO,3) -> (b,S,O,NO*3), pad batch, then lay rows out as
    # (chunk, octave, seq, batch_in_chunk): chunk-contiguous for the 1-D grid,
    # octave-major for the hoisted note projection, and time-major inside each
    # octave block so the time-LSTM per-step slices are contiguous & aligned.
    x = data.reshape(batch, SEQ_LEN, OCTAVE, NOTE_IN)
    if batch_pad != batch:
        x = jnp.pad(x, ((0, batch_pad - batch), (0, 0), (0, 0), (0, 0)))
    x = x.reshape(n_chunks, batch_tile, SEQ_LEN, OCTAVE, NOTE_IN)
    x = jnp.transpose(x, (0, 3, 2, 1, 4))
    x = x.reshape(n_chunks * OCTAVE * SEQ_LEN * batch_tile, NOTE_IN)
    x = x.astype(jnp.bfloat16)                       # bf16 MXU operands

    out = _fused_forward(x, params, batch_tile, n_chunks)   # (batch_pad, 1)
    return out[:batch]


# ---------------------------- reference (JAX, f32) ----------------------------
def _lstm_ref(x, w_ih_t, w_hh_t, b):
    T, B, I = x.shape
    H = w_hh_t.shape[0]

    def step(carry, xt):
        h, c = carry
        gates = xt @ w_ih_t + h @ w_hh_t + b[0]
        i = jax.nn.sigmoid(gates[:, 0 * H:1 * H])
        f = jax.nn.sigmoid(gates[:, 1 * H:2 * H])
        g = jnp.tanh(gates[:, 2 * H:3 * H])
        o = jax.nn.sigmoid(gates[:, 3 * H:4 * H])
        c = f * c + i * g
        h = o * jnp.tanh(c)
        return (h, c), None

    (h, _), _ = lax.scan(step, (jnp.zeros((B, H)), jnp.zeros((B, H))), x)
    return h


def _forward_ref(data, params):
    batch = data.shape[0]
    x = data.reshape(batch * SEQ_LEN, OCTAVE, NOTE_IN)
    x = jnp.transpose(x, (1, 0, 2))
    note_last = _lstm_ref(x, params["note_wih"], params["note_whh"], params["note_b"])
    t_in = jnp.transpose(note_last.reshape(batch, SEQ_LEN, HIDDEN), (1, 0, 2))
    time_last = _lstm_ref(t_in, params["time_wih"], params["time_whh"], params["time_b"])
    logit = jnp.sum(time_last * params["dense_w"], axis=-1, keepdims=True) + params["dense_b"]
    return jax.nn.sigmoid(logit)


# ------------------------------ param init -----------------------------------
def init_params(key):
    ks = jax.random.split(key, 10)
    k = 1.0 / jnp.sqrt(HIDDEN)

    def u(key, shape):
        return jax.random.uniform(key, shape, jnp.float32, -k, k)

    return {
        # note LSTM: input NOTE_IN -> HIDDEN (weights stored pre-transposed)
        "note_wih": u(ks[0], (NOTE_IN, 4 * HIDDEN)),
        "note_whh": u(ks[1], (HIDDEN, 4 * HIDDEN)),
        "note_b":   u(ks[2], (1, 4 * HIDDEN)) + u(ks[3], (1, 4 * HIDDEN)),  # b_ih + b_hh
        # time LSTM: HIDDEN -> HIDDEN
        "time_wih": u(ks[4], (HIDDEN, 4 * HIDDEN)),
        "time_whh": u(ks[5], (HIDDEN, 4 * HIDDEN)),
        "time_b":   u(ks[6], (1, 4 * HIDDEN)) + u(ks[7], (1, 4 * HIDDEN)),  # b_ih + b_hh
        # dense HIDDEN -> 1 (stored as a (1, H) row for the in-kernel VPU reduce)
        "dense_w":  u(ks[8], (1, HIDDEN)),
        "dense_b":  u(ks[9], (1, 1)),
    }


# --------------------------------- main ---------------------------------------
if __name__ == "__main__":
    key = jax.random.PRNGKey(0)
    pkey, dkey = jax.random.split(key)

    params = init_params(pkey)
    batch = 2
    data = jax.random.uniform(
        dkey, (batch, SEQ_LEN, OCTAVE * NUM_OCTAVES, 3), jnp.float32)

    probs = lstm_baseline_forward(data, params)
    probs = jax.block_until_ready(probs)

    ref = _forward_ref(data, params)
    assert probs.shape == (batch, 1), probs.shape
    # bf16 MXU operands -> tolerance relaxed from 1e-4 to 2e-2 (f32 reference)
    assert jnp.allclose(probs, ref, rtol=2e-2, atol=2e-2), (probs, ref)

    print("KERNEL_OK")
</pallas_src>

<mosaic_0001>
module attributes {stable_mosaic.version = 11 : i64} {
  func.func @_fused_kernel(%arg0: i32, %arg1: memref<768x12xbf16, #tpu.memory_space<vmem>>, %arg2: memref<12x512xbf16, #tpu.memory_space<vmem>>, %arg3: memref<128x512xbf16, #tpu.memory_space<vmem>>, %arg4: memref<1x512xf32, #tpu.memory_space<vmem>>, %arg5: memref<128x512xbf16, #tpu.memory_space<vmem>>, %arg6: memref<128x512xbf16, #tpu.memory_space<vmem>>, %arg7: memref<1x512xf32, #tpu.memory_space<vmem>>, %arg8: memref<1x128xf32, #tpu.memory_space<vmem>>, %arg9: memref<1x1xf32, #tpu.memory_space<vmem>>, %arg10: memref<8x1xf32, #tpu.memory_space<vmem>>, %arg11: memref<768x512xf32, #tpu.memory_space<vmem>>, %arg12: memref<64x512xf32, #tpu.memory_space<vmem>>) attributes {dimension_semantics = [#tpu.dimension_semantics<parallel>], iteration_bounds = array<i64: 1>, scalar_prefetch = 0 : i64, scratch_operands = 2 : i64, tpu.core_type = #tpu.core_type<tc>, window_params = [{transform_indices = @transform_0, window_bounds = array<i64: 768, 12>}, {pipeline_mode = #tpu.pipeline_mode<synchronous>, transform_indices = @transform_1, window_bounds = array<i64: 12, 512>}, {pipeline_mode = #tpu.pipeline_mode<synchronous>, transform_indices = @transform_2, window_bounds = array<i64: 128, 512>}, {pipeline_mode = #tpu.pipeline_mode<synchronous>, transform_indices = @transform_3, window_bounds = array<i64: 1, 512>}, {pipeline_mode = #tpu.pipeline_mode<synchronous>, transform_indices = @transform_4, window_bounds = array<i64: 128, 512>}, {pipeline_mode = #tpu.pipeline_mode<synchronous>, transform_indices = @transform_5, window_bounds = array<i64: 128, 512>}, {pipeline_mode = #tpu.pipeline_mode<synchronous>, transform_indices = @transform_6, window_bounds = array<i64: 1, 512>}, {pipeline_mode = #tpu.pipeline_mode<synchronous>, transform_indices = @transform_7, window_bounds = array<i64: 1, 128>}, {pipeline_mode = #tpu.pipeline_mode<synchronous>, transform_indices = @transform_8, window_bounds = array<i64: 1, 1>}, {transform_indices = @transform_9, window_bounds = array<i64: 8, 1>}]} {
    %c0 = arith.constant 0 : index
    %c0_0 = arith.constant 0 : index
    %0 = vector.load %arg1[%c0, %c0_0] : memref<768x12xbf16, #tpu.memory_space<vmem>>, vector<768x12xbf16>
    %c0_1 = arith.constant 0 : index
    %c0_2 = arith.constant 0 : index
    %1 = vector.load %arg2[%c0_1, %c0_2] : memref<12x512xbf16, #tpu.memory_space<vmem>>, vector<12x512xbf16>
    %cst = arith.constant dense<0.000000e+00> : vector<768x512xf32>
    %2 = tpu.matmul %0, %1, %cst {dimension_numbers = #tpu.dot_dimension_numbers<[1], [0], [0], [1], [0, 0, 1, 1], [], []>} : vector<768x12xbf16>, vector<12x512xbf16>, vector<768x512xf32> -> vector<768x512xf32>
    %c0_3 = arith.constant 0 : index
    %c0_4 = arith.constant 0 : index
    %3 = vector.load %arg4[%c0_3, %c0_4] : memref<1x512xf32, #tpu.memory_space<vmem>>, vector<1x512xf32>
    %4 = vector.broadcast %3 : vector<1x512xf32> to vector<768x512xf32>
    %5 = arith.addf %2, %4 : vector<768x512xf32>
    %c0_5 = arith.constant 0 : index
    %c0_6 = arith.constant 0 : index
    %6 = vector.load %arg11[%c0_5, %c0_6] : memref<768x512xf32, #tpu.memory_space<vmem>>, vector<768x512xf32>
    tpu.vector_store %arg11[%c0_5, %c0_6], %5 {strides = array<i32>} : memref<768x512xf32, #tpu.memory_space<vmem>>, vector<768x512xf32>,
    %cst_7 = arith.constant 0.000000e+00 : f32
    %7 = vector.broadcast %cst_7 : f32 to vector<64x128xf32>
    %c0_i32 = arith.constant 0 : i32
    %c6_i32 = arith.constant 6 : i32
    %8 = arith.addi %c0_i32, %c6_i32 : i32
    %c1_i32 = arith.constant 1 : i32
    %9:2 = scf.for %arg13 = %c0_i32 to %8 step %c1_i32 iter_args(%arg14 = %7, %arg15 = %7) -> (vector<64x128xf32>, vector<64x128xf32>)  : i32 {
      %c2_i32 = arith.constant 2 : i32
      %34 = arith.muli %arg13, %c2_i32 : i32
      %c0_i32_28 = arith.constant 0 : i32
      %35 = arith.addi %34, %c0_i32_28 : i32
      %c64_i32 = arith.constant 64 : i32
      %36 = arith.muli %35, %c64_i32 : i32
      %37 = tpu.assume_multiple %36, 64 : i32
      %38 = arith.index_cast %37 : i32 to index
      %c0_29 = arith.constant 0 : index
      %39 = vector.load %arg11[%38, %c0_29] : memref<768x512xf32, #tpu.memory_space<vmem>>, vector<64x512xf32>
      %40 = arith.truncf %arg14 : vector<64x128xf32> to vector<64x128xbf16>
      %c0_30 = arith.constant 0 : index
      %c0_31 = arith.constant 0 : index
      %41 = vector.load %arg3[%c0_30, %c0_31] : memref<128x512xbf16, #tpu.memory_space<vmem>>, vector<128x512xbf16>
      %cst_32 = arith.constant dense<0.000000e+00> : vector<64x512xf32>
      %42 = tpu.matmul %40, %41, %cst_32 {dimension_numbers = #tpu.dot_dimension_numbers<[1], [0], [0], [1], [0, 0, 1, 1], [], []>} : vector<64x128xbf16>, vector<128x512xbf16>, vector<64x512xf32> -> vector<64x512xf32>
      %43 = arith.addf %39, %42 : vector<64x512xf32>
      %44 = vector.extract_strided_slice %43 {offsets = [0, 0], sizes = [64, 128], strides = [1, 1]} : vector<64x512xf32> to vector<64x128xf32>
      %45 = arith.negf %44 : vector<64x128xf32>
      %46 = math.exp %45 : vector<64x128xf32>
      %cst_33 = arith.constant 1.000000e+00 : f32
      %47 = vector.broadcast %cst_33 : f32 to vector<64x128xf32>
      %48 = arith.addf %47, %46 : vector<64x128xf32>
      %49 = arith.divf %47, %48 : vector<64x128xf32>
      %50 = vector.extract_strided_slice %43 {offsets = [0, 128], sizes = [64, 128], strides = [1, 1]} : vector<64x512xf32> to vector<64x128xf32>
      %51 = arith.negf %50 : vector<64x128xf32>
      %52 = math.exp %51 : vector<64x128xf32>
      %cst_34 = arith.constant 1.000000e+00 : f32
      %53 = vector.broadcast %cst_34 : f32 to vector<64x128xf32>
      %54 = arith.addf %53, %52 : vector<64x128xf32>
      %55 = arith.divf %53, %54 : vector<64x128xf32>
      %56 = vector.extract_strided_slice %43 {offsets = [0, 256], sizes = [64, 128], strides = [1, 1]} : vector<64x512xf32> to vector<64x128xf32>
      %57 = math.tanh %56 : vector<64x128xf32>
      %58 = vector.extract_strided_slice %43 {offsets = [0, 384], sizes = [64, 128], strides = [1, 1]} : vector<64x512xf32> to vector<64x128xf32>
      %59 = arith.negf %58 : vector<64x128xf32>
      %60 = math.exp %59 : vector<64x128xf32>
      %cst_35 = arith.constant 1.000000e+00 : f32
      %61 = vector.broadcast %cst_35 : f32 to vector<64x128xf32>
      %62 = arith.addf %61, %60 : vector<64x128xf32>
      %63 = arith.divf %61, %62 : vector<64x128xf32>
      %64 = arith.mulf %55, %arg15 : vector<64x128xf32>
      %65 = arith.mulf %49, %57 : vector<64x128xf32>
      %66 = arith.addf %64, %65 : vector<64x128xf32>
      %67 = math.tanh %66 : vector<64x128xf32>
      %68 = arith.mulf %63, %67 : vector<64x128xf32>
      %c2_i32_36 = arith.constant 2 : i32
      %69 = arith.muli %arg13, %c2_i32_36 : i32
      %c1_i32_37 = arith.constant 1 : i32
      %70 = arith.addi %69, %c1_i32_37 : i32
      %c64_i32_38 = arith.constant 64 : i32
      %71 = arith.muli %70, %c64_i32_38 : i32
      %72 = tpu.assume_multiple %71, 64 : i32
      %73 = arith.index_cast %72 : i32 to index
      %c0_39 = arith.constant 0 : index
      %74 = vector.load %arg11[%73, %c0_39] : memref<768x512xf32, #tpu.memory_space<vmem>>, vector<64x512xf32>
      %75 = arith.truncf %68 : vector<64x128xf32> to vector<64x128xbf16>
      %c0_40 = arith.constant 0 : index
      %c0_41 = arith.constant 0 : index
      %76 = vector.load %arg3[%c0_40, %c0_41] : memref<128x512xbf16, #tpu.memory_space<vmem>>, vector<128x512xbf16>
      %cst_42 = arith.constant dense<0.000000e+00> : vector<64x512xf32>
      %77 = tpu.matmul %75, %76, %cst_42 {dimension_numbers = #tpu.dot_dimension_numbers<[1], [0], [0], [1], [0, 0, 1, 1], [], []>} : vector<64x128xbf16>, vector<128x512xbf16>, vector<64x512xf32> -> vector<64x512xf32>
      %78 = arith.addf %74, %77 : vector<64x512xf32>
      %79 = vector.extract_strided_slice %78 {offsets = [0, 0], sizes = [64, 128], strides = [1, 1]} : vector<64x512xf32> to vector<64x128xf32>
      %80 = arith.negf %79 : vector<64x128xf32>
      %81 = math.exp %80 : vector<64x128xf32>
      %cst_43 = arith.constant 1.000000e+00 : f32
      %82 = vector.broadcast %cst_43 : f32 to vector<64x128xf32>
      %83 = arith.addf %82, %81 : vector<64x128xf32>
      %84 = arith.divf %82, %83 : vector<64x128xf32>
      %85 = vector.extract_strided_slice %78 {offsets = [0, 128], sizes = [64, 128], strides = [1, 1]} : vector<64x512xf32> to vector<64x128xf32>
      %86 = arith.negf %85 : vector<64x128xf32>
      %87 = math.exp %86 : vector<64x128xf32>
      %cst_44 = arith.constant 1.000000e+00 : f32
      %88 = vector.broadcast %cst_44 : f32 to vector<64x128xf32>
      %89 = arith.addf %88, %87 : vector<64x128xf32>
      %90 = arith.divf %88, %89 : vector<64x128xf32>
      %91 = vector.extract_strided_slice %78 {offsets = [0, 256], sizes = [64, 128], strides = [1, 1]} : vector<64x512xf32> to vector<64x128xf32>
      %92 = math.tanh %91 : vector<64x128xf32>
      %93 = vector.extract_strided_slice %78 {offsets = [0, 384], sizes = [64, 128], strides = [1, 1]} : vector<64x512xf32> to vector<64x128xf32>
      %94 = arith.negf %93 : vector<64x128xf32>
      %95 = math.exp %94 : vector<64x128xf32>
      %cst_45 = arith.constant 1.000000e+00 : f32
      %96 = vector.broadcast %cst_45 : f32 to vector<64x128xf32>
      %97 = arith.addf %96, %95 : vector<64x128xf32>
      %98 = arith.divf %96, %97 : vector<64x128xf32>
      %99 = arith.mulf %90, %66 : vector<64x128xf32>
      %100 = arith.mulf %84, %92 : vector<64x128xf32>
      %101 = arith.addf %99, %100 : vector<64x128xf32>
      %102 = math.tanh %101 : vector<64x128xf32>
      %103 = arith.mulf %98, %102 : vector<64x128xf32>
      scf.yield %103, %101 : vector<64x128xf32>, vector<64x128xf32>
    }
    %c6_i32_8 = arith.constant 6 : i32
    %10 = arith.truncf %9#0 : vector<64x128xf32> to vector<64x128xbf16>
    %c0_9 = arith.constant 0 : index
    %c0_10 = arith.constant 0 : index
    %11 = vector.load %arg5[%c0_9, %c0_10] : memref<128x512xbf16, #tpu.memory_space<vmem>>, vector<128x512xbf16>
    %cst_11 = arith.constant dense<0.000000e+00> : vector<64x512xf32>
    %12 = tpu.matmul %10, %11, %cst_11 {dimension_numbers = #tpu.dot_dimension_numbers<[1], [0], [0], [1], [0, 0, 1, 1], [], []>} : vector<64x128xbf16>, vector<128x512xbf16>, vector<64x512xf32> -> vector<64x512xf32>
    %c0_12 = arith.constant 0 : index
    %c0_13 = arith.constant 0 : index
    %13 = vector.load %arg7[%c0_12, %c0_13] : memref<1x512xf32, #tpu.memory_space<vmem>>, vector<1x512xf32>
    %14 = vector.broadcast %13 : vector<1x512xf32> to vector<64x512xf32>
    %15 = arith.addf %12, %14 : vector<64x512xf32>
    %c0_14 = arith.constant 0 : index
    %c0_15 = arith.constant 0 : index
    %16 = vector.load %arg12[%c0_14, %c0_15] : memref<64x512xf32, #tpu.memory_space<vmem>>, vector<64x512xf32>
    tpu.vector_store %arg12[%c0_14, %c0_15], %15 {strides = array<i32>} : memref<64x512xf32, #tpu.memory_space<vmem>>, vector<64x512xf32>,
    %cst_16 = arith.constant 0.000000e+00 : f32
    %17 = vector.broadcast %cst_16 : f32 to vector<8x128xf32>
    %c0_i32_17 = arith.constant 0 : i32
    %c4_i32 = arith.constant 4 : i32
    %18 = arith.addi %c0_i32_17, %c4_i32 : i32
    %c1_i32_18 = arith.constant 1 : i32
    %19:2 = scf.for %arg13 = %c0_i32_17 to %18 step %c1_i32_18 iter_args(%arg14 = %17, %arg15 = %17) -> (vector<8x128xf32>, vector<8x128xf32>)  : i32 {
      %c2_i32 = arith.constant 2 : i32
      %34 = arith.muli %arg13, %c2_i32 : i32
      %c0_i32_28 = arith.constant 0 : i32
      %35 = arith.addi %34, %c0_i32_28 : i32
      %c8_i32 = arith.constant 8 : i32
      %36 = arith.muli %35, %c8_i32 : i32
      %37 = tpu.assume_multiple %36, 8 : i32
      %38 = arith.index_cast %37 : i32 to index
      %c0_29 = arith.constant 0 : index
      %39 = vector.load %arg12[%38, %c0_29] : memref<64x512xf32, #tpu.memory_space<vmem>>, vector<8x512xf32>
      %40 = arith.truncf %arg14 : vector<8x128xf32> to vector<8x128xbf16>
      %c0_30 = arith.constant 0 : index
      %c0_31 = arith.constant 0 : index
      %41 = vector.load %arg6[%c0_30, %c0_31] : memref<128x512xbf16, #tpu.memory_space<vmem>>, vector<128x512xbf16>
      %cst_32 = arith.constant dense<0.000000e+00> : vector<8x512xf32>
      %42 = tpu.matmul %40, %41, %cst_32 {dimension_numbers = #tpu.dot_dimension_numbers<[1], [0], [0], [1], [0, 0, 1, 1], [], []>} : vector<8x128xbf16>, vector<128x512xbf16>, vector<8x512xf32> -> vector<8x512xf32>
      %43 = arith.addf %39, %42 : vector<8x512xf32>
      %44 = vector.extract_strided_slice %43 {offsets = [0, 0], sizes = [8, 128], strides = [1, 1]} : vector<8x512xf32> to vector<8x128xf32>
      %45 = arith.negf %44 : vector<8x128xf32>
      %46 = math.exp %45 : vector<8x128xf32>
      %cst_33 = arith.constant 1.000000e+00 : f32
      %47 = vector.broadcast %cst_33 : f32 to vector<8x128xf32>
      %48 = arith.addf %47, %46 : vector<8x128xf32>
      %49 = arith.divf %47, %48 : vector<8x128xf32>
      %50 = vector.extract_strided_slice %43 {offsets = [0, 128], sizes = [8, 128], strides = [1, 1]} : vector<8x512xf32> to vector<8x128xf32>
      %51 = arith.negf %50 : vector<8x128xf32>
      %52 = math.exp %51 : vector<8x128xf32>
      %cst_34 = arith.constant 1.000000e+00 : f32
      %53 = vector.broadcast %cst_34 : f32 to vector<8x128xf32>
      %54 = arith.addf %53, %52 : vector<8x128xf32>
      %55 = arith.divf %53, %54 : vector<8x128xf32>
      %56 = vector.extract_strided_slice %43 {offsets = [0, 256], sizes = [8, 128], strides = [1, 1]} : vector<8x512xf32> to vector<8x128xf32>
      %57 = math.tanh %56 : vector<8x128xf32>
      %58 = vector.extract_strided_slice %43 {offsets = [0, 384], sizes = [8, 128], strides = [1, 1]} : vector<8x512xf32> to vector<8x128xf32>
      %59 = arith.negf %58 : vector<8x128xf32>
      %60 = math.exp %59 : vector<8x128xf32>
      %cst_35 = arith.constant 1.000000e+00 : f32
      %61 = vector.broadcast %cst_35 : f32 to vector<8x128xf32>
      %62 = arith.addf %61, %60 : vector<8x128xf32>
      %63 = arith.divf %61, %62 : vector<8x128xf32>
      %64 = arith.mulf %55, %arg15 : vector<8x128xf32>
      %65 = arith.mulf %49, %57 : vector<8x128xf32>
      %66 = arith.addf %64, %65 : vector<8x128xf32>
      %67 = math.tanh %66 : vector<8x128xf32>
      %68 = arith.mulf %63, %67 : vector<8x128xf32>
      %c2_i32_36 = arith.constant 2 : i32
      %69 = arith.muli %arg13, %c2_i32_36 : i32
      %c1_i32_37 = arith.constant 1 : i32
      %70 = arith.addi %69, %c1_i32_37 : i32
      %c8_i32_38 = arith.constant 8 : i32
      %71 = arith.muli %70, %c8_i32_38 : i32
      %72 = tpu.assume_multiple %71, 8 : i32
      %73 = arith.index_cast %72 : i32 to index
      %c0_39 = arith.constant 0 : index
      %74 = vector.load %arg12[%73, %c0_39] : memref<64x512xf32, #tpu.memory_space<vmem>>, vector<8x512xf32>
      %75 = arith.truncf %68 : vector<8x128xf32> to vector<8x128xbf16>
      %c0_40 = arith.constant 0 : index
      %c0_41 = arith.constant 0 : index
      %76 = vector.load %arg6[%c0_40, %c0_41] : memref<128x512xbf16, #tpu.memory_space<vmem>>, vector<128x512xbf16>
      %cst_42 = arith.constant dense<0.000000e+00> : vector<8x512xf32>
      %77 = tpu.matmul %75, %76, %cst_42 {dimension_numbers = #tpu.dot_dimension_numbers<[1], [0], [0], [1], [0, 0, 1, 1], [], []>} : vector<8x128xbf16>, vector<128x512xbf16>, vector<8x512xf32> -> vector<8x512xf32>
      %78 = arith.addf %74, %77 : vector<8x512xf32>
      %79 = vector.extract_strided_slice %78 {offsets = [0, 0], sizes = [8, 128], strides = [1, 1]} : vector<8x512xf32> to vector<8x128xf32>
      %80 = arith.negf %79 : vector<8x128xf32>
      %81 = math.exp %80 : vector<8x128xf32>
      %cst_43 = arith.constant 1.000000e+00 : f32
      %82 = vector.broadcast %cst_43 : f32 to vector<8x128xf32>
      %83 = arith.addf %82, %81 : vector<8x128xf32>
      %84 = arith.divf %82, %83 : vector<8x128xf32>
      %85 = vector.extract_strided_slice %78 {offsets = [0, 128], sizes = [8, 128], strides = [1, 1]} : vector<8x512xf32> to vector<8x128xf32>
      %86 = arith.negf %85 : vector<8x128xf32>
      %87 = math.exp %86 : vector<8x128xf32>
      %cst_44 = arith.constant 1.000000e+00 : f32
      %88 = vector.broadcast %cst_44 : f32 to vector<8x128xf32>
      %89 = arith.addf %88, %87 : vector<8x128xf32>
      %90 = arith.divf %88, %89 : vector<8x128xf32>
      %91 = vector.extract_strided_slice %78 {offsets = [0, 256], sizes = [8, 128], strides = [1, 1]} : vector<8x512xf32> to vector<8x128xf32>
      %92 = math.tanh %91 : vector<8x128xf32>
      %93 = vector.extract_strided_slice %78 {offsets = [0, 384], sizes = [8, 128], strides = [1, 1]} : vector<8x512xf32> to vector<8x128xf32>
      %94 = arith.negf %93 : vector<8x128xf32>
      %95 = math.exp %94 : vector<8x128xf32>
      %cst_45 = arith.constant 1.000000e+00 : f32
      %96 = vector.broadcast %cst_45 : f32 to vector<8x128xf32>
      %97 = arith.addf %96, %95 : vector<8x128xf32>
      %98 = arith.divf %96, %97 : vector<8x128xf32>
      %99 = arith.mulf %90, %66 : vector<8x128xf32>
      %100 = arith.mulf %84, %92 : vector<8x128xf32>
      %101 = arith.addf %99, %100 : vector<8x128xf32>
      %102 = math.tanh %101 : vector<8x128xf32>
      %103 = arith.mulf %98, %102 : vector<8x128xf32>
      scf.yield %103, %101 : vector<8x128xf32>, vector<8x128xf32>
    }
    %c4_i32_19 = arith.constant 4 : i32
    %c0_20 = arith.constant 0 : index
    %c0_21 = arith.constant 0 : index
    %20 = vector.load %arg8[%c0_20, %c0_21] : memref<1x128xf32, #tpu.memory_space<vmem>>, vector<1x128xf32>
    %21 = vector.broadcast %20 : vector<1x128xf32> to vector<8x128xf32>
    %22 = arith.mulf %19#0, %21 : vector<8x128xf32>
    %cst_22 = arith.constant dense<0.000000e+00> : vector<8xf32>
    %23 = vector.multi_reduction <add>, %22, %cst_22 [1] : vector<8x128xf32> to vector<8xf32>
    %24 = vector.shape_cast %23 : vector<8xf32> to vector<8x1xf32>
    %c0_23 = arith.constant 0 : index
    %c0_24 = arith.constant 0 : index
    %25 = vector.load %arg9[%c0_23, %c0_24] : memref<1x1xf32, #tpu.memory_space<vmem>>, vector<1x1xf32>
    %26 = vector.broadcast %25 : vector<1x1xf32> to vector<8x1xf32>
    %27 = arith.addf %24, %26 : vector<8x1xf32>
    %28 = arith.negf %27 : vector<8x1xf32>
    %29 = math.exp %28 : vector<8x1xf32>
    %cst_25 = arith.constant 1.000000e+00 : f32
    %30 = vector.broadcast %cst_25 : f32 to vector<8x1xf32>
    %31 = arith.addf %30, %29 : vector<8x1xf32>
    %32 = arith.divf %30, %31 : vector<8x1xf32>
    %c0_26 = arith.constant 0 : index
    %c0_27 = arith.constant 0 : index
    %33 = vector.load %arg10[%c0_26, %c0_27] : memref<8x1xf32, #tpu.memory_space<vmem>>, vector<8x1xf32>
    tpu.vector_store %arg10[%c0_26, %c0_27], %32 {strides = array<i32>} : memref<8x1xf32, #tpu.memory_space<vmem>>, vector<8x1xf32>,
    return
  }
  func.func @transform_0(%arg0: i32) -> (i32, i32) {
    %c0_i32 = arith.constant 0 : i32
    %c0_i32_0 = arith.constant 0 : i32
    return %arg0, %c0_i32 : i32, i32
  }
  func.func @transform_1(%arg0: i32) -> (i32, i32) {
    %c0_i32 = arith.constant 0 : i32
    %c0_i32_0 = arith.constant 0 : i32
    %c0_i32_1 = arith.constant 0 : i32
    return %c0_i32, %c0_i32_0 : i32, i32
  }
  func.func @transform_2(%arg0: i32) -> (i32, i32) {
    %c0_i32 = arith.constant 0 : i32
    %c0_i32_0 = arith.constant 0 : i32
    %c0_i32_1 = arith.constant 0 : i32
    return %c0_i32, %c0_i32_0 : i32, i32
  }
  func.func @transform_3(%arg0: i32) -> (i32, i32) {
    %c0_i32 = arith.constant 0 : i32
    %c0_i32_0 = arith.constant 0 : i32
    %c0_i32_1 = arith.constant 0 : i32
    return %c0_i32, %c0_i32_0 : i32, i32
  }
  func.func @transform_4(%arg0: i32) -> (i32, i32) {
    %c0_i32 = arith.constant 0 : i32
    %c0_i32_0 = arith.constant 0 : i32
    %c0_i32_1 = arith.constant 0 : i32
    return %c0_i32, %c0_i32_0 : i32, i32
  }
  func.func @transform_5(%arg0: i32) -> (i32, i32) {
    %c0_i32 = arith.constant 0 : i32
    %c0_i32_0 = arith.constant 0 : i32
    %c0_i32_1 = arith.constant 0 : i32
    return %c0_i32, %c0_i32_0 : i32, i32
  }
  func.func @transform_6(%arg0: i32) -> (i32, i32) {
    %c0_i32 = arith.constant 0 : i32
    %c0_i32_0 = arith.constant 0 : i32
    %c0_i32_1 = arith.constant 0 : i32
    return %c0_i32, %c0_i32_0 : i32, i32
  }
  func.func @transform_7(%arg0: i32) -> (i32, i32) {
    %c0_i32 = arith.constant 0 : i32
    %c0_i32_0 = arith.constant 0 : i32
    %c0_i32_1 = arith.constant 0 : i32
    return %c0_i32, %c0_i32_0 : i32, i32
  }
  func.func @transform_8(%arg0: i32) -> (i32, i32) {
    %c0_i32 = arith.constant 0 : i32
    %c0_i32_0 = arith.constant 0 : i32
    %c0_i32_1 = arith.constant 0 : i32
    return %c0_i32, %c0_i32_0 : i32, i32
  }
  func.func @transform_9(%arg0: i32) -> (i32, i32) {
    %c0_i32 = arith.constant 0 : i32
    %c0_i32_0 = arith.constant 0 : i32
    return %arg0, %c0_i32 : i32, i32
  }
}

</mosaic_0001>

<llo_original>
// kernel: lstm_baseline_forward.1
$region0: #{lstm_baseline_forward.1}
  #allocation0 [shape = 'u32[]', space=smem, size = 0x4, offset = 0x4, fixed_abs, tag = 'smem constant byte address 0x4 - core index']
  #allocation1 [shape = 'u32[144,128]{1,0:T(1,128)}', space=vmem, size = 0x12000, scoped, tag = 'internal scratch']
  #allocation2 [shape = 'f32[768,512]{1,0:T(8,128)}', space=vmem, size = 0x180000, scoped, tag = 'scratch operand']
  #allocation3 [shape = 'f32[64,512]{1,0:T(8,128)}', space=vmem, size = 0x20000, scoped, tag = 'scratch operand']
  #allocation4 [shape = 'f32[1,1]{1,0:T(1,128)S(1)}', space=vmem, size = 0x200, scoped, tag = 'scoped memory for lstm_baseline_forward.1']
  %s0 = inlined_call_operand.vmem [shape: bf16[768,12], index: 0, kind: input, shape index: {}]
  %s1 = inlined_call_operand.vmem [shape: bf16[12,512], index: 1, kind: input, shape index: {}]
  %s2 = inlined_call_operand.vmem [shape: bf16[128,512], index: 2, kind: input, shape index: {}]
  %s3 = inlined_call_operand.vmem [shape: f32[1,512], index: 3, kind: input, shape index: {}]
  %s4 = inlined_call_operand.vmem [shape: bf16[128,512], index: 4, kind: input, shape index: {}]
  %s5 = inlined_call_operand.vmem [shape: bf16[128,512], index: 5, kind: input, shape index: {}]
  %s6 = inlined_call_operand.vmem [shape: f32[1,512], index: 6, kind: input, shape index: {}]
  %s7 = inlined_call_operand.vmem [shape: f32[1,128], index: 7, kind: input, shape index: {}]
  %s8 = inlined_call_operand.<no memory space> [shape: f32[1,1], index: 8, kind: input, shape index: {}]
  %s9 = inlined_call_operand.vmem [shape: f32[8,1], index: 9, kind: output, shape index: {}]
  %s10 = sld [smem:[#allocation0]]
  $region60: #{lstm_baseline_forward.1} parent=0
    _
  %s12 = ssub.s32 1, %s10
  %s13 = scalar_select 0, %s12, %s10
  %v14 = vstv %s8
  %15 = vst [vmem:[#allocation4] sm:$0x1] %v14
  // Predicated region
  $region2: #{lstm_baseline_forward.1} parent=0 // pred_check
    _
  $region3: #{lstm_baseline_forward.1} parent=0 // pred_check_branch
    %17 = sbr.rel (0) target = $region5
  $region4: #{lstm_baseline_forward.1} parent=0 // pred_region
    _
  $region5: #{lstm_baseline_forward.1} parent=0 // pred_fallthru
    _
  // Predicated region
  $region6: #{lstm_baseline_forward.1} parent=0 // pred_check
    _
  $region7: #{lstm_baseline_forward.1} parent=0 // pred_check_branch
    %19 = sbr.rel (0) target = $region9
  $region8: #{lstm_baseline_forward.1} parent=0 // pred_region
    _
  $region9: #{lstm_baseline_forward.1} parent=0 // pred_fallthru
    _
  // Predicated region
  $region10: #{lstm_baseline_forward.1} parent=0 // pred_check
    _
  $region11: #{lstm_baseline_forward.1} parent=0 // pred_check_branch
    %21 = sbr.rel (0) target = $region13
  $region12: #{lstm_baseline_forward.1} parent=0 // pred_region
    _
  $region13: #{lstm_baseline_forward.1} parent=0 // pred_fallthru
    _
  // Predicated region
  $region14: #{lstm_baseline_forward.1} parent=0 // pred_check
    _
  $region15: #{lstm_baseline_forward.1} parent=0 // pred_check_branch
    %23 = sbr.rel (0) target = $region17
  $region16: #{lstm_baseline_forward.1} parent=0 // pred_region
    _
  $region17: #{lstm_baseline_forward.1} parent=0 // pred_fallthru
    _
  // Predicated region
  $region18: #{lstm_baseline_forward.1} parent=0 // pred_check
    _
  $region19: #{lstm_baseline_forward.1} parent=0 // pred_check_branch
    %25 = sbr.rel (0) target = $region21
  $region20: #{lstm_baseline_forward.1} parent=0 // pred_region
    _
  $region21: #{lstm_baseline_forward.1} parent=0 // pred_fallthru
    _
  // Predicated region
  $region22: #{lstm_baseline_forward.1} parent=0 // pred_check
    _
  $region23: #{lstm_baseline_forward.1} parent=0 // pred_check_branch
    %27 = sbr.rel (0) target = $region25
  $region24: #{lstm_baseline_forward.1} parent=0 // pred_region
    _
  $region25: #{lstm_baseline_forward.1} parent=0 // pred_fallthru
    _
  // Predicated region
  $region26: #{lstm_baseline_forward.1} parent=0 // pred_check
    _
  $region27: #{lstm_baseline_forward.1} parent=0 // pred_check_branch
    %29 = sbr.rel (0) target = $region29
  $region28: #{lstm_baseline_forward.1} parent=0 // pred_region
    _
  $region29: #{lstm_baseline_forward.1} parent=0 // pred_fallthru
    _
  // Predicated region
  $region30: #{lstm_baseline_forward.1} parent=0 // pred_check
    _
  $region31: #{lstm_baseline_forward.1} parent=0 // pred_check_branch
    %31 = sbr.rel (0) target = $region33
  $region32: #{lstm_baseline_forward.1} parent=0 // pred_region
    _
  $region33: #{lstm_baseline_forward.1} parent=0 // pred_fallthru
    _
  // Predicated region
  $region34: #{lstm_baseline_forward.1} parent=0 // pred_check
    _
  $region35: #{lstm_baseline_forward.1} parent=0 // pred_check_branch
    %33 = sbr.rel (0) target = $region37
  $region36: #{lstm_baseline_forward.1} parent=0 // pred_region
    _
  $region37: #{lstm_baseline_forward.1} parent=0 // pred_fallthru
    _
  %v35 = vld [vmem:[%s0] sm:$0xf]
  %v36 = vld [vmem:[%s0 + $0x4] sm:$0xf]
  %v37 = vld [vmem:[%s0 + $0x8] sm:$0xf]
  %v38 = vld [vmem:[%s0 + $0xc] sm:$0xf]
  %v39 = vld [vmem:[%s0 + $0x10] sm:$0xf]
  %v40 = vld [vmem:[%s0 + $0x14] sm:$0xf]
  %v41 = vld [vmem:[%s0 + $0x18] sm:$0xf]
  %v42 = vld [vmem:[%s0 + $0x1c] sm:$0xf]
  %v43 = vld [vmem:[%s0 + $0x20] sm:$0xf]
  %v44 = vld [vmem:[%s0 + $0x24] sm:$0xf]
  %v45 = vld [vmem:[%s0 + $0x28] sm:$0xf]
  %v46 = vld [vmem:[%s0 + $0x2c] sm:$0xf]
  %v47 = vld [vmem:[%s0 + $0x30] sm:$0xf]
  %v48 = vld [vmem:[%s0 + $0x34] sm:$0xf]
  %v49 = vld [vmem:[%s0 + $0x38] sm:$0xf]
  %v50 = vld [vmem:[%s0 + $0x3c] sm:$0xf]
  %v51 = vld [vmem:[%s0 + $0x40] sm:$0xf]
  %v52 = vld [vmem:[%s0 + $0x44] sm:$0xf]
  %v53 = vld [vmem:[%s0 + $0x48] sm:$0xf]
  %v54 = vld [vmem:[%s0 + $0x4c] sm:$0xf]
  %v55 = vld [vmem:[%s0 + $0x50] sm:$0xf]
  %v56 = vld [vmem:[%s0 + $0x54] sm:$0xf]
  %v57 = vld [vmem:[%s0 + $0x58] sm:$0xf]
  %v58 = vld [vmem:[%s0 + $0x5c] sm:$0xf]
  %v59 = vld [vmem:[%s0 + $0x60] sm:$0xf]
  %v60 = vld [vmem:[%s0 + $0x64] sm:$0xf]
  %v61 = vld [vmem:[%s0 + $0x68] sm:$0xf]
  %v62 = vld [vmem:[%s0 + $0x6c] sm:$0xf]
  %v63 = vld [vmem:[%s0 + $0x70] sm:$0xf]
  %v64 = vld [vmem:[%s0 + $0x74] sm:$0xf]
  %v65 = vld [vmem:[%s0 + $0x78] sm:$0xf]
  %v66 = vld [vmem:[%s0 + $0x7c] sm:$0xf]
  %v67 = vld [vmem:[%s0 + $0x80] sm:$0xf]
  %v68 = vld [vmem:[%s0 + $0x84] sm:$0xf]
  %v69 = vld [vmem:[%s0 + $0x88] sm:$0xf]
  %v70 = vld [vmem:[%s0 + $0x8c] sm:$0xf]
  %v71 = vld [vmem:[%s0 + $0x90] sm:$0xf]
  %v72 = vld [vmem:[%s0 + $0x94] sm:$0xf]
  %v73 = vld [vmem:[%s0 + $0x98] sm:$0xf]
  %v74 = vld [vmem:[%s0 + $0x9c] sm:$0xf]
  %v75 = vld [vmem:[%s0 + $0xa0] sm:$0xf]
  %v76 = vld [vmem:[%s0 + $0xa4] sm:$0xf]
  %v77 = vld [vmem:[%s0 + $0xa8] sm:$0xf]
  %v78 = vld [vmem:[%s0 + $0xac] sm:$0xf]
  %v79 = vld [vmem:[%s0 + $0xb0] sm:$0xf]
  %v80 = vld [vmem:[%s0 + $0xb4] sm:$0xf]
  %v81 = vld [vmem:[%s0 + $0xb8] sm:$0xf]
  %v82 = vld [vmem:[%s0 + $0xbc] sm:$0xf]
  %v83 = vld [vmem:[%s0 + $0xc0] sm:$0xf]
  %v84 = vld [vmem:[%s0 + $0xc4] sm:$0xf]
  %v85 = vld [vmem:[%s0 + $0xc8] sm:$0xf]
  %v86 = vld [vmem:[%s0 + $0xcc] sm:$0xf]
  %v87 = vld [vmem:[%s0 + $0xd0] sm:$0xf]
  %v88 = vld [vmem:[%s0 + $0xd4] sm:$0xf]
  %v89 = vld [vmem:[%s0 + $0xd8] sm:$0xf]
  %v90 = vld [vmem:[%s0 + $0xdc] sm:$0xf]
  %v91 = vld [vmem:[%s0 + $0xe0] sm:$0xf]
  %v92 = vld [vmem:[%s0 + $0xe4] sm:$0xf]
  %v93 = vld [vmem:[%s0 + $0xe8] sm:$0xf]
  %v94 = vld [vmem:[%s0 + $0xec] sm:$0xf]
  %v95 = vld [vmem:[%s0 + $0xf0] sm:$0xf]
  %v96 = vld [vmem:[%s0 + $0xf4] sm:$0xf]
  %v97 = vld [vmem:[%s0 + $0xf8] sm:$0xf]
  %v98 = vld [vmem:[%s0 + $0xfc] sm:$0xf]
  %v99 = vld [vmem:[%s0 + $0x100] sm:$0xf]
  %v100 = vld [vmem:[%s0 + $0x104] sm:$0xf]
  %v101 = vld [vmem:[%s0 + $0x108] sm:$0xf]
  %v102 = vld [vmem:[%s0 + $0x10c] sm:$0xf]
  %v103 = vld [vmem:[%s0 + $0x110] sm:$0xf]
  %v104 = vld [vmem:[%s0 + $0x114] sm:$0xf]
  %v105 = vld [vmem:[%s0 + $0x118] sm:$0xf]
  %v106 = vld [vmem:[%s0 + $0x11c] sm:$0xf]
  %v107 = vld [vmem:[%s0 + $0x120] sm:$0xf]
  %v108 = vld [vmem:[%s0 + $0x124] sm:$0xf]
  %v109 = vld [vmem:[%s0 + $0x128] sm:$0xf]
  %v110 = vld [vmem:[%s0 + $0x12c] sm:$0xf]
  %v111 = vld [vmem:[%s0 + $0x130] sm:$0xf]
  %v112 = vld [vmem:[%s0 + $0x134] sm:$0xf]
  %v113 = vld [vmem:[%s0 + $0x138] sm:$0xf]
  %v114 = vld [vmem:[%s0 + $0x13c] sm:$0xf]
  %v115 = vld [vmem:[%s0 + $0x140] sm:$0xf]
  %v116 = vld [vmem:[%s0 + $0x144] sm:$0xf]
  %v117 = vld [vmem:[%s0 + $0x148] sm:$0xf]
  %v118 = vld [vmem:[%s0 + $0x14c] sm:$0xf]
  %v119 = vld [vmem:[%s0 + $0x150] sm:$0xf]
  %v120 = vld [vmem:[%s0 + $0x154] sm:$0xf]
  %v121 = vld [vmem:[%s0 + $0x158] sm:$0xf]
  %v122 = vld [vmem:[%s0 + $0x15c] sm:$0xf]
  %v123 = vld [vmem:[%s0 + $0x160] sm:$0xf]
  %v124 = vld [vmem:[%s0 + $0x164] sm:$0xf]
  %v125 = vld [vmem:[%s0 + $0x168] sm:$0xf]
  %v126 = vld [vmem:[%s0 + $0x16c] sm:$0xf]
  %v127 = vld [vmem:[%s0 + $0x170] sm:$0xf]
  %v128 = vld [vmem:[%s0 + $0x174] sm:$0xf]
  %v129 = vld [vmem:[%s0 + $0x178] sm:$0xf]
  %v130 = vld [vmem:[%s0 + $0x17c] sm:$0xf]
  %v131 = vld [vmem:[%s1] sm:$0xff]
  %v132 = vld [vmem:[%s1 + $0x8] sm:$0xff]
  %v133 = vld [vmem:[%s1 + $0x10] sm:$0x33]
  %v134 = vld [vmem:[%s1 + $0x18] sm:$0x33]
  %v135 = vld [vmem:[%s3] sm:$0xf]
  %v137 = vlaneseq
  %v138 = vshrl.u32 %v137, 7
  %v139 = vsub.s32 0, %v138
  %v140 = vrot.slane %v135, %v139
  %v141 = vlaneseq
  %v142 = vshrl.u32 %v141, 7
  %v143 = vsub.s32 1, %v142
  %v144 = vrot.slane %v135, %v143
  %v145 = vlaneseq
  %v146 = vshrl.u32 %v145, 7
  %v147 = vsub.s32 2, %v146
  %v148 = vrot.slane %v135, %v147
  %v149 = vlaneseq
  %v150 = vshrl.u32 %v149, 7
  %v151 = vsub.s32 3, %v150
  %v152 = vrot.slane %v135, %v151
  %v253 = vunpack.c.l.b16 %v35
  %v254 = vunpack.c.l.b16 %v36
  %v255 = vunpack.c.l.b16 %v37
  %v256 = vunpack.c.l.b16 %v38
  %v257 = vunpack.c.l.b16 %v39
  %v258 = vunpack.c.l.b16 %v40
  %v259 = vunpack.c.l.b16 %v41
  %v260 = vunpack.c.l.b16 %v42
  %v261 = vunpack.c.l.b16 %v43
  %v262 = vunpack.c.l.b16 %v44
  %v263 = vunpack.c.l.b16 %v45
  %v264 = vunpack.c.l.b16 %v46
  %v265 = vunpack.c.l.b16 %v47
  %v266 = vunpack.c.l.b16 %v48
  %v267 = vunpack.c.l.b16 %v49
  %v268 = vunpack.c.l.b16 %v50
  %v269 = vunpack.c.l.b16 %v51
  %v270 = vunpack.c.l.b16 %v52
  %v271 = vunpack.c.l.b16 %v53
  %v272 = vunpack.c.l.b16 %v54
  %v273 = vunpack.c.l.b16 %v55
  %v274 = vunpack.c.l.b16 %v56
  %v275 = vunpack.c.l.b16 %v57
  %v276 = vunpack.c.l.b16 %v58
  %v277 = vunpack.c.l.b16 %v59
  %v278 = vunpack.c.l.b16 %v60
  %v279 = vunpack.c.l.b16 %v61
  %v280 = vunpack.c.l.b16 %v62
  %v281 = vunpack.c.l.b16 %v63
  %v282 = vunpack.c.l.b16 %v64
  %v283 = vunpack.c.l.b16 %v65
  %v284 = vunpack.c.l.b16 %v66
  %v285 = vunpack.c.l.b16 %v67
  %v286 = vunpack.c.l.b16 %v68
  %v287 = vunpack.c.l.b16 %v69
  %v288 = vunpack.c.l.b16 %v70
  %v289 = vunpack.c.l.b16 %v71
  %v290 = vunpack.c.l.b16 %v72
  %v291 = vunpack.c.l.b16 %v73
  %v292 = vunpack.c.l.b16 %v74
  %v293 = vunpack.c.l.b16 %v75
  %v294 = vunpack.c.l.b16 %v76
  %v295 = vunpack.c.l.b16 %v77
  %v296 = vunpack.c.l.b16 %v78
  %v297 = vunpack.c.l.b16 %v79
  %v298 = vunpack.c.l.b16 %v80
  %v299 = vunpack.c.l.b16 %v81
  %v300 = vunpack.c.l.b16 %v82
  %v301 = vunpack.c.l.b16 %v83
  %v302 = vunpack.c.l.b16 %v84
  %v303 = vunpack.c.l.b16 %v85
  %v304 = vunpack.c.l.b16 %v86
  %v305 = vunpack.c.l.b16 %v87
  %v306 = vunpack.c.l.b16 %v88
  %v307 = vunpack.c.l.b16 %v89
  %v308 = vunpack.c.l.b16 %v90
  %v309 = vunpack.c.l.b16 %v91
  %v310 = vunpack.c.l.b16 %v92
  %v311 = vunpack.c.l.b16 %v93
  %v312 = vunpack.c.l.b16 %v94
  %v313 = vunpack.c.l.b16 %v95
  %v314 = vunpack.c.l.b16 %v96
  %v315 = vunpack.c.l.b16 %v97
  %v316 = vunpack.c.l.b16 %v98
  %v317 = vunpack.c.l.b16 %v99
  %v318 = vunpack.c.l.b16 %v100
  %v319 = vunpack.c.l.b16 %v101
  %v320 = vunpack.c.l.b16 %v102
  %v321 = vunpack.c.l.b16 %v103
  %v322 = vunpack.c.l.b16 %v104
  %v323 = vunpack.c.l.b16 %v105
  %v324 = vunpack.c.l.b16 %v106
  %v325 = vunpack.c.l.b16 %v107
  %v326 = vunpack.c.l.b16 %v108
  %v327 = vunpack.c.l.b16 %v109
  %v328 = vunpack.c.l.b16 %v110
  %v329 = vunpack.c.l.b16 %v111
  %v330 = vunpack.c.l.b16 %v112
  %v331 = vunpack.c.l.b16 %v113
  %v332 = vunpack.c.l.b16 %v114
  %v333 = vunpack.c.l.b16 %v115
  %v334 = vunpack.c.l.b16 %v116
  %v335 = vunpack.c.l.b16 %v117
  %v336 = vunpack.c.l.b16 %v118
  %v337 = vunpack.c.l.b16 %v119
  %v338 = vunpack.c.l.b16 %v120
  %v339 = vunpack.c.l.b16 %v121
  %v340 = vunpack.c.l.b16 %v122
  %v341 = vunpack.c.l.b16 %v123
  %v342 = vunpack.c.l.b16 %v124
  %v343 = vunpack.c.l.b16 %v125
  %v344 = vunpack.c.l.b16 %v126
  %v345 = vunpack.c.l.b16 %v127
  %v346 = vunpack.c.l.b16 %v128
  %v347 = vunpack.c.l.b16 %v129
  %v348 = vunpack.c.l.b16 %v130
  %v349 = vpack.c.b16 %v254, %v253
  %v350 = vpack.c.b16 %v256, %v255
  %v351 = vpack.c.b16 %v258, %v257
  %v352 = vpack.c.b16 %v260, %v259
  %v353 = vpack.c.b16 %v262, %v261
  %v354 = vpack.c.b16 %v264, %v263
  %v355 = vpack.c.b16 %v266, %v265
  %v356 = vpack.c.b16 %v268, %v267
  %v357 = vpack.c.b16 %v270, %v269
  %v358 = vpack.c.b16 %v272, %v271
  %v359 = vpack.c.b16 %v274, %v273
  %v360 = vpack.c.b16 %v276, %v275
  %v361 = vpack.c.b16 %v278, %v277
  %v362 = vpack.c.b16 %v280, %v279
  %v363 = vpack.c.b16 %v282, %v281
  %v364 = vpack.c.b16 %v284, %v283
  %v365 = vpack.c.b16 %v286, %v285
  %v366 = vpack.c.b16 %v288, %v287
  %v367 = vpack.c.b16 %v290, %v289
  %v368 = vpack.c.b16 %v292, %v291
  %v369 = vpack.c.b16 %v294, %v293
  %v370 = vpack.c.b16 %v296, %v295
  %v371 = vpack.c.b16 %v298, %v297
  %v372 = vpack.c.b16 %v300, %v299
  %v373 = vpack.c.b16 %v302, %v301
  %v374 = vpack.c.b16 %v304, %v303
  %v375 = vpack.c.b16 %v306, %v305
  %v376 = vpack.c.b16 %v308, %v307
  %v377 = vpack.c.b16 %v310, %v309
  %v378 = vpack.c.b16 %v312, %v311
  %v379 = vpack.c.b16 %v314, %v313
  %v380 = vpack.c.b16 %v316, %v315
  %v381 = vpack.c.b16 %v318, %v317
  %v382 = vpack.c.b16 %v320, %v319
  %v383 = vpack.c.b16 %v322, %v321
  %v384 = vpack.c.b16 %v324, %v323
  %v385 = vpack.c.b16 %v326, %v325
  %v386 = vpack.c.b16 %v328, %v327
  %v387 = vpack.c.b16 %v330, %v329
  %v388 = vpack.c.b16 %v332, %v331
  %v389 = vpack.c.b16 %v334, %v333
  %v390 = vpack.c.b16 %v336, %v335
  %v391 = vpack.c.b16 %v338, %v337
  %v392 = vpack.c.b16 %v340, %v339
  %v393 = vpack.c.b16 %v342, %v341
  %v394 = vpack.c.b16 %v344, %v343
  %v395 = vpack.c.b16 %v346, %v345
  %v396 = vpack.c.b16 %v348, %v347
  %v401 = vunpack.c.l.b16 %v131
  %v402 = vunpack.c.h.b16 %v131
  %v403 = vunpack.c.l.b16 %v132
  %v404 = vunpack.c.h.b16 %v132
  %v405 = vunpack.c.l.b16 %v133
  %v406 = vunpack.c.h.b16 %v133
  %v407 = vunpack.c.l.b16 %v134
  %v408 = vunpack.c.h.b16 %v134
  %v409 = vpack.c.b16 %v405, %v401
  %v410 = vpack.c.b16 %v406, %v402
  %v411 = vpack.c.b16 %v407, %v403
  %v412 = vpack.c.b16 %v408, %v404
  %vm413 = vcmask 97280
  %v415 = vsel %vm413, %v349, 0
  %v418 = vsel %vm413, %v350, 0
  %v421 = vsel %vm413, %v351, 0
  %v424 = vsel %vm413, %v352, 0
  %v427 = vsel %vm413, %v353, 0
  %v430 = vsel %vm413, %v354, 0
  %v433 = vsel %vm413, %v355, 0
  %v436 = vsel %vm413, %v356, 0
  %v439 = vsel %vm413, %v357, 0
  %v442 = vsel %vm413, %v358, 0
  %v445 = vsel %vm413, %v359, 0
  %v448 = vsel %vm413, %v360, 0
  %v451 = vsel %vm413, %v361, 0
  %v454 = vsel %vm413, %v362, 0
  %v457 = vsel %vm413, %v363, 0
  %v460 = vsel %vm413, %v364, 0
  %v463 = vsel %vm413, %v365, 0
  %v466 = vsel %vm413, %v366, 0
  %v469 = vsel %vm413, %v367, 0
  %v472 = vsel %vm413, %v368, 0
  %v475 = vsel %vm413, %v369, 0
  %v478 = vsel %vm413, %v370, 0
  %v481 = vsel %vm413, %v371, 0
  %v484 = vsel %vm413, %v372, 0
  %v487 = vsel %vm413, %v373, 0
  %v490 = vsel %vm413, %v374, 0
  %v493 = vsel %vm413, %v375, 0
  %v496 = vsel %vm413, %v376, 0
  %v499 = vsel %vm413, %v377, 0
  %v502 = vsel %vm413, %v378, 0
  %v505 = vsel %vm413, %v379, 0
  %v508 = vsel %vm413, %v380, 0
  %v511 = vsel %vm413, %v381, 0
  %v514 = vsel %vm413, %v382, 0
  %v517 = vsel %vm413, %v383, 0
  %v520 = vsel %vm413, %v384, 0
  %v523 = vsel %vm413, %v385, 0
  %v526 = vsel %vm413, %v386, 0
  %v529 = vsel %vm413, %v387, 0
  %v532 = vsel %vm413, %v388, 0
  %v535 = vsel %vm413, %v389, 0
  %v538 = vsel %vm413, %v390, 0
  %v541 = vsel %vm413, %v391, 0
  %v544 = vsel %vm413, %v392, 0
  %v547 = vsel %vm413, %v393, 0
  %v550 = vsel %vm413, %v394, 0
  %v553 = vsel %vm413, %v395, 0
  %v556 = vsel %vm413, %v396, 0
  %vm558 = vcmask 1045504
  %v560 = vsel %vm558, %v409, 0
  %v563 = vsel %vm558, %v410, 0
  %v566 = vsel %vm558, %v411, 0
  %v569 = vsel %vm558, %v412, 0
  %571 = vmatprep.subr.bf16.mxu0 %v563
  %572 = vmatpush1.bf16.msra.mxu0 %v560
  %573 = vmatprep.subr.bf16.mxu0 0
  %574 = vmatpush1.bf16.msra.mxu0 0
  %575 = vmatprep.subr.bf16.mxu0 0
  %576 = vmatpush1.bf16.msra.mxu0 0
  %577 = vmatprep.subr.bf16.mxu0 0
  %578 = vmatpush1.bf16.msra.mxu0 0
  %579 = vmatprep.subr.bf16.mxu0 0
  %580 = vmatpush1.bf16.msra.mxu0 0
  %581 = vmatprep.subr.bf16.mxu0 0
  %582 = vmatpush1.bf16.msra.mxu0 0
  %583 = vmatprep.subr.bf16.mxu0 0
  %584 = vmatpush1.bf16.msra.mxu0 0
  %585 = vmatprep.subr.bf16.mxu0 0
  %586 = vmatpush1.bf16.msra.mxu0 0
  %587 = vmatprep.subr.bf16.mxu0 0
  %588 = vmatpush1.bf16.msra.mxu0 0
  %589 = vmatprep.subr.bf16.mxu0 0
  %590 = vmatpush1.bf16.msra.mxu0 0
  %591 = vmatprep.subr.bf16.mxu0 0
  %592 = vmatpush1.bf16.msra.mxu0 0
  %593 = vmatprep.subr.bf16.mxu0 0
  %594 = vmatpush1.bf16.msra.mxu0 0
  %595 = vmatprep.subr.bf16.mxu0 0
  %596 = vmatpush1.bf16.msra.mxu0 0
  %597 = vmatprep.subr.bf16.mxu0 0
  %598 = vmatpush1.bf16.msra.mxu0 0
  %599 = vmatprep.subr.bf16.mxu0 0
  %600 = vmatpush1.bf16.msra.mxu0 0
  %601 = vmatprep.subr.bf16.mxu0 0
  %602 = vmatpush1.bf16.msra.mxu0 0
  %603 = vmatprep.mubr.bf16.mxu0 0
  %604 = vmatmul.mubr.bf16.gmra.mrb[0].mxu0 %v415
  %v605 = vpop.f32.mrb[0].mxu0
  %v606 = vadd.f32 %v140, %v605
  %v607 = vpop.f32.mrb[0].mxu0
  %v608 = vadd.f32 %v144, %v607
  %v609 = vpop.f32.mrb[0].mxu0
  %v610 = vadd.f32 %v140, %v609
  %v611 = vpop.f32.mrb[0].mxu0
  %v612 = vadd.f32 %v144, %v611
  %613 = vmatprep.mubr.bf16.mxu0 0
  %614 = vmatmul.mubr.bf16.gmra.mrb[0].mxu0 %v418
  %v615 = vpop.f32.mrb[0].mxu0
  %v616 = vadd.f32 %v140, %v615
  %v617 = vpop.f32.mrb[0].mxu0
  %v618 = vadd.f32 %v144, %v617
  %v619 = vpop.f32.mrb[0].mxu0
  %v620 = vadd.f32 %v140, %v619
  %v621 = vpop.f32.mrb[0].mxu0
  %v622 = vadd.f32 %v144, %v621
  %623 = vmatprep.mubr.bf16.mxu0 0
  %624 = vmatmul.mubr.bf16.gmra.mrb[0].mxu0 %v421
  %v625 = vpop.f32.mrb[0].mxu0
  %v626 = vadd.f32 %v140, %v625
  %v627 = vpop.f32.mrb[0].mxu0
  %v628 = vadd.f32 %v144, %v627
  %v629 = vpop.f32.mrb[0].mxu0
  %v630 = vadd.f32 %v140, %v629
  %v631 = vpop.f32.mrb[0].mxu0
  %v632 = vadd.f32 %v144, %v631
  %633 = vmatprep.mubr.bf16.mxu0 0
  %634 = vmatmul.mubr.bf16.gmra.mrb[0].mxu0 %v424
  %v635 = vpop.f32.mrb[0].mxu0
  %v636 = vadd.f32 %v140, %v635
  %v637 = vpop.f32.mrb[0].mxu0
  %v638 = vadd.f32 %v144, %v637
  %v639 = vpop.f32.mrb[0].mxu0
  %v640 = vadd.f32 %v140, %v639
  %v641 = vpop.f32.mrb[0].mxu0
  %v642 = vadd.f32 %v144, %v641
  %643 = vmatprep.mubr.bf16.mxu0 0
  %644 = vmatmul.mubr.bf16.gmra.mrb[0].mxu0 %v427
  %v645 = vpop.f32.mrb[0].mxu0
  %v646 = vadd.f32 %v140, %v645
  %v647 = vpop.f32.mrb[0].mxu0
  %v648 = vadd.f32 %v144, %v647
  %v649 = vpop.f32.mrb[0].mxu0
  %v650 = vadd.f32 %v140, %v649
  %v651 = vpop.f32.mrb[0].mxu0
  %v652 = vadd.f32 %v144, %v651
  %653 = vmatprep.mubr.bf16.mxu0 0
  %654 = vmatmul.mubr.bf16.gmra.mrb[0].mxu0 %v430
  %v655 = vpop.f32.mrb[0].mxu0
  %v656 = vadd.f32 %v140, %v655
  %v657 = vpop.f32.mrb[0].mxu0
  %v658 = vadd.f32 %v144, %v657
  %v659 = vpop.f32.mrb[0].mxu0
  %v660 = vadd.f32 %v140, %v659
  %v661 = vpop.f32.mrb[0].mxu0
  %v662 = vadd.f32 %v144, %v661
  %663 = vmatprep.mubr.bf16.mxu0 0
  %664 = vmatmul.mubr.bf16.gmra.mrb[0].mxu0 %v433
  %v665 = vpop.f32.mrb[0].mxu0
  %v666 = vadd.f32 %v140, %v665
  %v667 = vpop.f32.mrb[0].mxu0
  %v668 = vadd.f32 %v144, %v667
  %v669 = vpop.f32.mrb[0].mxu0
  %v670 = vadd.f32 %v140, %v669
  %v671 = vpop.f32.mrb[0].mxu0
  %v672 = vadd.f32 %v144, %v671
  %673 = vmatprep.mubr.bf16.mxu0 0
  %674 = vmatmul.mubr.bf16.gmra.mrb[0].mxu0 %v436
  %v675 = vpop.f32.mrb[0].mxu0
  %v676 = vadd.f32 %v140, %v675
  %v677 = vpop.f32.mrb[0].mxu0
  %v678 = vadd.f32 %v144, %v677
  %v679 = vpop.f32.mrb[0].mxu0
  %v680 = vadd.f32 %v140, %v679
  %v681 = vpop.f32.mrb[0].mxu0
  %v682 = vadd.f32 %v144, %v681
  %683 = vmatprep.mubr.bf16.mxu0 0
  %684 = vmatmul.mubr.bf16.gmra.mrb[0].mxu0 %v439
  %v685 = vpop.f32.mrb[0].mxu0
  %v686 = vadd.f32 %v140, %v685
  %v687 = vpop.f32.mrb[0].mxu0
  %v688 = vadd.f32 %v144, %v687
  %v689 = vpop.f32.mrb[0].mxu0
  %v690 = vadd.f32 %v140, %v689
  %v691 = vpop.f32.mrb[0].mxu0
  %v692 = vadd.f32 %v144, %v691
  %693 = vmatprep.mubr.bf16.mxu0 0
  %694 = vmatmul.mubr.bf16.gmra.mrb[0].mxu0 %v442
  %v695 = vpop.f32.mrb[0].mxu0
  %v696 = vadd.f32 %v140, %v695
  %v697 = vpop.f32.mrb[0].mxu0
  %v698 = vadd.f32 %v144, %v697
  %v699 = vpop.f32.mrb[0].mxu0
  %v700 = vadd.f32 %v140, %v699
  %v701 = vpop.f32.mrb[0].mxu0
  %v702 = vadd.f32 %v144, %v701
  %703 = vmatprep.mubr.bf16.mxu0 0
  %704 = vmatmul.mubr.bf16.gmra.mrb[0].mxu0 %v445
  %v705 = vpop.f32.mrb[0].mxu0
  %v706 = vadd.f32 %v140, %v705
  %v707 = vpop.f32.mrb[0].mxu0
  %v708 = vadd.f32 %v144, %v707
  %v709 = vpop.f32.mrb[0].mxu0
  %v710 = vadd.f32 %v140, %v709
  %v711 = vpop.f32.mrb[0].mxu0
  %v712 = vadd.f32 %v144, %v711
  %713 = vmatprep.mubr.bf16.mxu0 0
  %714 = vmatmul.mubr.bf16.gmra.mrb[0].mxu0 %v448
  %v715 = vpop.f32.mrb[0].mxu0
  %v716 = vadd.f32 %v140, %v715
  %v717 = vpop.f32.mrb[0].mxu0
  %v718 = vadd.f32 %v144, %v717
  %v719 = vpop.f32.mrb[0].mxu0
  %v720 = vadd.f32 %v140, %v719
  %v721 = vpop.f32.mrb[0].mxu0
  %v722 = vadd.f32 %v144, %v721
  %723 = vmatprep.mubr.bf16.mxu0 0
  %724 = vmatmul.mubr.bf16.gmra.mrb[0].mxu0 %v451
  %v725 = vpop.f32.mrb[0].mxu0
  %v726 = vadd.f32 %v140, %v725
  %v727 = vpop.f32.mrb[0].mxu0
  %v728 = vadd.f32 %v144, %v727
  %v729 = vpop.f32.mrb[0].mxu0
  %v730 = vadd.f32 %v140, %v729
  %v731 = vpop.f32.mrb[0].mxu0
  %v732 = vadd.f32 %v144, %v731
  %733 = vmatprep.mubr.bf16.mxu0 0
  %734 = vmatmul.mubr.bf16.gmra.mrb[0].mxu0 %v454
  %v735 = vpop.f32.mrb[0].mxu0
  %v736 = vadd.f32 %v140, %v735
  %v737 = vpop.f32.mrb[0].mxu0
  %v738 = vadd.f32 %v144, %v737
  %v739 = vpop.f32.mrb[0].mxu0
  %v740 = vadd.f32 %v140, %v739
  %v741 = vpop.f32.mrb[0].mxu0
  %v742 = vadd.f32 %v144, %v741
  %743 = vmatprep.mubr.bf16.mxu0 0
  %744 = vmatmul.mubr.bf16.gmra.mrb[0].mxu0 %v457
  %v745 = vpop.f32.mrb[0].mxu0
  %v746 = vadd.f32 %v140, %v745
  %v747 = vpop.f32.mrb[0].mxu0
  %v748 = vadd.f32 %v144, %v747
  %v749 = vpop.f32.mrb[0].mxu0
  %v750 = vadd.f32 %v140, %v749
  %v751 = vpop.f32.mrb[0].mxu0
  %v752 = vadd.f32 %v144, %v751
  %753 = vmatprep.mubr.bf16.mxu0 0
  %754 = vmatmul.mubr.bf16.gmra.mrb[0].mxu0 %v460
  %v755 = vpop.f32.mrb[0].mxu0
  %v756 = vadd.f32 %v140, %v755
  %v757 = vpop.f32.mrb[0].mxu0
  %v758 = vadd.f32 %v144, %v757
  %v759 = vpop.f32.mrb[0].mxu0
  %v760 = vadd.f32 %v140, %v759
  %v761 = vpop.f32.mrb[0].mxu0
  %v762 = vadd.f32 %v144, %v761
  %763 = vmatprep.mubr.bf16.mxu0 0
  %764 = vmatmul.mubr.bf16.gmra.mrb[0].mxu0 %v463
  %v765 = vpop.f32.mrb[0].mxu0
  %v766 = vadd.f32 %v140, %v765
  %v767 = vpop.f32.mrb[0].mxu0
  %v768 = vadd.f32 %v144, %v767
  %v769 = vpop.f32.mrb[0].mxu0
  %v770 = vadd.f32 %v140, %v769
  %v771 = vpop.f32.mrb[0].mxu0
  %v772 = vadd.f32 %v144, %v771
  %773 = vmatprep.mubr.bf16.mxu0 0
  %774 = vmatmul.mubr.bf16.gmra.mrb[0].mxu0 %v466
  %v775 = vpop.f32.mrb[0].mxu0
  %v776 = vadd.f32 %v140, %v775
  %v777 = vpop.f32.mrb[0].mxu0
  %v778 = vadd.f32 %v144, %v777
  %v779 = vpop.f32.mrb[0].mxu0
  %v780 = vadd.f32 %v140, %v779
  %v781 = vpop.f32.mrb[0].mxu0
  %v782 = vadd.f32 %v144, %v781
  %783 = vmatprep.mubr.bf16.mxu0 0
  %784 = vmatmul.mubr.bf16.gmra.mrb[0].mxu0 %v469
  %v785 = vpop.f32.mrb[0].mxu0
  %v786 = vadd.f32 %v140, %v785
  %v787 = vpop.f32.mrb[0].mxu0
  %v788 = vadd.f32 %v144, %v787
  %v789 = vpop.f32.mrb[0].mxu0
  %v790 = vadd.f32 %v140, %v789
  %v791 = vpop.f32.mrb[0].mxu0
  %v792 = vadd.f32 %v144, %v791
  %793 = vmatprep.mubr.bf16.mxu0 0
  %794 = vmatmul.mubr.bf16.gmra.mrb[0].mxu0 %v472
  %v795 = vpop.f32.mrb[0].mxu0
  %v796 = vadd.f32 %v140, %v795
  %v797 = vpop.f32.mrb[0].mxu0
  %v798 = vadd.f32 %v144, %v797
  %v799 = vpop.f32.mrb[0].mxu0
  %v800 = vadd.f32 %v140, %v799
  %v801 = vpop.f32.mrb[0].mxu0
  %v802 = vadd.f32 %v144, %v801
  %803 = vmatprep.mubr.bf16.mxu0 0
  %804 = vmatmul.mubr.bf16.gmra.mrb[0].mxu0 %v475
  %v805 = vpop.f32.mrb[0].mxu0
  %v806 = vadd.f32 %v140, %v805
  %v807 = vpop.f32.mrb[0].mxu0
  %v808 = vadd.f32 %v144, %v807
  %v809 = vpop.f32.mrb[0].mxu0
  %v810 = vadd.f32 %v140, %v809
  %v811 = vpop.f32.mrb[0].mxu0
  %v812 = vadd.f32 %v144, %v811
  %813 = vmatprep.mubr.bf16.mxu0 0
  %814 = vmatmul.mubr.bf16.gmra.mrb[0].mxu0 %v478
  %v815 = vpop.f32.mrb[0].mxu0
  %v816 = vadd.f32 %v140, %v815
  %v817 = vpop.f32.mrb[0].mxu0
  %v818 = vadd.f32 %v144, %v817
  %v819 = vpop.f32.mrb[0].mxu0
  %v820 = vadd.f32 %v140, %v819
  %v821 = vpop.f32.mrb[0].mxu0
  %v822 = vadd.f32 %v144, %v821
  %823 = vmatprep.mubr.bf16.mxu0 0
  %824 = vmatmul.mubr.bf16.gmra.mrb[0].mxu0 %v481
  %v825 = vpop.f32.mrb[0].mxu0
  %v826 = vadd.f32 %v140, %v825
  %v827 = vpop.f32.mrb[0].mxu0
  %v828 = vadd.f32 %v144, %v827
  %v829 = vpop.f32.mrb[0].mxu0
  %v830 = vadd.f32 %v140, %v829
  %v831 = vpop.f32.mrb[0].mxu0
  %v832 = vadd.f32 %v144, %v831
  %833 = vmatprep.mubr.bf16.mxu0 0
  %834 = vmatmul.mubr.bf16.gmra.mrb[0].mxu0 %v484
  %v835 = vpop.f32.mrb[0].mxu0
  %v836 = vadd.f32 %v140, %v835
  %v837 = vpop.f32.mrb[0].mxu0
  %v838 = vadd.f32 %v144, %v837
  %v839 = vpop.f32.mrb[0].mxu0
  %v840 = vadd.f32 %v140, %v839
  %v841 = vpop.f32.mrb[0].mxu0
  %v842 = vadd.f32 %v144, %v841
  %843 = vmatprep.mubr.bf16.mxu0 0
  %844 = vmatmul.mubr.bf16.gmra.mrb[0].mxu0 %v487
  %v845 = vpop.f32.mrb[0].mxu0
  %v846 = vadd.f32 %v140, %v845
  %v847 = vpop.f32.mrb[0].mxu0
  %v848 = vadd.f32 %v144, %v847
  %v849 = vpop.f32.mrb[0].mxu0
  %v850 = vadd.f32 %v140, %v849
  %v851 = vpop.f32.mrb[0].mxu0
  %v852 = vadd.f32 %v144, %v851
  %853 = vmatprep.mubr.bf16.mxu0 0
  %854 = vmatmul.mubr.bf16.gmra.mrb[0].mxu0 %v490
  %v855 = vpop.f32.mrb[0].mxu0
  %v856 = vadd.f32 %v140, %v855
  %v857 = vpop.f32.mrb[0].mxu0
  %v858 = vadd.f32 %v144, %v857
  %v859 = vpop.f32.mrb[0].mxu0
  %v860 = vadd.f32 %v140, %v859
  %v861 = vpop.f32.mrb[0].mxu0
  %v862 = vadd.f32 %v144, %v861
  %863 = vmatprep.mubr.bf16.mxu0 0
  %864 = vmatmul.mubr.bf16.gmra.mrb[0].mxu0 %v493
  %v865 = vpop.f32.mrb[0].mxu0
  %v866 = vadd.f32 %v140, %v865
  %v867 = vpop.f32.mrb[0].mxu0
  %v868 = vadd.f32 %v144, %v867
  %v869 = vpop.f32.mrb[0].mxu0
  %v870 = vadd.f32 %v140, %v869
  %v871 = vpop.f32.mrb[0].mxu0
  %v872 = vadd.f32 %v144, %v871
  %873 = vmatprep.mubr.bf16.mxu0 0
  %874 = vmatmul.mubr.bf16.gmra.mrb[0].mxu0 %v496
  %v875 = vpop.f32.mrb[0].mxu0
  %v876 = vadd.f32 %v140, %v875
  %v877 = vpop.f32.mrb[0].mxu0
  %v878 = vadd.f32 %v144, %v877
  %v879 = vpop.f32.mrb[0].mxu0
  %v880 = vadd.f32 %v140, %v879
  %v881 = vpop.f32.mrb[0].mxu0
  %v882 = vadd.f32 %v144, %v881
  %883 = vmatprep.mubr.bf16.mxu0 0
  %884 = vmatmul.mubr.bf16.gmra.mrb[0].mxu0 %v499
  %v885 = vpop.f32.mrb[0].mxu0
  %v886 = vadd.f32 %v140, %v885
  %v887 = vpop.f32.mrb[0].mxu0
  %v888 = vadd.f32 %v144, %v887
  %v889 = vpop.f32.mrb[0].mxu0
  %v890 = vadd.f32 %v140, %v889
  %v891 = vpop.f32.mrb[0].mxu0
  %v892 = vadd.f32 %v144, %v891
  %893 = vmatprep.mubr.bf16.mxu0 0
  %894 = vmatmul.mubr.bf16.gmra.mrb[0].mxu0 %v502
  %v895 = vpop.f32.mrb[0].mxu0
  %v896 = vadd.f32 %v140, %v895
  %v897 = vpop.f32.mrb[0].mxu0
  %v898 = vadd.f32 %v144, %v897
  %v899 = vpop.f32.mrb[0].mxu0
  %v900 = vadd.f32 %v140, %v899
  %v901 = vpop.f32.mrb[0].mxu0
  %v902 = vadd.f32 %v144, %v901
  %903 = vmatprep.mubr.bf16.mxu0 0
  %904 = vmatmul.mubr.bf16.gmra.mrb[0].mxu0 %v505
  %v905 = vpop.f32.mrb[0].mxu0
  %v906 = vadd.f32 %v140, %v905
  %v907 = vpop.f32.mrb[0].mxu0
  %v908 = vadd.f32 %v144, %v907
  %v909 = vpop.f32.mrb[0].mxu0
  %v910 = vadd.f32 %v140, %v909
  %v911 = vpop.f32.mrb[0].mxu0
  %v912 = vadd.f32 %v144, %v911
  %913 = vmatprep.mubr.bf16.mxu0 0
  %914 = vmatmul.mubr.bf16.gmra.mrb[0].mxu0 %v508
  %v915 = vpop.f32.mrb[0].mxu0
  %v916 = vadd.f32 %v140, %v915
  %v917 = vpop.f32.mrb[0].mxu0
  %v918 = vadd.f32 %v144, %v917
  %v919 = vpop.f32.mrb[0].mxu0
  %v920 = vadd.f32 %v140, %v919
  %v921 = vpop.f32.mrb[0].mxu0
  %v922 = vadd.f32 %v144, %v921
  %923 = vmatprep.mubr.bf16.mxu0 0
  %924 = vmatmul.mubr.bf16.gmra.mrb[0].mxu0 %v511
  %v925 = vpop.f32.mrb[0].mxu0
  %v926 = vadd.f32 %v140, %v925
  %v927 = vpop.f32.mrb[0].mxu0
  %v928 = vadd.f32 %v144, %v927
  %v929 = vpop.f32.mrb[0].mxu0
  %v930 = vadd.f32 %v140, %v929
  %v931 = vpop.f32.mrb[0].mxu0
  %v932 = vadd.f32 %v144, %v931
  %933 = vmatprep.mubr.bf16.mxu0 0
  %934 = vmatmul.mubr.bf16.gmra.mrb[0].mxu0 %v514
  %v935 = vpop.f32.mrb[0].mxu0
  %v936 = vadd.f32 %v140, %v935
  %v937 = vpop.f32.mrb[0].mxu0
  %v938 = vadd.f32 %v144, %v937
  %v939 = vpop.f32.mrb[0].mxu0
  %v940 = vadd.f32 %v140, %v939
  %v941 = vpop.f32.mrb[0].mxu0
  %v942 = vadd.f32 %v144, %v941
  %943 = vmatprep.mubr.bf16.mxu0 0
  %944 = vmatmul.mubr.bf16.gmra.mrb[0].mxu0 %v517
  %v945 = vpop.f32.mrb[0].mxu0
  %v946 = vadd.f32 %v140, %v945
  %v947 = vpop.f32.mrb[0].mxu0
  %v948 = vadd.f32 %v144, %v947
  %v949 = vpop.f32.mrb[0].mxu0
  %v950 = vadd.f32 %v140, %v949
  %v951 = vpop.f32.mrb[0].mxu0
  %v952 = vadd.f32 %v144, %v951
  %953 = vmatprep.mubr.bf16.mxu0 0
  %954 = vmatmul.mubr.bf16.gmra.mrb[0].mxu0 %v520
  %v955 = vpop.f32.mrb[0].mxu0
  %v956 = vadd.f32 %v140, %v955
  %v957 = vpop.f32.mrb[0].mxu0
  %v958 = vadd.f32 %v144, %v957
  %v959 = vpop.f32.mrb[0].mxu0
  %v960 = vadd.f32 %v140, %v959
  %v961 = vpop.f32.mrb[0].mxu0
  %v962 = vadd.f32 %v144, %v961
  %963 = vmatprep.mubr.bf16.mxu0 0
  %964 = vmatmul.mubr.bf16.gmra.mrb[0].mxu0 %v523
  %v965 = vpop.f32.mrb[0].mxu0
  %v966 = vadd.f32 %v140, %v965
  %v967 = vpop.f32.mrb[0].mxu0
  %v968 = vadd.f32 %v144, %v967
  %v969 = vpop.f32.mrb[0].mxu0
  %v970 = vadd.f32 %v140, %v969
  %v971 = vpop.f32.mrb[0].mxu0
  %v972 = vadd.f32 %v144, %v971
  %973 = vmatprep.mubr.bf16.mxu0 0
  %974 = vmatmul.mubr.bf16.gmra.mrb[0].mxu0 %v526
  %v975 = vpop.f32.mrb[0].mxu0
  %v976 = vadd.f32 %v140, %v975
  %v977 = vpop.f32.mrb[0].mxu0
  %v978 = vadd.f32 %v144, %v977
  %v979 = vpop.f32.mrb[0].mxu0
  %v980 = vadd.f32 %v140, %v979
  %v981 = vpop.f32.mrb[0].mxu0
  %v982 = vadd.f32 %v144, %v981
  %983 = vmatprep.mubr.bf16.mxu0 0
  %984 = vmatmul.mubr.bf16.gmra.mrb[0].mxu0 %v529
  %v985 = vpop.f32.mrb[0].mxu0
  %v986 = vadd.f32 %v140, %v985
  %v987 = vpop.f32.mrb[0].mxu0
  %v988 = vadd.f32 %v144, %v987
  %v989 = vpop.f32.mrb[0].mxu0
  %v990 = vadd.f32 %v140, %v989
  %v991 = vpop.f32.mrb[0].mxu0
  %v992 = vadd.f32 %v144, %v991
  %993 = vmatprep.mubr.bf16.mxu0 0
  %994 = vmatmul.mubr.bf16.gmra.mrb[0].mxu0 %v532
  %v995 = vpop.f32.mrb[0].mxu0
  %v996 = vadd.f32 %v140, %v995
  %v997 = vpop.f32.mrb[0].mxu0
  %v998 = vadd.f32 %v144, %v997
  %v999 = vpop.f32.mrb[0].mxu0
  %v1000 = vadd.f32 %v140, %v999
  %v1001 = vpop.f32.mrb[0].mxu0
  %v1002 = vadd.f32 %v144, %v1001
  %1003 = vmatprep.mubr.bf16.mxu0 0
  %1004 = vmatmul.mubr.bf16.gmra.mrb[0].mxu0 %v535
  %v1005 = vpop.f32.mrb[0].mxu0
  %v1006 = vadd.f32 %v140, %v1005
  %v1007 = vpop.f32.mrb[0].mxu0
  %v1008 = vadd.f32 %v144, %v1007
  %v1009 = vpop.f32.mrb[0].mxu0
  %v1010 = vadd.f32 %v140, %v1009
  %v1011 = vpop.f32.mrb[0].mxu0
  %v1012 = vadd.f32 %v144, %v1011
  %1013 = vmatprep.mubr.bf16.mxu0 0
  %1014 = vmatmul.mubr.bf16.gmra.mrb[0].mxu0 %v538
  %v1015 = vpop.f32.mrb[0].mxu0
  %v1016 = vadd.f32 %v140, %v1015
  %v1017 = vpop.f32.mrb[0].mxu0
  %v1018 = vadd.f32 %v144, %v1017
  %v1019 = vpop.f32.mrb[0].mxu0
  %v1020 = vadd.f32 %v140, %v1019
  %v1021 = vpop.f32.mrb[0].mxu0
  %v1022 = vadd.f32 %v144, %v1021
  %1023 = vmatprep.mubr.bf16.mxu0 0
  %1024 = vmatmul.mubr.bf16.gmra.mrb[0].mxu0 %v541
  %v1025 = vpop.f32.mrb[0].mxu0
  %v1026 = vadd.f32 %v140, %v1025
  %v1027 = vpop.f32.mrb[0].mxu0
  %v1028 = vadd.f32 %v144, %v1027
  %v1029 = vpop.f32.mrb[0].mxu0
  %v1030 = vadd.f32 %v140, %v1029
  %v1031 = vpop.f32.mrb[0].mxu0
  %v1032 = vadd.f32 %v144, %v1031
  %1033 = vmatprep.mubr.bf16.mxu0 0
  %1034 = vmatmul.mubr.bf16.gmra.mrb[0].mxu0 %v544
  %v1035 = vpop.f32.mrb[0].mxu0
  %v1036 = vadd.f32 %v140, %v1035
  %v1037 = vpop.f32.mrb[0].mxu0
  %v1038 = vadd.f32 %v144, %v1037
  %v1039 = vpop.f32.mrb[0].mxu0
  %v1040 = vadd.f32 %v140, %v1039
  %v1041 = vpop.f32.mrb[0].mxu0
  %v1042 = vadd.f32 %v144, %v1041
  %1043 = vmatprep.mubr.bf16.mxu0 0
  %1044 = vmatmul.mubr.bf16.gmra.mrb[0].mxu0 %v547
  %v1045 = vpop.f32.mrb[0].mxu0
  %v1046 = vadd.f32 %v140, %v1045
  %v1047 = vpop.f32.mrb[0].mxu0
  %v1048 = vadd.f32 %v144, %v1047
  %v1049 = vpop.f32.mrb[0].mxu0
  %v1050 = vadd.f32 %v140, %v1049
  %v1051 = vpop.f32.mrb[0].mxu0
  %v1052 = vadd.f32 %v144, %v1051
  %1053 = vmatprep.mubr.bf16.mxu0 0
  %1054 = vmatmul.mubr.bf16.gmra.mrb[0].mxu0 %v550
  %v1055 = vpop.f32.mrb[0].mxu0
  %v1056 = vadd.f32 %v140, %v1055
  %v1057 = vpop.f32.mrb[0].mxu0
  %v1058 = vadd.f32 %v144, %v1057
  %v1059 = vpop.f32.mrb[0].mxu0
  %v1060 = vadd.f32 %v140, %v1059
  %v1061 = vpop.f32.mrb[0].mxu0
  %v1062 = vadd.f32 %v144, %v1061
  %1063 = vmatprep.mubr.bf16.mxu0 0
  %1064 = vmatmul.mubr.bf16.gmra.mrb[0].mxu0 %v553
  %v1065 = vpop.f32.mrb[0].mxu0
  %v1066 = vadd.f32 %v140, %v1065
  %v1067 = vpop.f32.mrb[0].mxu0
  %v1068 = vadd.f32 %v144, %v1067
  %v1069 = vpop.f32.mrb[0].mxu0
  %v1070 = vadd.f32 %v140, %v1069
  %v1071 = vpop.f32.mrb[0].mxu0
  %v1072 = vadd.f32 %v144, %v1071
  %1073 = vmatprep.mubr.bf16.mxu0 0
  %1074 = vmatmul.mubr.bf16.gmra.mrb[0].mxu0 %v556
  %v1075 = vpop.f32.mrb[0].mxu0
  %v1076 = vadd.f32 %v140, %v1075
  %v1077 = vpop.f32.mrb[0].mxu0
  %v1078 = vadd.f32 %v144, %v1077
  %v1079 = vpop.f32.mrb[0].mxu0
  %v1080 = vadd.f32 %v140, %v1079
  %v1081 = vpop.f32.mrb[0].mxu0
  %v1082 = vadd.f32 %v144, %v1081
  %1083 = vdwg.mxu0
  %1084 = vmatprep.subr.bf16.mxu0 %v569
  %1085 = vmatpush1.bf16.msra.mxu0 %v566
  %1086 = vmatprep.subr.bf16.mxu0 0
  %1087 = vmatpush1.bf16.msra.mxu0 0
  %1088 = vmatprep.subr.bf16.mxu0 0
  %1089 = vmatpush1.bf16.msra.mxu0 0
  %1090 = vmatprep.subr.bf16.mxu0 0
  %1091 = vmatpush1.bf16.msra.mxu0 0
  %1092 = vmatprep.subr.bf16.mxu0 0
  %1093 = vmatpush1.bf16.msra.mxu0 0
  %1094 = vmatprep.subr.bf16.mxu0 0
  %1095 = vmatpush1.bf16.msra.mxu0 0
  %1096 = vmatprep.subr.bf16.mxu0 0
  %1097 = vmatpush1.bf16.msra.mxu0 0
  %1098 = vmatprep.subr.bf16.mxu0 0
  %1099 = vmatpush1.bf16.msra.mxu0 0
  %1100 = vmatprep.subr.bf16.mxu0 0
  %1101 = vmatpush1.bf16.msra.mxu0 0
  %1102 = vmatprep.subr.bf16.mxu0 0
  %1103 = vmatpush1.bf16.msra.mxu0 0
  %1104 = vmatprep.subr.bf16.mxu0 0
  %1105 = vmatpush1.bf16.msra.mxu0 0
  %1106 = vmatprep.subr.bf16.mxu0 0
  %1107 = vmatpush1.bf16.msra.mxu0 0
  %1108 = vmatprep.subr.bf16.mxu0 0
  %1109 = vmatpush1.bf16.msra.mxu0 0
  %1110 = vmatprep.subr.bf16.mxu0 0
  %1111 = vmatpush1.bf16.msra.mxu0 0
  %1112 = vmatprep.subr.bf16.mxu0 0
  %1113 = vmatpush1.bf16.msra.mxu0 0
  %1114 = vmatprep.subr.bf16.mxu0 0
  %1115 = vmatpush1.bf16.msra.mxu0 0
  %1116 = vmatprep.mubr.bf16.mxu0 0
  %1117 = vmatmul.mubr.bf16.gmra.mrb[0].mxu0 %v415
  %v1118 = vpop.f32.mrb[0].mxu0
  %v1119 = vadd.f32 %v148, %v1118
  %v1120 = vpop.f32.mrb[0].mxu0
  %v1121 = vadd.f32 %v152, %v1120
  %v1122 = vpop.f32.mrb[0].mxu0
  %v1123 = vadd.f32 %v148, %v1122
  %v1124 = vpop.f32.mrb[0].mxu0
  %v1125 = vadd.f32 %v152, %v1124
  %1126 = vmatprep.mubr.bf16.mxu0 0
  %1127 = vmatmul.mubr.bf16.gmra.mrb[0].mxu0 %v418
  %v1128 = vpop.f32.mrb[0].mxu0
  %v1129 = vadd.f32 %v148, %v1128
  %v1130 = vpop.f32.mrb[0].mxu0
  %v1131 = vadd.f32 %v152, %v1130
  %v1132 = vpop.f32.mrb[0].mxu0
  %v1133 = vadd.f32 %v148, %v1132
  %v1134 = vpop.f32.mrb[0].mxu0
  %v1135 = vadd.f32 %v152, %v1134
  %1136 = vmatprep.mubr.bf16.mxu0 0
  %1137 = vmatmul.mubr.bf16.gmra.mrb[0].mxu0 %v421
  %v1138 = vpop.f32.mrb[0].mxu0
  %v1139 = vadd.f32 %v148, %v1138
  %v1140 = vpop.f32.mrb[0].mxu0
  %v1141 = vadd.f32 %v152, %v1140
  %v1142 = vpop.f32.mrb[0].mxu0
  %v1143 = vadd.f32 %v148, %v1142
  %v1144 = vpop.f32.mrb[0].mxu0
  %v1145 = vadd.f32 %v152, %v1144
  %1146 = vmatprep.mubr.bf16.mxu0 0
  %1147 = vmatmul.mubr.bf16.gmra.mrb[0].mxu0 %v424
  %v1148 = vpop.f32.mrb[0].mxu0
  %v1149 = vadd.f32 %v148, %v1148
  %v1150 = vpop.f32.mrb[0].mxu0
  %v1151 = vadd.f32 %v152, %v1150
  %v1152 = vpop.f32.mrb[0].mxu0
  %v1153 = vadd.f32 %v148, %v1152
  %v1154 = vpop.f32.mrb[0].mxu0
  %v1155 = vadd.f32 %v152, %v1154
  %1156 = vmatprep.mubr.bf16.mxu0 0
  %1157 = vmatmul.mubr.bf16.gmra.mrb[0].mxu0 %v427
  %v1158 = vpop.f32.mrb[0].mxu0
  %v1159 = vadd.f32 %v148, %v1158
  %v1160 = vpop.f32.mrb[0].mxu0
  %v1161 = vadd.f32 %v152, %v1160
  %v1162 = vpop.f32.mrb[0].mxu0
  %v1163 = vadd.f32 %v148, %v1162
  %v1164 = vpop.f32.mrb[0].mxu0
  %v1165 = vadd.f32 %v152, %v1164
  %1166 = vmatprep.mubr.bf16.mxu0 0
  %1167 = vmatmul.mubr.bf16.gmra.mrb[0].mxu0 %v430
  %v1168 = vpop.f32.mrb[0].mxu0
  %v1169 = vadd.f32 %v148, %v1168
  %v1170 = vpop.f32.mrb[0].mxu0
  %v1171 = vadd.f32 %v152, %v1170
  %v1172 = vpop.f32.mrb[0].mxu0
  %v1173 = vadd.f32 %v148, %v1172
  %v1174 = vpop.f32.mrb[0].mxu0
  %v1175 = vadd.f32 %v152, %v1174
  %1176 = vmatprep.mubr.bf16.mxu0 0
  %1177 = vmatmul.mubr.bf16.gmra.mrb[0].mxu0 %v433
  %v1178 = vpop.f32.mrb[0].mxu0
  %v1179 = vadd.f32 %v148, %v1178
  %v1180 = vpop.f32.mrb[0].mxu0
  %v1181 = vadd.f32 %v152, %v1180
  %v1182 = vpop.f32.mrb[0].mxu0
  %v1183 = vadd.f32 %v148, %v1182
  %v1184 = vpop.f32.mrb[0].mxu0
  %v1185 = vadd.f32 %v152, %v1184
  %1186 = vmatprep.mubr.bf16.mxu0 0
  %1187 = vmatmul.mubr.bf16.gmra.mrb[0].mxu0 %v436
  %v1188 = vpop.f32.mrb[0].mxu0
  %v1189 = vadd.f32 %v148, %v1188
  %v1190 = vpop.f32.mrb[0].mxu0
  %v1191 = vadd.f32 %v152, %v1190
  %v1192 = vpop.f32.mrb[0].mxu0
  %v1193 = vadd.f32 %v148, %v1192
  %v1194 = vpop.f32.mrb[0].mxu0
  %v1195 = vadd.f32 %v152, %v1194
  %1196 = vmatprep.mubr.bf16.mxu0 0
  %1197 = vmatmul.mubr.bf16.gmra.mrb[0].mxu0 %v439
  %v1198 = vpop.f32.mrb[0].mxu0
  %v1199 = vadd.f32 %v148, %v1198
  %v1200 = vpop.f32.mrb[0].mxu0
  %v1201 = vadd.f32 %v152, %v1200
  %v1202 = vpop.f32.mrb[0].mxu0
  %v1203 = vadd.f32 %v148, %v1202
  %v1204 = vpop.f32.mrb[0].mxu0
  %v1205 = vadd.f32 %v152, %v1204
  %1206 = vmatprep.mubr.bf16.mxu0 0
  %1207 = vmatmul.mubr.bf16.gmra.mrb[0].mxu0 %v442
  %v1208 = vpop.f32.mrb[0].mxu0
  %v1209 = vadd.f32 %v148, %v1208
  %v1210 = vpop.f32.mrb[0].mxu0
  %v1211 = vadd.f32 %v152, %v1210
  %v1212 = vpop.f32.mrb[0].mxu0
  %v1213 = vadd.f32 %v148, %v1212
  %v1214 = vpop.f32.mrb[0].mxu0
  %v1215 = vadd.f32 %v152, %v1214
  %1216 = vmatprep.mubr.bf16.mxu0 0
  %1217 = vmatmul.mubr.bf16.gmra.mrb[0].mxu0 %v445
  %v1218 = vpop.f32.mrb[0].mxu0
  %v1219 = vadd.f32 %v148, %v1218
  %v1220 = vpop.f32.mrb[0].mxu0
  %v1221 = vadd.f32 %v152, %v1220
  %v1222 = vpop.f32.mrb[0].mxu0
  %v1223 = vadd.f32 %v148, %v1222
  %v1224 = vpop.f32.mrb[0].mxu0
  %v1225 = vadd.f32 %v152, %v1224
  %1226 = vmatprep.mubr.bf16.mxu0 0
  %1227 = vmatmul.mubr.bf16.gmra.mrb[0].mxu0 %v448
  %v1228 = vpop.f32.mrb[0].mxu0
  %v1229 = vadd.f32 %v148, %v1228
  %v1230 = vpop.f32.mrb[0].mxu0
  %v1231 = vadd.f32 %v152, %v1230
  %v1232 = vpop.f32.mrb[0].mxu0
  %v1233 = vadd.f32 %v148, %v1232
  %v1234 = vpop.f32.mrb[0].mxu0
  %v1235 = vadd.f32 %v152, %v1234
  %1236 = vmatprep.mubr.bf16.mxu0 0
  %1237 = vmatmul.mubr.bf16.gmra.mrb[0].mxu0 %v451
  %v1238 = vpop.f32.mrb[0].mxu0
  %v1239 = vadd.f32 %v148, %v1238
  %v1240 = vpop.f32.mrb[0].mxu0
  %v1241 = vadd.f32 %v152, %v1240
  %v1242 = vpop.f32.mrb[0].mxu0
  %v1243 = vadd.f32 %v148, %v1242
  %v1244 = vpop.f32.mrb[0].mxu0
  %v1245 = vadd.f32 %v152, %v1244
  %1246 = vmatprep.mubr.bf16.mxu0 0
  %1247 = vmatmul.mubr.bf16.gmra.mrb[0].mxu0 %v454
  %v1248 = vpop.f32.mrb[0].mxu0
  %v1249 = vadd.f32 %v148, %v1248
  %v1250 = vpop.f32.mrb[0].mxu0
  %v1251 = vadd.f32 %v152, %v1250
  %v1252 = vpop.f32.mrb[0].mxu0
  %v1253 = vadd.f32 %v148, %v1252
  %v1254 = vpop.f32.mrb[0].mxu0
  %v1255 = vadd.f32 %v152, %v1254
  %1256 = vmatprep.mubr.bf16.mxu0 0
  %1257 = vmatmul.mubr.bf16.gmra.mrb[0].mxu0 %v457
  %v1258 = vpop.f32.mrb[0].mxu0
  %v1259 = vadd.f32 %v148, %v1258
  %v1260 = vpop.f32.mrb[0].mxu0
  %v1261 = vadd.f32 %v152, %v1260
  %v1262 = vpop.f32.mrb[0].mxu0
  %v1263 = vadd.f32 %v148, %v1262
  %v1264 = vpop.f32.mrb[0].mxu0
  %v1265 = vadd.f32 %v152, %v1264
  %1266 = vmatprep.mubr.bf16.mxu0 0
  %1267 = vmatmul.mubr.bf16.gmra.mrb[0].mxu0 %v460
  %v1268 = vpop.f32.mrb[0].mxu0
  %v1269 = vadd.f32 %v148, %v1268
  %v1270 = vpop.f32.mrb[0].mxu0
  %v1271 = vadd.f32 %v152, %v1270
  %v1272 = vpop.f32.mrb[0].mxu0
  %v1273 = vadd.f32 %v148, %v1272
  %v1274 = vpop.f32.mrb[0].mxu0
  %v1275 = vadd.f32 %v152, %v1274
  %1276 = vmatprep.mubr.bf16.mxu0 0
  %1277 = vmatmul.mubr.bf16.gmra.mrb[0].mxu0 %v463
  %v1278 = vpop.f32.mrb[0].mxu0
  %v1279 = vadd.f32 %v148, %v1278
  %v1280 = vpop.f32.mrb[0].mxu0
  %v1281 = vadd.f32 %v152, %v1280
  %v1282 = vpop.f32.mrb[0].mxu0
  %v1283 = vadd.f32 %v148, %v1282
  %v1284 = vpop.f32.mrb[0].mxu0
  %v1285 = vadd.f32 %v152, %v1284
  %1286 = vmatprep.mubr.bf16.mxu0 0
  %1287 = vmatmul.mubr.bf16.gmra.mrb[0].mxu0 %v466
  %v1288 = vpop.f32.mrb[0].mxu0
  %v1289 = vadd.f32 %v148, %v1288
  %v1290 = vpop.f32.mrb[0].mxu0
  %v1291 = vadd.f32 %v152, %v1290
  %v1292 = vpop.f32.mrb[0].mxu0
  %v1293 = vadd.f32 %v148, %v1292
  %v1294 = vpop.f32.mrb[0].mxu0
  %v1295 = vadd.f32 %v152, %v1294
  %1296 = vmatprep.mubr.bf16.mxu0 0
  %1297 = vmatmul.mubr.bf16.gmra.mrb[0].mxu0 %v469
  %v1298 = vpop.f32.mrb[0].mxu0
  %v1299 = vadd.f32 %v148, %v1298
  %v1300 = vpop.f32.mrb[0].mxu0
  %v1301 = vadd.f32 %v152, %v1300
  %v1302 = vpop.f32.mrb[0].mxu0
  %v1303 = vadd.f32 %v148, %v1302
  %v1304 = vpop.f32.mrb[0].mxu0
  %v1305 = vadd.f32 %v152, %v1304
  %1306 = vmatprep.mubr.bf16.mxu0 0
  %1307 = vmatmul.mubr.bf16.gmra.mrb[0].mxu0 %v472
  %v1308 = vpop.f32.mrb[0].mxu0
  %v1309 = vadd.f32 %v148, %v1308
  %v1310 = vpop.f32.mrb[0].mxu0
  %v1311 = vadd.f32 %v152, %v1310
  %v1312 = vpop.f32.mrb[0].mxu0
  %v1313 = vadd.f32 %v148, %v1312
  %v1314 = vpop.f32.mrb[0].mxu0
  %v1315 = vadd.f32 %v152, %v1314
  %1316 = vmatprep.mubr.bf16.mxu0 0
  %1317 = vmatmul.mubr.bf16.gmra.mrb[0].mxu0 %v475
  %v1318 = vpop.f32.mrb[0].mxu0
  %v1319 = vadd.f32 %v148, %v1318
  %v1320 = vpop.f32.mrb[0].mxu0
  %v1321 = vadd.f32 %v152, %v1320
  %v1322 = vpop.f32.mrb[0].mxu0
  %v1323 = vadd.f32 %v148, %v1322
  %v1324 = vpop.f32.mrb[0].mxu0
  %v1325 = vadd.f32 %v152, %v1324
  %1326 = vmatprep.mubr.bf16.mxu0 0
  %1327 = vmatmul.mubr.bf16.gmra.mrb[0].mxu0 %v478
  %v1328 = vpop.f32.mrb[0].mxu0
  %v1329 = vadd.f32 %v148, %v1328
  %v1330 = vpop.f32.mrb[0].mxu0
  %v1331 = vadd.f32 %v152, %v1330
  %v1332 = vpop.f32.mrb[0].mxu0
  %v1333 = vadd.f32 %v148, %v1332
  %v1334 = vpop.f32.mrb[0].mxu0
  %v1335 = vadd.f32 %v152, %v1334
  %1336 = vmatprep.mubr.bf16.mxu0 0
  %1337 = vmatmul.mubr.bf16.gmra.mrb[0].mxu0 %v481
  %v1338 = vpop.f32.mrb[0].mxu0
  %v1339 = vadd.f32 %v148, %v1338
  %v1340 = vpop.f32.mrb[0].mxu0
  %v1341 = vadd.f32 %v152, %v1340
  %v1342 = vpop.f32.mrb[0].mxu0
  %v1343 = vadd.f32 %v148, %v1342
  %v1344 = vpop.f32.mrb[0].mxu0
  %v1345 = vadd.f32 %v152, %v1344
  %1346 = vmatprep.mubr.bf16.mxu0 0
  %1347 = vmatmul.mubr.bf16.gmra.mrb[0].mxu0 %v484
  %v1348 = vpop.f32.mrb[0].mxu0
  %v1349 = vadd.f32 %v148, %v1348
  %v1350 = vpop.f32.mrb[0].mxu0
  %v1351 = vadd.f32 %v152, %v1350
  %v1352 = vpop.f32.mrb[0].mxu0
  %v1353 = vadd.f32 %v148, %v1352
  %v1354 = vpop.f32.mrb[0].mxu0
  %v1355 = vadd.f32 %v152, %v1354
  %1356 = vmatprep.mubr.bf16.mxu0 0
  %1357 = vmatmul.mubr.bf16.gmra.mrb[0].mxu0 %v487
  %v1358 = vpop.f32.mrb[0].mxu0
  %v1359 = vadd.f32 %v148, %v1358
  %v1360 = vpop.f32.mrb[0].mxu0
  %v1361 = vadd.f32 %v152, %v1360
  %v1362 = vpop.f32.mrb[0].mxu0
  %v1363 = vadd.f32 %v148, %v1362
  %v1364 = vpop.f32.mrb[0].mxu0
  %v1365 = vadd.f32 %v152, %v1364
  %1366 = vmatprep.mubr.bf16.mxu0 0
  %1367 = vmatmul.mubr.bf16.gmra.mrb[0].mxu0 %v490
  %v1368 = vpop.f32.mrb[0].mxu0
  %v1369 = vadd.f32 %v148, %v1368
  %v1370 = vpop.f32.mrb[0].mxu0
  %v1371 = vadd.f32 %v152, %v1370
  %v1372 = vpop.f32.mrb[0].mxu0
  %v1373 = vadd.f32 %v148, %v1372
  %v1374 = vpop.f32.mrb[0].mxu0
  %v1375 = vadd.f32 %v152, %v1374
  %1376 = vmatprep.mubr.bf16.mxu0 0
  %1377 = vmatmul.mubr.bf16.gmra.mrb[0].mxu0 %v493
  %v1378 = vpop.f32.mrb[0].mxu0
  %v1379 = vadd.f32 %v148, %v1378
  %v1380 = vpop.f32.mrb[0].mxu0
  %v1381 = vadd.f32 %v152, %v1380
  %v1382 = vpop.f32.mrb[0].mxu0
  %v1383 = vadd.f32 %v148, %v1382
  %v1384 = vpop.f32.mrb[0].mxu0
  %v1385 = vadd.f32 %v152, %v1384
  %1386 = vmatprep.mubr.bf16.mxu0 0
  %1387 = vmatmul.mubr.bf16.gmra.mrb[0].mxu0 %v496
  %v1388 = vpop.f32.mrb[0].mxu0
  %v1389 = vadd.f32 %v148, %v1388
  %v1390 = vpop.f32.mrb[0].mxu0
  %v1391 = vadd.f32 %v152, %v1390
  %v1392 = vpop.f32.mrb[0].mxu0
  %v1393 = vadd.f32 %v148, %v1392
  %v1394 = vpop.f32.mrb[0].mxu0
  %v1395 = vadd.f32 %v152, %v1394
  %1396 = vmatprep.mubr.bf16.mxu0 0
  %1397 = vmatmul.mubr.bf16.gmra.mrb[0].mxu0 %v499
  %v1398 = vpop.f32.mrb[0].mxu0
  %v1399 = vadd.f32 %v148, %v1398
  %v1400 = vpop.f32.mrb[0].mxu0
  %v1401 = vadd.f32 %v152, %v1400
  %v1402 = vpop.f32.mrb[0].mxu0
  %v1403 = vadd.f32 %v148, %v1402
  %v1404 = vpop.f32.mrb[0].mxu0
  %v1405 = vadd.f32 %v152, %v1404
  %1406 = vmatprep.mubr.bf16.mxu0 0
  %1407 = vmatmul.mubr.bf16.gmra.mrb[0].mxu0 %v502
  %v1408 = vpop.f32.mrb[0].mxu0
  %v1409 = vadd.f32 %v148, %v1408
  %v1410 = vpop.f32.mrb[0].mxu0
  %v1411 = vadd.f32 %v152, %v1410
  %v1412 = vpop.f32.mrb[0].mxu0
  %v1413 = vadd.f32 %v148, %v1412
  %v1414 = vpop.f32.mrb[0].mxu0
  %v1415 = vadd.f32 %v152, %v1414
  %1416 = vmatprep.mubr.bf16.mxu0 0
  %1417 = vmatmul.mubr.bf16.gmra.mrb[0].mxu0 %v505
  %v1418 = vpop.f32.mrb[0].mxu0
  %v1419 = vadd.f32 %v148, %v1418
  %v1420 = vpop.f32.mrb[0].mxu0
  %v1421 = vadd.f32 %v152, %v1420
  %v1422 = vpop.f32.mrb[0].mxu0
  %v1423 = vadd.f32 %v148, %v1422
  %v1424 = vpop.f32.mrb[0].mxu0
  %v1425 = vadd.f32 %v152, %v1424
  %1426 = vmatprep.mubr.bf16.mxu0 0
  %1427 = vmatmul.mubr.bf16.gmra.mrb[0].mxu0 %v508
  %v1428 = vpop.f32.mrb[0].mxu0
  %v1429 = vadd.f32 %v148, %v1428
  %v1430 = vpop.f32.mrb[0].mxu0
  %v1431 = vadd.f32 %v152, %v1430
  %v1432 = vpop.f32.mrb[0].mxu0
  %v1433 = vadd.f32 %v148, %v1432
  %v1434 = vpop.f32.mrb[0].mxu0
  %v1435 = vadd.f32 %v152, %v1434
  %1436 = vmatprep.mubr.bf16.mxu0 0
  %1437 = vmatmul.mubr.bf16.gmra.mrb[0].mxu0 %v511
  %v1438 = vpop.f32.mrb[0].mxu0
  %v1439 = vadd.f32 %v148, %v1438
  %v1440 = vpop.f32.mrb[0].mxu0
  %v1441 = vadd.f32 %v152, %v1440
  %v1442 = vpop.f32.mrb[0].mxu0
  %v1443 = vadd.f32 %v148, %v1442
  %v1444 = vpop.f32.mrb[0].mxu0
  %v1445 = vadd.f32 %v152, %v1444
  %1446 = vmatprep.mubr.bf16.mxu0 0
  %1447 = vmatmul.mubr.bf16.gmra.mrb[0].mxu0 %v514
  %v1448 = vpop.f32.mrb[0].mxu0
  %v1449 = vadd.f32 %v148, %v1448
  %v1450 = vpop.f32.mrb[0].mxu0
  %v1451 = vadd.f32 %v152, %v1450
  %v1452 = vpop.f32.mrb[0].mxu0
  %v1453 = vadd.f32 %v148, %v1452
  %v1454 = vpop.f32.mrb[0].mxu0
  %v1455 = vadd.f32 %v152, %v1454
  %1456 = vmatprep.mubr.bf16.mxu0 0
  %1457 = vmatmul.mubr.bf16.gmra.mrb[0].mxu0 %v517
  %v1458 = vpop.f32.mrb[0].mxu0
  %v1459 = vadd.f32 %v148, %v1458
  %v1460 = vpop.f32.mrb[0].mxu0
  %v1461 = vadd.f32 %v152, %v1460
  %v1462 = vpop.f32.mrb[0].mxu0
  %v1463 = vadd.f32 %v148, %v1462
  %v1464 = vpop.f32.mrb[0].mxu0
  %v1465 = vadd.f32 %v152, %v1464
  %1466 = vmatprep.mubr.bf16.mxu0 0
  %1467 = vmatmul.mubr.bf16.gmra.mrb[0].mxu0 %v520
  %v1468 = vpop.f32.mrb[0].mxu0
  %v1469 = vadd.f32 %v148, %v1468
  %v1470 = vpop.f32.mrb[0].mxu0
  %v1471 = vadd.f32 %v152, %v1470
  %v1472 = vpop.f32.mrb[0].mxu0
  %v1473 = vadd.f32 %v148, %v1472
  %v1474 = vpop.f32.mrb[0].mxu0
  %v1475 = vadd.f32 %v152, %v1474
  %1476 = vmatprep.mubr.bf16.mxu0 0
  %1477 = vmatmul.mubr.bf16.gmra.mrb[0].mxu0 %v523
  %v1478 = vpop.f32.mrb[0].mxu0
  %v1479 = vadd.f32 %v148, %v1478
  %v1480 = vpop.f32.mrb[0].mxu0
  %v1481 = vadd.f32 %v152, %v1480
  %v1482 = vpop.f32.mrb[0].mxu0
  %v1483 = vadd.f32 %v148, %v1482
  %v1484 = vpop.f32.mrb[0].mxu0
  %v1485 = vadd.f32 %v152, %v1484
  %1486 = vmatprep.mubr.bf16.mxu0 0
  %1487 = vmatmul.mubr.bf16.gmra.mrb[0].mxu0 %v526
  %v1488 = vpop.f32.mrb[0].mxu0
  %v1489 = vadd.f32 %v148, %v1488
  %v1490 = vpop.f32.mrb[0].mxu0
  %v1491 = vadd.f32 %v152, %v1490
  %v1492 = vpop.f32.mrb[0].mxu0
  %v1493 = vadd.f32 %v148, %v1492
  %v1494 = vpop.f32.mrb[0].mxu0
  %v1495 = vadd.f32 %v152, %v1494
  %1496 = vmatprep.mubr.bf16.mxu0 0
  %1497 = vmatmul.mubr.bf16.gmra.mrb[0].mxu0 %v529
  %v1498 = vpop.f32.mrb[0].mxu0
  %v1499 = vadd.f32 %v148, %v1498
  %v1500 = vpop.f32.mrb[0].mxu0
  %v1501 = vadd.f32 %v152, %v1500
  %v1502 = vpop.f32.mrb[0].mxu0
  %v1503 = vadd.f32 %v148, %v1502
  %v1504 = vpop.f32.mrb[0].mxu0
  %v1505 = vadd.f32 %v152, %v1504
  %1506 = vmatprep.mubr.bf16.mxu0 0
  %1507 = vmatmul.mubr.bf16.gmra.mrb[0].mxu0 %v532
  %v1508 = vpop.f32.mrb[0].mxu0
  %v1509 = vadd.f32 %v148, %v1508
  %v1510 = vpop.f32.mrb[0].mxu0
  %v1511 = vadd.f32 %v152, %v1510
  %v1512 = vpop.f32.mrb[0].mxu0
  %v1513 = vadd.f32 %v148, %v1512
  %v1514 = vpop.f32.mrb[0].mxu0
  %v1515 = vadd.f32 %v152, %v1514
  %1516 = vmatprep.mubr.bf16.mxu0 0
  %1517 = vmatmul.mubr.bf16.gmra.mrb[0].mxu0 %v535
  %v1518 = vpop.f32.mrb[0].mxu0
  %v1519 = vadd.f32 %v148, %v1518
  %v1520 = vpop.f32.mrb[0].mxu0
  %v1521 = vadd.f32 %v152, %v1520
  %v1522 = vpop.f32.mrb[0].mxu0
  %v1523 = vadd.f32 %v148, %v1522
  %v1524 = vpop.f32.mrb[0].mxu0
  %v1525 = vadd.f32 %v152, %v1524
  %1526 = vmatprep.mubr.bf16.mxu0 0
  %1527 = vmatmul.mubr.bf16.gmra.mrb[0].mxu0 %v538
  %v1528 = vpop.f32.mrb[0].mxu0
  %v1529 = vadd.f32 %v148, %v1528
  %v1530 = vpop.f32.mrb[0].mxu0
  %v1531 = vadd.f32 %v152, %v1530
  %v1532 = vpop.f32.mrb[0].mxu0
  %v1533 = vadd.f32 %v148, %v1532
  %v1534 = vpop.f32.mrb[0].mxu0
  %v1535 = vadd.f32 %v152, %v1534
  %1536 = vmatprep.mubr.bf16.mxu0 0
  %1537 = vmatmul.mubr.bf16.gmra.mrb[0].mxu0 %v541
  %v1538 = vpop.f32.mrb[0].mxu0
  %v1539 = vadd.f32 %v148, %v1538
  %v1540 = vpop.f32.mrb[0].mxu0
  %v1541 = vadd.f32 %v152, %v1540
  %v1542 = vpop.f32.mrb[0].mxu0
  %v1543 = vadd.f32 %v148, %v1542
  %v1544 = vpop.f32.mrb[0].mxu0
  %v1545 = vadd.f32 %v152, %v1544
  %1546 = vmatprep.mubr.bf16.mxu0 0
  %1547 = vmatmul.mubr.bf16.gmra.mrb[0].mxu0 %v544
  %v1548 = vpop.f32.mrb[0].mxu0
  %v1549 = vadd.f32 %v148, %v1548
  %v1550 = vpop.f32.mrb[0].mxu0
  %v1551 = vadd.f32 %v152, %v1550
  %v1552 = vpop.f32.mrb[0].mxu0
  %v1553 = vadd.f32 %v148, %v1552
  %v1554 = vpop.f32.mrb[0].mxu0
  %v1555 = vadd.f32 %v152, %v1554
  %1556 = vmatprep.mubr.bf16.mxu0 0
  %1557 = vmatmul.mubr.bf16.gmra.mrb[0].mxu0 %v547
  %v1558 = vpop.f32.mrb[0].mxu0
  %v1559 = vadd.f32 %v148, %v1558
  %v1560 = vpop.f32.mrb[0].mxu0
  %v1561 = vadd.f32 %v152, %v1560
  %v1562 = vpop.f32.mrb[0].mxu0
  %v1563 = vadd.f32 %v148, %v1562
  %v1564 = vpop.f32.mrb[0].mxu0
  %v1565 = vadd.f32 %v152, %v1564
  %1566 = vmatprep.mubr.bf16.mxu0 0
  %1567 = vmatmul.mubr.bf16.gmra.mrb[0].mxu0 %v550
  %v1568 = vpop.f32.mrb[0].mxu0
  %v1569 = vadd.f32 %v148, %v1568
  %v1570 = vpop.f32.mrb[0].mxu0
  %v1571 = vadd.f32 %v152, %v1570
  %v1572 = vpop.f32.mrb[0].mxu0
  %v1573 = vadd.f32 %v148, %v1572
  %v1574 = vpop.f32.mrb[0].mxu0
  %v1575 = vadd.f32 %v152, %v1574
  %1576 = vmatprep.mubr.bf16.mxu0 0
  %1577 = vmatmul.mubr.bf16.gmra.mrb[0].mxu0 %v553
  %v1578 = vpop.f32.mrb[0].mxu0
  %v1579 = vadd.f32 %v148, %v1578
  %v1580 = vpop.f32.mrb[0].mxu0
  %v1581 = vadd.f32 %v152, %v1580
  %v1582 = vpop.f32.mrb[0].mxu0
  %v1583 = vadd.f32 %v148, %v1582
  %v1584 = vpop.f32.mrb[0].mxu0
  %v1585 = vadd.f32 %v152, %v1584
  %1586 = vmatprep.mubr.bf16.mxu0 0
  %1587 = vmatmul.mubr.bf16.gmra.mrb[0].mxu0 %v556
  %v1588 = vpop.f32.mrb[0].mxu0
  %v1589 = vadd.f32 %v148, %v1588
  %v1590 = vpop.f32.mrb[0].mxu0
  %v1591 = vadd.f32 %v152, %v1590
  %v1592 = vpop.f32.mrb[0].mxu0
  %v1593 = vadd.f32 %v148, %v1592
  %v1594 = vpop.f32.mrb[0].mxu0
  %v1595 = vadd.f32 %v152, %v1594
  %1596 = vdwg.mxu0
  %1597 = vst [vmem:[#allocation2] sm:$0xff] %v606
  %1598 = vst [vmem:[#allocation2 + $0x8] sm:$0xff] %v608
  %1599 = vst [vmem:[#allocation2 + $0x10] sm:$0xff] %v1119
  %1600 = vst [vmem:[#allocation2 + $0x18] sm:$0xff] %v1121
  %1601 = vst [vmem:[#allocation2 + $0x20] sm:$0xff] %v610
  %1602 = vst [vmem:[#allocation2 + $0x28] sm:$0xff] %v612
  %1603 = vst [vmem:[#allocation2 + $0x30] sm:$0xff] %v1123
  %1604 = vst [vmem:[#allocation2 + $0x38] sm:$0xff] %v1125
  %1605 = vst [vmem:[#allocation2 + $0x40] sm:$0xff] %v616
  %1606 = vst [vmem:[#allocation2 + $0x48] sm:$0xff] %v618
  %1607 = vst [vmem:[#allocation2 + $0x50] sm:$0xff] %v1129
  %1608 = vst [vmem:[#allocation2 + $0x58] sm:$0xff] %v1131
  %1609 = vst [vmem:[#allocation2 + $0x60] sm:$0xff] %v620
  %1610 = vst [vmem:[#allocation2 + $0x68] sm:$0xff] %v622
  %1611 = vst [vmem:[#allocation2 + $0x70] sm:$0xff] %v1133
  %1612 = vst [vmem:[#allocation2 + $0x78] sm:$0xff] %v1135
  %1613 = vst [vmem:[#allocation2 + $0x80] sm:$0xff] %v626
  %1614 = vst [vmem:[#allocation2 + $0x88] sm:$0xff] %v628
  %1615 = vst [vmem:[#allocation2 + $0x90] sm:$0xff] %v1139
  %1616 = vst [vmem:[#allocation2 + $0x98] sm:$0xff] %v1141
  %1617 = vst [vmem:[#allocation2 + $0xa0] sm:$0xff] %v630
  %1618 = vst [vmem:[#allocation2 + $0xa8] sm:$0xff] %v632
  %1619 = vst [vmem:[#allocation2 + $0xb0] sm:$0xff] %v1143
  %1620 = vst [vmem:[#allocation2 + $0xb8] sm:$0xff] %v1145
  %1621 = vst [vmem:[#allocation2 + $0xc0] sm:$0xff] %v636
  %1622 = vst [vmem:[#allocation2 + $0xc8] sm:$0xff] %v638
  %1623 = vst [vmem:[#allocation2 + $0xd0] sm:$0xff] %v1149
  %1624 = vst [vmem:[#allocation2 + $0xd8] sm:$0xff] %v1151
  %1625 = vst [vmem:[#allocation2 + $0xe0] sm:$0xff] %v640
  %1626 = vst [vmem:[#allocation2 + $0xe8] sm:$0xff] %v642
  %1627 = vst [vmem:[#allocation2 + $0xf0] sm:$0xff] %v1153
  %1628 = vst [vmem:[#allocation2 + $0xf8] sm:$0xff] %v1155
  %1629 = vst [vmem:[#allocation2 + $0x100] sm:$0xff] %v646
  %1630 = vst [vmem:[#allocation2 + $0x108] sm:$0xff] %v648
  %1631 = vst [vmem:[#allocation2 + $0x110] sm:$0xff] %v1159
  %1632 = vst [vmem:[#allocation2 + $0x118] sm:$0xff] %v1161
  %1633 = vst [vmem:[#allocation2 + $0x120] sm:$0xff] %v650
  %1634 = vst [vmem:[#allocation2 + $0x128] sm:$0xff] %v652
  %1635 = vst [vmem:[#allocation2 + $0x130] sm:$0xff] %v1163
  %1636 = vst [vmem:[#allocation2 + $0x138] sm:$0xff] %v1165
  %1637 = vst [vmem:[#allocation2 + $0x140] sm:$0xff] %v656
  %1638 = vst [vmem:[#allocation2 + $0x148] sm:$0xff] %v658
  %1639 = vst [vmem:[#allocation2 + $0x150] sm:$0xff] %v1169
  %1640 = vst [vmem:[#allocation2 + $0x158] sm:$0xff] %v1171
  %1641 = vst [vmem:[#allocation2 + $0x160] sm:$0xff] %v660
  %1642 = vst [vmem:[#allocation2 + $0x168] sm:$0xff] %v662
  %1643 = vst [vmem:[#allocation2 + $0x170] sm:$0xff] %v1173
  %1644 = vst [vmem:[#allocation2 + $0x178] sm:$0xff] %v1175
  %1645 = vst [vmem:[#allocation2 + $0x180] sm:$0xff] %v666
  %1646 = vst [vmem:[#allocation2 + $0x188] sm:$0xff] %v668
  %1647 = vst [vmem:[#allocation2 + $0x190] sm:$0xff] %v1179
  %1648 = vst [vmem:[#allocation2 + $0x198] sm:$0xff] %v1181
  %1649 = vst [vmem:[#allocation2 + $0x1a0] sm:$0xff] %v670
  %1650 = vst [vmem:[#allocation2 + $0x1a8] sm:$0xff] %v672
  %1651 = vst [vmem:[#allocation2 + $0x1b0] sm:$0xff] %v1183
  %1652 = vst [vmem:[#allocation2 + $0x1b8] sm:$0xff] %v1185
  %1653 = vst [vmem:[#allocation2 + $0x1c0] sm:$0xff] %v676
  %1654 = vst [vmem:[#allocation2 + $0x1c8] sm:$0xff] %v678
  %1655 = vst [vmem:[#allocation2 + $0x1d0] sm:$0xff] %v1189
  %1656 = vst [vmem:[#allocation2 + $0x1d8] sm:$0xff] %v1191
  %1657 = vst [vmem:[#allocation2 + $0x1e0] sm:$0xff] %v680
  %1658 = vst [vmem:[#allocation2 + $0x1e8] sm:$0xff] %v682
  %1659 = vst [vmem:[#allocation2 + $0x1f0] sm:$0xff] %v1193
  %1660 = vst [vmem:[#allocation2 + $0x1f8] sm:$0xff] %v1195
  %1661 = vst [vmem:[#allocation2 + $0x200] sm:$0xff] %v686
  %1662 = vst [vmem:[#allocation2 + $0x208] sm:$0xff] %v688
  %1663 = vst [vmem:[#allocation2 + $0x210] sm:$0xff] %v1199
  %1664 = vst [vmem:[#allocation2 + $0x218] sm:$0xff] %v1201
  %1665 = vst [vmem:[#allocation2 + $0x220] sm:$0xff] %v690
  %1666 = vst [vmem:[#allocation2 + $0x228] sm:$0xff] %v692
  %1667 = vst [vmem:[#allocation2 + $0x230] sm:$0xff] %v1203
  %1668 = vst [vmem:[#allocation2 + $0x238] sm:$0xff] %v1205
  %1669 = vst [vmem:[#allocation2 + $0x240] sm:$0xff] %v696
  %1670 = vst [vmem:[#allocation2 + $0x248] sm:$0xff] %v698
  %1671 = vst [vmem:[#allocation2 + $0x250] sm:$0xff] %v1209
  %1672 = vst [vmem:[#allocation2 + $0x258] sm:$0xff] %v1211
  %1673 = vst [vmem:[#allocation2 + $0x260] sm:$0xff] %v700
  %1674 = vst [vmem:[#allocation2 + $0x268] sm:$0xff] %v702
  %1675 = vst [vmem:[#allocation2 + $0x270] sm:$0xff] %v1213
  %1676 = vst [vmem:[#allocation2 + $0x278] sm:$0xff] %v1215
  %1677 = vst [vmem:[#allocation2 + $0x280] sm:$0xff] %v706
  %1678 = vst [vmem:[#allocation2 + $0x288] sm:$0xff] %v708
  %1679 = vst [vmem:[#allocation2 + $0x290] sm:$0xff] %v1219
  %1680 = vst [vmem:[#allocation2 + $0x298] sm:$0xff] %v1221
  %1681 = vst [vmem:[#allocation2 + $0x2a0] sm:$0xff] %v710
  %1682 = vst [vmem:[#allocation2 + $0x2a8] sm:$0xff] %v712
  %1683 = vst [vmem:[#allocation2 + $0x2b0] sm:$0xff] %v1223
  %1684 = vst [vmem:[#allocation2 + $0x2b8] sm:$0xff] %v1225
  %1685 = vst [vmem:[#allocation2 + $0x2c0] sm:$0xff] %v716
  %1686 = vst [vmem:[#allocation2 + $0x2c8] sm:$0xff] %v718
  %1687 = vst [vmem:[#allocation2 + $0x2d0] sm:$0xff] %v1229
  %1688 = vst [vmem:[#allocation2 + $0x2d8] sm:$0xff] %v1231
  %1689 = vst [vmem:[#allocation2 + $0x2e0] sm:$0xff] %v720
  %1690 = vst [vmem:[#allocation2 + $0x2e8] sm:$0xff] %v722
  %1691 = vst [vmem:[#allocation2 + $0x2f0] sm:$0xff] %v1233
  %1692 = vst [vmem:[#allocation2 + $0x2f8] sm:$0xff] %v1235
  %1693 = vst [vmem:[#allocation2 + $0x300] sm:$0xff] %v726
  %1694 = vst [vmem:[#allocation2 + $0x308] sm:$0xff] %v728
  %1695 = vst [vmem:[#allocation2 + $0x310] sm:$0xff] %v1239
  %1696 = vst [vmem:[#allocation2 + $0x318] sm:$0xff] %v1241
  %1697 = vst [vmem:[#allocation2 + $0x320] sm:$0xff] %v730
  %1698 = vst [vmem:[#allocation2 + $0x328] sm:$0xff] %v732
  %1699 = vst [vmem:[#allocation2 + $0x330] sm:$0xff] %v1243
  %1700 = vst [vmem:[#allocation2 + $0x338] sm:$0xff] %v1245
  %1701 = vst [vmem:[#allocation2 + $0x340] sm:$0xff] %v736
  %1702 = vst [vmem:[#allocation2 + $0x348] sm:$0xff] %v738
  %1703 = vst [vmem:[#allocation2 + $0x350] sm:$0xff] %v1249
  %1704 = vst [vmem:[#allocation2 + $0x358] sm:$0xff] %v1251
  %1705 = vst [vmem:[#allocation2 + $0x360] sm:$0xff] %v740
  %1706 = vst [vmem:[#allocation2 + $0x368] sm:$0xff] %v742
  %1707 = vst [vmem:[#allocation2 + $0x370] sm:$0xff] %v1253
  %1708 = vst [vmem:[#allocation2 + $0x378] sm:$0xff] %v1255
  %1709 = vst [vmem:[#allocation2 + $0x380] sm:$0xff] %v746
  %1710 = vst [vmem:[#allocation2 + $0x388] sm:$0xff] %v748
  %1711 = vst [vmem:[#allocation2 + $0x390] sm:$0xff] %v1259
  %1712 = vst [vmem:[#allocation2 + $0x398] sm:$0xff] %v1261
  %1713 = vst [vmem:[#allocation2 + $0x3a0] sm:$0xff] %v750
  %1714 = vst [vmem:[#allocation2 + $0x3a8] sm:$0xff] %v752
  %1715 = vst [vmem:[#allocation2 + $0x3b0] sm:$0xff] %v1263
  %1716 = vst [vmem:[#allocation2 + $0x3b8] sm:$0xff] %v1265
  %1717 = vst [vmem:[#allocation2 + $0x3c0] sm:$0xff] %v756
  %1718 = vst [vmem:[#allocation2 + $0x3c8] sm:$0xff] %v758
  %1719 = vst [vmem:[#allocation2 + $0x3d0] sm:$0xff] %v1269
  %1720 = vst [vmem:[#allocation2 + $0x3d8] sm:$0xff] %v1271
  %1721 = vst [vmem:[#allocation2 + $0x3e0] sm:$0xff] %v760
  %1722 = vst [vmem:[#allocation2 + $0x3e8] sm:$0xff] %v762
  %1723 = vst [vmem:[#allocation2 + $0x3f0] sm:$0xff] %v1273
  %1724 = vst [vmem:[#allocation2 + $0x3f8] sm:$0xff] %v1275
  %1725 = vst [vmem:[#allocation2 + $0x400] sm:$0xff] %v766
  %1726 = vst [vmem:[#allocation2 + $0x408] sm:$0xff] %v768
  %1727 = vst [vmem:[#allocation2 + $0x410] sm:$0xff] %v1279
  %1728 = vst [vmem:[#allocation2 + $0x418] sm:$0xff] %v1281
  %1729 = vst [vmem:[#allocation2 + $0x420] sm:$0xff] %v770
  %1730 = vst [vmem:[#allocation2 + $0x428] sm:$0xff] %v772
  %1731 = vst [vmem:[#allocation2 + $0x430] sm:$0xff] %v1283
  %1732 = vst [vmem:[#allocation2 + $0x438] sm:$0xff] %v1285
  %1733 = vst [vmem:[#allocation2 + $0x440] sm:$0xff] %v776
  %1734 = vst [vmem:[#allocation2 + $0x448] sm:$0xff] %v778
  %1735 = vst [vmem:[#allocation2 + $0x450] sm:$0xff] %v1289
  %1736 = vst [vmem:[#allocation2 + $0x458] sm:$0xff] %v1291
  %1737 = vst [vmem:[#allocation2 + $0x460] sm:$0xff] %v780
  %1738 = vst [vmem:[#allocation2 + $0x468] sm:$0xff] %v782
  %1739 = vst [vmem:[#allocation2 + $0x470] sm:$0xff] %v1293
  %1740 = vst [vmem:[#allocation2 + $0x478] sm:$0xff] %v1295
  %1741 = vst [vmem:[#allocation2 + $0x480] sm:$0xff] %v786
  %1742 = vst [vmem:[#allocation2 + $0x488] sm:$0xff] %v788
  %1743 = vst [vmem:[#allocation2 + $0x490] sm:$0xff] %v1299
  %1744 = vst [vmem:[#allocation2 + $0x498] sm:$0xff] %v1301
  %1745 = vst [vmem:[#allocation2 + $0x4a0] sm:$0xff] %v790
  %1746 = vst [vmem:[#allocation2 + $0x4a8] sm:$0xff] %v792
  %1747 = vst [vmem:[#allocation2 + $0x4b0] sm:$0xff] %v1303
  %1748 = vst [vmem:[#allocation2 + $0x4b8] sm:$0xff] %v1305
  %1749 = vst [vmem:[#allocation2 + $0x4c0] sm:$0xff] %v796
  %1750 = vst [vmem:[#allocation2 + $0x4c8] sm:$0xff] %v798
  %1751 = vst [vmem:[#allocation2 + $0x4d0] sm:$0xff] %v1309
  %1752 = vst [vmem:[#allocation2 + $0x4d8] sm:$0xff] %v1311
  %1753 = vst [vmem:[#allocation2 + $0x4e0] sm:$0xff] %v800
  %1754 = vst [vmem:[#allocation2 + $0x4e8] sm:$0xff] %v802
  %1755 = vst [vmem:[#allocation2 + $0x4f0] sm:$0xff] %v1313
  %1756 = vst [vmem:[#allocation2 + $0x4f8] sm:$0xff] %v1315
  %1757 = vst [vmem:[#allocation2 + $0x500] sm:$0xff] %v806
  %1758 = vst [vmem:[#allocation2 + $0x508] sm:$0xff] %v808
  %1759 = vst [vmem:[#allocation2 + $0x510] sm:$0xff] %v1319
  %1760 = vst [vmem:[#allocation2 + $0x518] sm:$0xff] %v1321
  %1761 = vst [vmem:[#allocation2 + $0x520] sm:$0xff] %v810
  %1762 = vst [vmem:[#allocation2 + $0x528] sm:$0xff] %v812
  %1763 = vst [vmem:[#allocation2 + $0x530] sm:$0xff] %v1323
  %1764 = vst [vmem:[#allocation2 + $0x538] sm:$0xff] %v1325
  %1765 = vst [vmem:[#allocation2 + $0x540] sm:$0xff] %v816
  %1766 = vst [vmem:[#allocation2 + $0x548] sm:$0xff] %v818
  %1767 = vst [vmem:[#allocation2 + $0x550] sm:$0xff] %v1329
  %1768 = vst [vmem:[#allocation2 + $0x558] sm:$0xff] %v1331
  %1769 = vst [vmem:[#allocation2 + $0x560] sm:$0xff] %v820
  %1770 = vst [vmem:[#allocation2 + $0x568] sm:$0xff] %v822
  %1771 = vst [vmem:[#allocation2 + $0x570] sm:$0xff] %v1333
  %1772 = vst [vmem:[#allocation2 + $0x578] sm:$0xff] %v1335
  %1773 = vst [vmem:[#allocation2 + $0x580] sm:$0xff] %v826
  %1774 = vst [vmem:[#allocation2 + $0x588] sm:$0xff] %v828
  %1775 = vst [vmem:[#allocation2 + $0x590] sm:$0xff] %v1339
  %1776 = vst [vmem:[#allocation2 + $0x598] sm:$0xff] %v1341
  %1777 = vst [vmem:[#allocation2 + $0x5a0] sm:$0xff] %v830
  %1778 = vst [vmem:[#allocation2 + $0x5a8] sm:$0xff] %v832
  %1779 = vst [vmem:[#allocation2 + $0x5b0] sm:$0xff] %v1343
  %1780 = vst [vmem:[#allocation2 + $0x5b8] sm:$0xff] %v1345
  %1781 = vst [vmem:[#allocation2 + $0x5c0] sm:$0xff] %v836
  %1782 = vst [vmem:[#allocation2 + $0x5c8] sm:$0xff] %v838
  %1783 = vst [vmem:[#allocation2 + $0x5d0] sm:$0xff] %v1349
  %1784 = vst [vmem:[#allocation2 + $0x5d8] sm:$0xff] %v1351
  %1785 = vst [vmem:[#allocation2 + $0x5e0] sm:$0xff] %v840
  %1786 = vst [vmem:[#allocation2 + $0x5e8] sm:$0xff] %v842
  %1787 = vst [vmem:[#allocation2 + $0x5f0] sm:$0xff] %v1353
  %1788 = vst [vmem:[#allocation2 + $0x5f8] sm:$0xff] %v1355
  %1789 = vst [vmem:[#allocation2 + $0x600] sm:$0xff] %v846
  %1790 = vst [vmem:[#allocation2 + $0x608] sm:$0xff] %v848
  %1791 = vst [vmem:[#allocation2 + $0x610] sm:$0xff] %v1359
  %1792 = vst [vmem:[#allocation2 + $0x618] sm:$0xff] %v1361
  %1793 = vst [vmem:[#allocation2 + $0x620] sm:$0xff] %v850
  %1794 = vst [vmem:[#allocation2 + $0x628] sm:$0xff] %v852
  %1795 = vst [vmem:[#allocation2 + $0x630] sm:$0xff] %v1363
  %1796 = vst [vmem:[#allocation2 + $0x638] sm:$0xff] %v1365
  %1797 = vst [vmem:[#allocation2 + $0x640] sm:$0xff] %v856
  %1798 = vst [vmem:[#allocation2 + $0x648] sm:$0xff] %v858
  %1799 = vst [vmem:[#allocation2 + $0x650] sm:$0xff] %v1369
  %1800 = vst [vmem:[#allocation2 + $0x658] sm:$0xff] %v1371
  %1801 = vst [vmem:[#allocation2 + $0x660] sm:$0xff] %v860
  %1802 = vst [vmem:[#allocation2 + $0x668] sm:$0xff] %v862
  %1803 = vst [vmem:[#allocation2 + $0x670] sm:$0xff] %v1373
  %1804 = vst [vmem:[#allocation2 + $0x678] sm:$0xff] %v1375
  %1805 = vst [vmem:[#allocation2 + $0x680] sm:$0xff] %v866
  %1806 = vst [vmem:[#allocation2 + $0x688] sm:$0xff] %v868
  %1807 = vst [vmem:[#allocation2 + $0x690] sm:$0xff] %v1379
  %1808 = vst [vmem:[#allocation2 + $0x698] sm:$0xff] %v1381
  %1809 = vst [vmem:[#allocation2 + $0x6a0] sm:$0xff] %v870
  %1810 = vst [vmem:[#allocation2 + $0x6a8] sm:$0xff] %v872
  %1811 = vst [vmem:[#allocation2 + $0x6b0] sm:$0xff] %v1383
  %1812 = vst [vmem:[#allocation2 + $0x6b8] sm:$0xff] %v1385
  %1813 = vst [vmem:[#allocation2 + $0x6c0] sm:$0xff] %v876
  %1814 = vst [vmem:[#allocation2 + $0x6c8] sm:$0xff] %v878
  %1815 = vst [vmem:[#allocation2 + $0x6d0] sm:$0xff] %v1389
  %1816 = vst [vmem:[#allocation2 + $0x6d8] sm:$0xff] %v1391
  %1817 = vst [vmem:[#allocation2 + $0x6e0] sm:$0xff] %v880
  %1818 = vst [vmem:[#allocation2 + $0x6e8] sm:$0xff] %v882
  %1819 = vst [vmem:[#allocation2 + $0x6f0] sm:$0xff] %v1393
  %1820 = vst [vmem:[#allocation2 + $0x6f8] sm:$0xff] %v1395
  %1821 = vst [vmem:[#allocation2 + $0x700] sm:$0xff] %v886
  %1822 = vst [vmem:[#allocation2 + $0x708] sm:$0xff] %v888
  %1823 = vst [vmem:[#allocation2 + $0x710] sm:$0xff] %v1399
  %1824 = vst [vmem:[#allocation2 + $0x718] sm:$0xff] %v1401
  %1825 = vst [vmem:[#allocation2 + $0x720] sm:$0xff] %v890
  %1826 = vst [vmem:[#allocation2 + $0x728] sm:$0xff] %v892
  %1827 = vst [vmem:[#allocation2 + $0x730] sm:$0xff] %v1403
  %1828 = vst [vmem:[#allocation2 + $0x738] sm:$0xff] %v1405
  %1829 = vst [vmem:[#allocation2 + $0x740] sm:$0xff] %v896
  %1830 = vst [vmem:[#allocation2 + $0x748] sm:$0xff] %v898
  %1831 = vst [vmem:[#allocation2 + $0x750] sm:$0xff] %v1409
  %1832 = vst [vmem:[#allocation2 + $0x758] sm:$0xff] %v1411
  %1833 = vst [vmem:[#allocation2 + $0x760] sm:$0xff] %v900
  %1834 = vst [vmem:[#allocation2 + $0x768] sm:$0xff] %v902
  %1835 = vst [vmem:[#allocation2 + $0x770] sm:$0xff] %v1413
  %1836 = vst [vmem:[#allocation2 + $0x778] sm:$0xff] %v1415
  %1837 = vst [vmem:[#allocation2 + $0x780] sm:$0xff] %v906
  %1838 = vst [vmem:[#allocation2 + $0x788] sm:$0xff] %v908
  %1839 = vst [vmem:[#allocation2 + $0x790] sm:$0xff] %v1419
  %1840 = vst [vmem:[#allocation2 + $0x798] sm:$0xff] %v1421
  %1841 = vst [vmem:[#allocation2 + $0x7a0] sm:$0xff] %v910
  %1842 = vst [vmem:[#allocation2 + $0x7a8] sm:$0xff] %v912
  %1843 = vst [vmem:[#allocation2 + $0x7b0] sm:$0xff] %v1423
  %1844 = vst [vmem:[#allocation2 + $0x7b8] sm:$0xff] %v1425
  %1845 = vst [vmem:[#allocation2 + $0x7c0] sm:$0xff] %v916
  %1846 = vst [vmem:[#allocation2 + $0x7c8] sm:$0xff] %v918
  %1847 = vst [vmem:[#allocation2 + $0x7d0] sm:$0xff] %v1429
  %1848 = vst [vmem:[#allocation2 + $0x7d8] sm:$0xff] %v1431
  %1849 = vst [vmem:[#allocation2 + $0x7e0] sm:$0xff] %v920
  %1850 = vst [vmem:[#allocation2 + $0x7e8] sm:$0xff] %v922
  %1851 = vst [vmem:[#allocation2 + $0x7f0] sm:$0xff] %v1433
  %1852 = vst [vmem:[#allocation2 + $0x7f8] sm:$0xff] %v1435
  %1853 = vst [vmem:[#allocation2 + $0x800] sm:$0xff] %v926
  %1854 = vst [vmem:[#allocation2 + $0x808] sm:$0xff] %v928
  %1855 = vst [vmem:[#allocation2 + $0x810] sm:$0xff] %v1439
  %1856 = vst [vmem:[#allocation2 + $0x818] sm:$0xff] %v1441
  %1857 = vst [vmem:[#allocation2 + $0x820] sm:$0xff] %v930
  %1858 = vst [vmem:[#allocation2 + $0x828] sm:$0xff] %v932
  %1859 = vst [vmem:[#allocation2 + $0x830] sm:$0xff] %v1443
  %1860 = vst [vmem:[#allocation2 + $0x838] sm:$0xff] %v1445
  %1861 = vst [vmem:[#allocation2 + $0x840] sm:$0xff] %v936
  %1862 = vst [vmem:[#allocation2 + $0x848] sm:$0xff] %v938
  %1863 = vst [vmem:[#allocation2 + $0x850] sm:$0xff] %v1449
  %1864 = vst [vmem:[#allocation2 + $0x858] sm:$0xff] %v1451
  %1865 = vst [vmem:[#allocation2 + $0x860] sm:$0xff] %v940
  %1866 = vst [vmem:[#allocation2 + $0x868] sm:$0xff] %v942
  %1867 = vst [vmem:[#allocation2 + $0x870] sm:$0xff] %v1453
  %1868 = vst [vmem:[#allocation2 + $0x878] sm:$0xff] %v1455
  %1869 = vst [vmem:[#allocation2 + $0x880] sm:$0xff] %v946
  %1870 = vst [vmem:[#allocation2 + $0x888] sm:$0xff] %v948
  %1871 = vst [vmem:[#allocation2 + $0x890] sm:$0xff] %v1459
  %1872 = vst [vmem:[#allocation2 + $0x898] sm:$0xff] %v1461
  %1873 = vst [vmem:[#allocation2 + $0x8a0] sm:$0xff] %v950
  %1874 = vst [vmem:[#allocation2 + $0x8a8] sm:$0xff] %v952
  %1875 = vst [vmem:[#allocation2 + $0x8b0] sm:$0xff] %v1463
  %1876 = vst [vmem:[#allocation2 + $0x8b8] sm:$0xff] %v1465
  %1877 = vst [vmem:[#allocation2 + $0x8c0] sm:$0xff] %v956
  %1878 = vst [vmem:[#allocation2 + $0x8c8] sm:$0xff] %v958
  %1879 = vst [vmem:[#allocation2 + $0x8d0] sm:$0xff] %v1469
  %1880 = vst [vmem:[#allocation2 + $0x8d8] sm:$0xff] %v1471
  %1881 = vst [vmem:[#allocation2 + $0x8e0] sm:$0xff] %v960
  %1882 = vst [vmem:[#allocation2 + $0x8e8] sm:$0xff] %v962
  %1883 = vst [vmem:[#allocation2 + $0x8f0] sm:$0xff] %v1473
  %1884 = vst [vmem:[#allocation2 + $0x8f8] sm:$0xff] %v1475
  %1885 = vst [vmem:[#allocation2 + $0x900] sm:$0xff] %v966
  %1886 = vst [vmem:[#allocation2 + $0x908] sm:$0xff] %v968
  %1887 = vst [vmem:[#allocation2 + $0x910] sm:$0xff] %v1479
  %1888 = vst [vmem:[#allocation2 + $0x918] sm:$0xff] %v1481
  %1889 = vst [vmem:[#allocation2 + $0x920] sm:$0xff] %v970
  %1890 = vst [vmem:[#allocation2 + $0x928] sm:$0xff] %v972
  %1891 = vst [vmem:[#allocation2 + $0x930] sm:$0xff] %v1483
  %1892 = vst [vmem:[#allocation2 + $0x938] sm:$0xff] %v1485
  %1893 = vst [vmem:[#allocation2 + $0x940] sm:$0xff] %v976
  %1894 = vst [vmem:[#allocation2 + $0x948] sm:$0xff] %v978
  %1895 = vst [vmem:[#allocation2 + $0x950] sm:$0xff] %v1489
  %1896 = vst [vmem:[#allocation2 + $0x958] sm:$0xff] %v1491
  %1897 = vst [vmem:[#allocation2 + $0x960] sm:$0xff] %v980
  %1898 = vst [vmem:[#allocation2 + $0x968] sm:$0xff] %v982
  %1899 = vst [vmem:[#allocation2 + $0x970] sm:$0xff] %v1493
  %1900 = vst [vmem:[#allocation2 + $0x978] sm:$0xff] %v1495
  %1901 = vst [vmem:[#allocation2 + $0x980] sm:$0xff] %v986
  %1902 = vst [vmem:[#allocation2 + $0x988] sm:$0xff] %v988
  %1903 = vst [vmem:[#allocation2 + $0x990] sm:$0xff] %v1499
  %1904 = vst [vmem:[#allocation2 + $0x998] sm:$0xff] %v1501
  %1905 = vst [vmem:[#allocation2 + $0x9a0] sm:$0xff] %v990
  %1906 = vst [vmem:[#allocation2 + $0x9a8] sm:$0xff] %v992
  %1907 = vst [vmem:[#allocation2 + $0x9b0] sm:$0xff] %v1503
  %1908 = vst [vmem:[#allocation2 + $0x9b8] sm:$0xff] %v1505
  %1909 = vst [vmem:[#allocation2 + $0x9c0] sm:$0xff] %v996
  %1910 = vst [vmem:[#allocation2 + $0x9c8] sm:$0xff] %v998
  %1911 = vst [vmem:[#allocation2 + $0x9d0] sm:$0xff] %v1509
  %1912 = vst [vmem:[#allocation2 + $0x9d8] sm:$0xff] %v1511
  %1913 = vst [vmem:[#allocation2 + $0x9e0] sm:$0xff] %v1000
  %1914 = vst [vmem:[#allocation2 + $0x9e8] sm:$0xff] %v1002
  %1915 = vst [vmem:[#allocation2 + $0x9f0] sm:$0xff] %v1513
  %1916 = vst [vmem:[#allocation2 + $0x9f8] sm:$0xff] %v1515
  %1917 = vst [vmem:[#allocation2 + $0xa00] sm:$0xff] %v1006
  %1918 = vst [vmem:[#allocation2 + $0xa08] sm:$0xff] %v1008
  %1919 = vst [vmem:[#allocation2 + $0xa10] sm:$0xff] %v1519
  %1920 = vst [vmem:[#allocation2 + $0xa18] sm:$0xff] %v1521
  %1921 = vst [vmem:[#allocation2 + $0xa20] sm:$0xff] %v1010
  %1922 = vst [vmem:[#allocation2 + $0xa28] sm:$0xff] %v1012
  %1923 = vst [vmem:[#allocation2 + $0xa30] sm:$0xff] %v1523
  %1924 = vst [vmem:[#allocation2 + $0xa38] sm:$0xff] %v1525
  %1925 = vst [vmem:[#allocation2 + $0xa40] sm:$0xff] %v1016
  %1926 = vst [vmem:[#allocation2 + $0xa48] sm:$0xff] %v1018
  %1927 = vst [vmem:[#allocation2 + $0xa50] sm:$0xff] %v1529
  %1928 = vst [vmem:[#allocation2 + $0xa58] sm:$0xff] %v1531
  %1929 = vst [vmem:[#allocation2 + $0xa60] sm:$0xff] %v1020
  %1930 = vst [vmem:[#allocation2 + $0xa68] sm:$0xff] %v1022
  %1931 = vst [vmem:[#allocation2 + $0xa70] sm:$0xff] %v1533
  %1932 = vst [vmem:[#allocation2 + $0xa78] sm:$0xff] %v1535
  %1933 = vst [vmem:[#allocation2 + $0xa80] sm:$0xff] %v1026
  %1934 = vst [vmem:[#allocation2 + $0xa88] sm:$0xff] %v1028
  %1935 = vst [vmem:[#allocation2 + $0xa90] sm:$0xff] %v1539
  %1936 = vst [vmem:[#allocation2 + $0xa98] sm:$0xff] %v1541
  %1937 = vst [vmem:[#allocation2 + $0xaa0] sm:$0xff] %v1030
  %1938 = vst [vmem:[#allocation2 + $0xaa8] sm:$0xff] %v1032
  %1939 = vst [vmem:[#allocation2 + $0xab0] sm:$0xff] %v1543
  %1940 = vst [vmem:[#allocation2 + $0xab8] sm:$0xff] %v1545
  %1941 = vst [vmem:[#allocation2 + $0xac0] sm:$0xff] %v1036
  %1942 = vst [vmem:[#allocation2 + $0xac8] sm:$0xff] %v1038
  %1943 = vst [vmem:[#allocation2 + $0xad0] sm:$0xff] %v1549
  %1944 = vst [vmem:[#allocation2 + $0xad8] sm:$0xff] %v1551
  %1945 = vst [vmem:[#allocation2 + $0xae0] sm:$0xff] %v1040
  %1946 = vst [vmem:[#allocation2 + $0xae8] sm:$0xff] %v1042
  %1947 = vst [vmem:[#allocation2 + $0xaf0] sm:$0xff] %v1553
  %1948 = vst [vmem:[#allocation2 + $0xaf8] sm:$0xff] %v1555
  %1949 = vst [vmem:[#allocation2 + $0xb00] sm:$0xff] %v1046
  %1950 = vst [vmem:[#allocation2 + $0xb08] sm:$0xff] %v1048
  %1951 = vst [vmem:[#allocation2 + $0xb10] sm:$0xff] %v1559
  %1952 = vst [vmem:[#allocation2 + $0xb18] sm:$0xff] %v1561
  %1953 = vst [vmem:[#allocation2 + $0xb20] sm:$0xff] %v1050
  %1954 = vst [vmem:[#allocation2 + $0xb28] sm:$0xff] %v1052
  %1955 = vst [vmem:[#allocation2 + $0xb30] sm:$0xff] %v1563
  %1956 = vst [vmem:[#allocation2 + $0xb38] sm:$0xff] %v1565
  %1957 = vst [vmem:[#allocation2 + $0xb40] sm:$0xff] %v1056
  %1958 = vst [vmem:[#allocation2 + $0xb48] sm:$0xff] %v1058
  %1959 = vst [vmem:[#allocation2 + $0xb50] sm:$0xff] %v1569
  %1960 = vst [vmem:[#allocation2 + $0xb58] sm:$0xff] %v1571
  %1961 = vst [vmem:[#allocation2 + $0xb60] sm:$0xff] %v1060
  %1962 = vst [vmem:[#allocation2 + $0xb68] sm:$0xff] %v1062
  %1963 = vst [vmem:[#allocation2 + $0xb70] sm:$0xff] %v1573
  %1964 = vst [vmem:[#allocation2 + $0xb78] sm:$0xff] %v1575
  %1965 = vst [vmem:[#allocation2 + $0xb80] sm:$0xff] %v1066
  %1966 = vst [vmem:[#allocation2 + $0xb88] sm:$0xff] %v1068
  %1967 = vst [vmem:[#allocation2 + $0xb90] sm:$0xff] %v1579
  %1968 = vst [vmem:[#allocation2 + $0xb98] sm:$0xff] %v1581
  %1969 = vst [vmem:[#allocation2 + $0xba0] sm:$0xff] %v1070
  %1970 = vst [vmem:[#allocation2 + $0xba8] sm:$0xff] %v1072
  %1971 = vst [vmem:[#allocation2 + $0xbb0] sm:$0xff] %v1583
  %1972 = vst [vmem:[#allocation2 + $0xbb8] sm:$0xff] %v1585
  %1973 = vst [vmem:[#allocation2 + $0xbc0] sm:$0xff] %v1076
  %1974 = vst [vmem:[#allocation2 + $0xbc8] sm:$0xff] %v1078
  %1975 = vst [vmem:[#allocation2 + $0xbd0] sm:$0xff] %v1589
  %1976 = vst [vmem:[#allocation2 + $0xbd8] sm:$0xff] %v1591
  %1977 = vst [vmem:[#allocation2 + $0xbe0] sm:$0xff] %v1080
  %1978 = vst [vmem:[#allocation2 + $0xbe8] sm:$0xff] %v1082
  %1979 = vst [vmem:[#allocation2 + $0xbf0] sm:$0xff] %v1593
  %1980 = vst [vmem:[#allocation2 + $0xbf8] sm:$0xff] %v1595
  loop: start=0, step=1, limit=6
  $region38: #{lstm_baseline_forward.1} parent=0 // loop_pre_header
    _
  $region39: #{lstm_baseline_forward.1} parent=0 // loop_header
    %s1982 = sphi 0, %s1986
    %p1983 = scmp.ge.s32.totalorder %s1982, 6
    %v1987 = vphi 0.0, %v3013
    %v1988 = vphi 0.0, %v3014
    %v1989 = vphi 0.0, %v3015
    %v1990 = vphi 0.0, %v3016
    %v1991 = vphi 0.0, %v3017
    %v1992 = vphi 0.0, %v3018
    %v1993 = vphi 0.0, %v3019
    %v1994 = vphi 0.0, %v3020
    %v1995 = vphi 0.0, %v2997
    %v1996 = vphi 0.0, %v2998
    %v1997 = vphi 0.0, %v2999
    %v1998 = vphi 0.0, %v3000
    %v1999 = vphi 0.0, %v3001
    %v2000 = vphi 0.0, %v3002
    %v2001 = vphi 0.0, %v3003
    %v2002 = vphi 0.0, %v3004
  $region40: #{lstm_baseline_forward.1} parent=0 // loop_header_branch
    %1985 = sbr.rel (%p1983) target = $region44
  $region41: #{lstm_baseline_forward.1} parent=0 // loop_body
    %s2003 = smul.u32 %s1982, 128
    %s2004 = sshra.s32 %s2003, 3
    %s2005 = sand.u32 %s2003, 7
    %s2006 = smul.u32 %s2004, 4
    %s2007 = smul.addr %s2006, 8
    %s2008 = scalar_lea.vmem [#allocation2], %s2007
    %v2009 = vld [vmem:[%s2008] sm:$0xff]
    %v2010 = vld [vmem:[%s2008 + $0x8] sm:$0xff]
    %v2011 = vld [vmem:[%s2008 + $0x10] sm:$0xff]
    %v2012 = vld [vmem:[%s2008 + $0x18] sm:$0xff]
    %v2013 = vld [vmem:[%s2008 + $0x20] sm:$0xff]
    %v2014 = vld [vmem:[%s2008 + $0x28] sm:$0xff]
    %v2015 = vld [vmem:[%s2008 + $0x30] sm:$0xff]
    %v2016 = vld [vmem:[%s2008 + $0x38] sm:$0xff]
    %v2017 = vld [vmem:[%s2008 + $0x40] sm:$0xff]
    %v2018 = vld [vmem:[%s2008 + $0x48] sm:$0xff]
    %v2019 = vld [vmem:[%s2008 + $0x50] sm:$0xff]
    %v2020 = vld [vmem:[%s2008 + $0x58] sm:$0xff]
    %v2021 = vld [vmem:[%s2008 + $0x60] sm:$0xff]
    %v2022 = vld [vmem:[%s2008 + $0x68] sm:$0xff]
    %v2023 = vld [vmem:[%s2008 + $0x70] sm:$0xff]
    %v2024 = vld [vmem:[%s2008 + $0x78] sm:$0xff]
    %v2025 = vld [vmem:[%s2008 + $0x80] sm:$0xff]
    %v2026 = vld [vmem:[%s2008 + $0x88] sm:$0xff]
    %v2027 = vld [vmem:[%s2008 + $0x90] sm:$0xff]
    %v2028 = vld [vmem:[%s2008 + $0x98] sm:$0xff]
    %v2029 = vld [vmem:[%s2008 + $0xa0] sm:$0xff]
    %v2030 = vld [vmem:[%s2008 + $0xa8] sm:$0xff]
    %v2031 = vld [vmem:[%s2008 + $0xb0] sm:$0xff]
    %v2032 = vld [vmem:[%s2008 + $0xb8] sm:$0xff]
    %v2033 = vld [vmem:[%s2008 + $0xc0] sm:$0xff]
    %v2034 = vld [vmem:[%s2008 + $0xc8] sm:$0xff]
    %v2035 = vld [vmem:[%s2008 + $0xd0] sm:$0xff]
    %v2036 = vld [vmem:[%s2008 + $0xd8] sm:$0xff]
    %v2037 = vld [vmem:[%s2008 + $0xe0] sm:$0xff]
    %v2038 = vld [vmem:[%s2008 + $0xe8] sm:$0xff]
    %v2039 = vld [vmem:[%s2008 + $0xf0] sm:$0xff]
    %v2040 = vld [vmem:[%s2008 + $0xf8] sm:$0xff]
    %v2041 = vpack.c.bf16 %v1988, %v1987
    %v2042 = vpack.c.bf16 %v1990, %v1989
    %v2043 = vpack.c.bf16 %v1992, %v1991
    %v2044 = vpack.c.bf16 %v1994, %v1993
    %v2045 = vld [vmem:[%s2] sm:$0xff]
    %v2046 = vld [vmem:[%s2 + $0x8] sm:$0xff]
    %v2047 = vld [vmem:[%s2 + $0x10] sm:$0xff]
    %v2048 = vld [vmem:[%s2 + $0x18] sm:$0xff]
    %v2049 = vld [vmem:[%s2 + $0x20] sm:$0xff]
    %v2050 = vld [vmem:[%s2 + $0x28] sm:$0xff]
    %v2051 = vld [vmem:[%s2 + $0x30] sm:$0xff]
    %v2052 = vld [vmem:[%s2 + $0x38] sm:$0xff]
    %v2053 = vld [vmem:[%s2 + $0x40] sm:$0xff]
    %v2054 = vld [vmem:[%s2 + $0x48] sm:$0xff]
    %v2055 = vld [vmem:[%s2 + $0x50] sm:$0xff]
    %v2056 = vld [vmem:[%s2 + $0x58] sm:$0xff]
    %v2057 = vld [vmem:[%s2 + $0x60] sm:$0xff]
    %v2058 = vld [vmem:[%s2 + $0x68] sm:$0xff]
    %v2059 = vld [vmem:[%s2 + $0x70] sm:$0xff]
    %v2060 = vld [vmem:[%s2 + $0x78] sm:$0xff]
    %v2061 = vld [vmem:[%s2 + $0x80] sm:$0xff]
    %v2062 = vld [vmem:[%s2 + $0x88] sm:$0xff]
    %v2063 = vld [vmem:[%s2 + $0x90] sm:$0xff]
    %v2064 = vld [vmem:[%s2 + $0x98] sm:$0xff]
    %v2065 = vld [vmem:[%s2 + $0xa0] sm:$0xff]
    %v2066 = vld [vmem:[%s2 + $0xa8] sm:$0xff]
    %v2067 = vld [vmem:[%s2 + $0xb0] sm:$0xff]
    %v2068 = vld [vmem:[%s2 + $0xb8] sm:$0xff]
    %v2069 = vld [vmem:[%s2 + $0xc0] sm:$0xff]
    %v2070 = vld [vmem:[%s2 + $0xc8] sm:$0xff]
    %v2071 = vld [vmem:[%s2 + $0xd0] sm:$0xff]
    %v2072 = vld [vmem:[%s2 + $0xd8] sm:$0xff]
    %v2073 = vld [vmem:[%s2 + $0xe0] sm:$0xff]
    %v2074 = vld [vmem:[%s2 + $0xe8] sm:$0xff]
    %v2075 = vld [vmem:[%s2 + $0xf0] sm:$0xff]
    %v2076 = vld [vmem:[%s2 + $0xf8] sm:$0xff]
    %v2109 = vunpack.c.l.b16 %v2045
    %v2110 = vunpack.c.h.b16 %v2045
    %v2111 = vunpack.c.l.b16 %v2046
    %v2112 = vunpack.c.h.b16 %v2046
    %v2113 = vunpack.c.l.b16 %v2047
    %v2114 = vunpack.c.h.b16 %v2047
    %v2115 = vunpack.c.l.b16 %v2048
    %v2116 = vunpack.c.h.b16 %v2048
    %v2117 = vunpack.c.l.b16 %v2049
    %v2118 = vunpack.c.h.b16 %v2049
    %v2119 = vunpack.c.l.b16 %v2050
    %v2120 = vunpack.c.h.b16 %v2050
    %v2121 = vunpack.c.l.b16 %v2051
    %v2122 = vunpack.c.h.b16 %v2051
    %v2123 = vunpack.c.l.b16 %v2052
    %v2124 = vunpack.c.h.b16 %v2052
    %v2125 = vunpack.c.l.b16 %v2053
    %v2126 = vunpack.c.h.b16 %v2053
    %v2127 = vunpack.c.l.b16 %v2054
    %v2128 = vunpack.c.h.b16 %v2054
    %v2129 = vunpack.c.l.b16 %v2055
    %v2130 = vunpack.c.h.b16 %v2055
    %v2131 = vunpack.c.l.b16 %v2056
    %v2132 = vunpack.c.h.b16 %v2056
    %v2133 = vunpack.c.l.b16 %v2057
    %v2134 = vunpack.c.h.b16 %v2057
    %v2135 = vunpack.c.l.b16 %v2058
    %v2136 = vunpack.c.h.b16 %v2058
    %v2137 = vunpack.c.l.b16 %v2059
    %v2138 = vunpack.c.h.b16 %v2059
    %v2139 = vunpack.c.l.b16 %v2060
    %v2140 = vunpack.c.h.b16 %v2060
    %v2141 = vunpack.c.l.b16 %v2061
    %v2142 = vunpack.c.h.b16 %v2061
    %v2143 = vunpack.c.l.b16 %v2062
    %v2144 = vunpack.c.h.b16 %v2062
    %v2145 = vunpack.c.l.b16 %v2063
    %v2146 = vunpack.c.h.b16 %v2063
    %v2147 = vunpack.c.l.b16 %v2064
    %v2148 = vunpack.c.h.b16 %v2064
    %v2149 = vunpack.c.l.b16 %v2065
    %v2150 = vunpack.c.h.b16 %v2065
    %v2151 = vunpack.c.l.b16 %v2066
    %v2152 = vunpack.c.h.b16 %v2066
    %v2153 = vunpack.c.l.b16 %v2067
    %v2154 = vunpack.c.h.b16 %v2067
    %v2155 = vunpack.c.l.b16 %v2068
    %v2156 = vunpack.c.h.b16 %v2068
    %v2157 = vunpack.c.l.b16 %v2069
    %v2158 = vunpack.c.h.b16 %v2069
    %v2159 = vunpack.c.l.b16 %v2070
    %v2160 = vunpack.c.h.b16 %v2070
    %v2161 = vunpack.c.l.b16 %v2071
    %v2162 = vunpack.c.h.b16 %v2071
    %v2163 = vunpack.c.l.b16 %v2072
    %v2164 = vunpack.c.h.b16 %v2072
    %v2165 = vunpack.c.l.b16 %v2073
    %v2166 = vunpack.c.h.b16 %v2073
    %v2167 = vunpack.c.l.b16 %v2074
    %v2168 = vunpack.c.h.b16 %v2074
    %v2169 = vunpack.c.l.b16 %v2075
    %v2170 = vunpack.c.h.b16 %v2075
    %v2171 = vunpack.c.l.b16 %v2076
    %v2172 = vunpack.c.h.b16 %v2076
    %v2173 = vpack.c.b16 %v2113, %v2109
    %v2174 = vpack.c.b16 %v2114, %v2110
    %v2175 = vpack.c.b16 %v2115, %v2111
    %v2176 = vpack.c.b16 %v2116, %v2112
    %v2177 = vpack.c.b16 %v2121, %v2117
    %v2178 = vpack.c.b16 %v2122, %v2118
    %v2179 = vpack.c.b16 %v2123, %v2119
    %v2180 = vpack.c.b16 %v2124, %v2120
    %v2181 = vpack.c.b16 %v2129, %v2125
    %v2182 = vpack.c.b16 %v2130, %v2126
    %v2183 = vpack.c.b16 %v2131, %v2127
    %v2184 = vpack.c.b16 %v2132, %v2128
    %v2185 = vpack.c.b16 %v2137, %v2133
    %v2186 = vpack.c.b16 %v2138, %v2134
    %v2187 = vpack.c.b16 %v2139, %v2135
    %v2188 = vpack.c.b16 %v2140, %v2136
    %v2189 = vpack.c.b16 %v2145, %v2141
    %v2190 = vpack.c.b16 %v2146, %v2142
    %v2191 = vpack.c.b16 %v2147, %v2143
    %v2192 = vpack.c.b16 %v2148, %v2144
    %v2193 = vpack.c.b16 %v2153, %v2149
    %v2194 = vpack.c.b16 %v2154, %v2150
    %v2195 = vpack.c.b16 %v2155, %v2151
    %v2196 = vpack.c.b16 %v2156, %v2152
    %v2197 = vpack.c.b16 %v2161, %v2157
    %v2198 = vpack.c.b16 %v2162, %v2158
    %v2199 = vpack.c.b16 %v2163, %v2159
    %v2200 = vpack.c.b16 %v2164, %v2160
    %v2201 = vpack.c.b16 %v2169, %v2165
    %v2202 = vpack.c.b16 %v2170, %v2166
    %v2203 = vpack.c.b16 %v2171, %v2167
    %v2204 = vpack.c.b16 %v2172, %v2168
    %2237 = vmatprep.subr.bf16.mxu0 %v2174
    %2238 = vmatpush1.bf16.msra.mxu0 %v2173
    %2239 = vmatprep.subr.bf16.mxu0 %v2178
    %2240 = vmatpush1.bf16.msra.mxu0 %v2177
    %2241 = vmatprep.subr.bf16.mxu0 %v2182
    %2242 = vmatpush1.bf16.msra.mxu0 %v2181
    %2243 = vmatprep.subr.bf16.mxu0 %v2186
    %2244 = vmatpush1.bf16.msra.mxu0 %v2185
    %2245 = vmatprep.subr.bf16.mxu0 %v2190
    %2246 = vmatpush1.bf16.msra.mxu0 %v2189
    %2247 = vmatprep.subr.bf16.mxu0 %v2194
    %2248 = vmatpush1.bf16.msra.mxu0 %v2193
    %2249 = vmatprep.subr.bf16.mxu0 %v2198
    %2250 = vmatpush1.bf16.msra.mxu0 %v2197
    %2251 = vmatprep.subr.bf16.mxu0 %v2202
    %2252 = vmatpush1.bf16.msra.mxu0 %v2201
    %2253 = vmatprep.subr.bf16.mxu0 0
    %2254 = vmatpush1.bf16.msra.mxu0 0
    %2255 = vmatprep.subr.bf16.mxu0 0
    %2256 = vmatpush1.bf16.msra.mxu0 0
    %2257 = vmatprep.subr.bf16.mxu0 0
    %2258 = vmatpush1.bf16.msra.mxu0 0
    %2259 = vmatprep.subr.bf16.mxu0 0
    %2260 = vmatpush1.bf16.msra.mxu0 0
    %2261 = vmatprep.subr.bf16.mxu0 0
    %2262 = vmatpush1.bf16.msra.mxu0 0
    %2263 = vmatprep.subr.bf16.mxu0 0
    %2264 = vmatpush1.bf16.msra.mxu0 0
    %2265 = vmatprep.subr.bf16.mxu0 0
    %2266 = vmatpush1.bf16.msra.mxu0 0
    %2267 = vmatprep.subr.bf16.mxu0 0
    %2268 = vmatpush1.bf16.msra.mxu0 0
    %2269 = vmatprep.mubr.bf16.mxu0 0
    %2270 = vmatmul.mubr.bf16.gmra.mrb[0].mxu0 %v2041
    %v2271 = vpop.f32.mrb[0].mxu0
    %v2272 = vadd.f32 0.0, %v2271
    %v2273 = vpop.f32.mrb[0].mxu0
    %v2274 = vadd.f32 0.0, %v2273
    %v2275 = vpop.f32.mrb[0].mxu0
    %v2276 = vadd.f32 0.0, %v2275
    %v2277 = vpop.f32.mrb[0].mxu0
    %v2278 = vadd.f32 0.0, %v2277
    %2279 = vmatprep.mubr.bf16.mxu0 0
    %2280 = vmatmul.mubr.bf16.gmra.mrb[0].mxu0 %v2042
    %v2281 = vpop.f32.mrb[0].mxu0
    %v2282 = vadd.f32 0.0, %v2281
    %v2283 = vpop.f32.mrb[0].mxu0
    %v2284 = vadd.f32 0.0, %v2283
    %v2285 = vpop.f32.mrb[0].mxu0
    %v2286 = vadd.f32 0.0, %v2285
    %v2287 = vpop.f32.mrb[0].mxu0
    %v2288 = vadd.f32 0.0, %v2287
    %2289 = vmatprep.mubr.bf16.mxu0 0
    %2290 = vmatmul.mubr.bf16.gmra.mrb[0].mxu0 %v2043
    %v2291 = vpop.f32.mrb[0].mxu0
    %v2292 = vadd.f32 0.0, %v2291
    %v2293 = vpop.f32.mrb[0].mxu0
    %v2294 = vadd.f32 0.0, %v2293
    %v2295 = vpop.f32.mrb[0].mxu0
    %v2296 = vadd.f32 0.0, %v2295
    %v2297 = vpop.f32.mrb[0].mxu0
    %v2298 = vadd.f32 0.0, %v2297
    %2299 = vmatprep.mubr.bf16.mxu0 0
    %2300 = vmatmul.mubr.bf16.gmra.mrb[0].mxu0 %v2044
    %v2301 = vpop.f32.mrb[0].mxu0
    %v2302 = vadd.f32 0.0, %v2301
    %v2303 = vpop.f32.mrb[0].mxu0
    %v2304 = vadd.f32 0.0, %v2303
    %v2305 = vpop.f32.mrb[0].mxu0
    %v2306 = vadd.f32 0.0, %v2305
    %v2307 = vpop.f32.mrb[0].mxu0
    %v2308 = vadd.f32 0.0, %v2307
    %2309 = vdwg.mxu0
    %2310 = vmatprep.subr.bf16.mxu0 %v2176
    %2311 = vmatpush1.bf16.msra.mxu0 %v2175
    %2312 = vmatprep.subr.bf16.mxu0 %v2180
    %2313 = vmatpush1.bf16.msra.mxu0 %v2179
    %2314 = vmatprep.subr.bf16.mxu0 %v2184
    %2315 = vmatpush1.bf16.msra.mxu0 %v2183
    %2316 = vmatprep.subr.bf16.mxu0 %v2188
    %2317 = vmatpush1.bf16.msra.mxu0 %v2187
    %2318 = vmatprep.subr.bf16.mxu0 %v2192
    %2319 = vmatpush1.bf16.msra.mxu0 %v2191
    %2320 = vmatprep.subr.bf16.mxu0 %v2196
    %2321 = vmatpush1.bf16.msra.mxu0 %v2195
    %2322 = vmatprep.subr.bf16.mxu0 %v2200
    %2323 = vmatpush1.bf16.msra.mxu0 %v2199
    %2324 = vmatprep.subr.bf16.mxu0 %v2204
    %2325 = vmatpush1.bf16.msra.mxu0 %v2203
    %2326 = vmatprep.subr.bf16.mxu0 0
    %2327 = vmatpush1.bf16.msra.mxu0 0
    %2328 = vmatprep.subr.bf16.mxu0 0
    %2329 = vmatpush1.bf16.msra.mxu0 0
    %2330 = vmatprep.subr.bf16.mxu0 0
    %2331 = vmatpush1.bf16.msra.mxu0 0
    %2332 = vmatprep.subr.bf16.mxu0 0
    %2333 = vmatpush1.bf16.msra.mxu0 0
    %2334 = vmatprep.subr.bf16.mxu0 0
    %2335 = vmatpush1.bf16.msra.mxu0 0
    %2336 = vmatprep.subr.bf16.mxu0 0
    %2337 = vmatpush1.bf16.msra.mxu0 0
    %2338 = vmatprep.subr.bf16.mxu0 0
    %2339 = vmatpush1.bf16.msra.mxu0 0
    %2340 = vmatprep.subr.bf16.mxu0 0
    %2341 = vmatpush1.bf16.msra.mxu0 0
    %2342 = vmatprep.mubr.bf16.mxu0 0
    %2343 = vmatmul.mubr.bf16.gmra.mrb[0].mxu0 %v2041
    %v2344 = vpop.f32.mrb[0].mxu0
    %v2345 = vadd.f32 0.0, %v2344
    %v2346 = vpop.f32.mrb[0].mxu0
    %v2347 = vadd.f32 0.0, %v2346
    %v2348 = vpop.f32.mrb[0].mxu0
    %v2349 = vadd.f32 0.0, %v2348
    %v2350 = vpop.f32.mrb[0].mxu0
    %v2351 = vadd.f32 0.0, %v2350
    %2352 = vmatprep.mubr.bf16.mxu0 0
    %2353 = vmatmul.mubr.bf16.gmra.mrb[0].mxu0 %v2042
    %v2354 = vpop.f32.mrb[0].mxu0
    %v2355 = vadd.f32 0.0, %v2354
    %v2356 = vpop.f32.mrb[0].mxu0
    %v2357 = vadd.f32 0.0, %v2356
    %v2358 = vpop.f32.mrb[0].mxu0
    %v2359 = vadd.f32 0.0, %v2358
    %v2360 = vpop.f32.mrb[0].mxu0
    %v2361 = vadd.f32 0.0, %v2360
    %2362 = vmatprep.mubr.bf16.mxu0 0
    %2363 = vmatmul.mubr.bf16.gmra.mrb[0].mxu0 %v2043
    %v2364 = vpop.f32.mrb[0].mxu0
    %v2365 = vadd.f32 0.0, %v2364
    %v2366 = vpop.f32.mrb[0].mxu0
    %v2367 = vadd.f32 0.0, %v2366
    %v2368 = vpop.f32.mrb[0].mxu0
    %v2369 = vadd.f32 0.0, %v2368
    %v2370 = vpop.f32.mrb[0].mxu0
    %v2371 = vadd.f32 0.0, %v2370
    %2372 = vmatprep.mubr.bf16.mxu0 0
    %2373 = vmatmul.mubr.bf16.gmra.mrb[0].mxu0 %v2044
    %v2374 = vpop.f32.mrb[0].mxu0
    %v2375 = vadd.f32 0.0, %v2374
    %v2376 = vpop.f32.mrb[0].mxu0
    %v2377 = vadd.f32 0.0, %v2376
    %v2378 = vpop.f32.mrb[0].mxu0
    %v2379 = vadd.f32 0.0, %v2378
    %v2380 = vpop.f32.mrb[0].mxu0
    %v2381 = vadd.f32 0.0, %v2380
    %2382 = vdwg.mxu0
    %v2383 = vadd.f32 %v2009, %v2272
    %v2384 = vadd.f32 %v2010, %v2274
    %v2385 = vadd.f32 %v2011, %v2345
    %v2386 = vadd.f32 %v2012, %v2347
    %v2387 = vadd.f32 %v2013, %v2276
    %v2388 = vadd.f32 %v2014, %v2278
    %v2389 = vadd.f32 %v2015, %v2349
    %v2390 = vadd.f32 %v2016, %v2351
    %v2391 = vadd.f32 %v2017, %v2282
    %v2392 = vadd.f32 %v2018, %v2284
    %v2393 = vadd.f32 %v2019, %v2355
    %v2394 = vadd.f32 %v2020, %v2357
    %v2395 = vadd.f32 %v2021, %v2286
    %v2396 = vadd.f32 %v2022, %v2288
    %v2397 = vadd.f32 %v2023, %v2359
    %v2398 = vadd.f32 %v2024, %v2361
    %v2399 = vadd.f32 %v2025, %v2292
    %v2400 = vadd.f32 %v2026, %v2294
    %v2401 = vadd.f32 %v2027, %v2365
    %v2402 = vadd.f32 %v2028, %v2367
    %v2403 = vadd.f32 %v2029, %v2296
    %v2404 = vadd.f32 %v2030, %v2298
    %v2405 = vadd.f32 %v2031, %v2369
    %v2406 = vadd.f32 %v2032, %v2371
    %v2407 = vadd.f32 %v2033, %v2302
    %v2408 = vadd.f32 %v2034, %v2304
    %v2409 = vadd.f32 %v2035, %v2375
    %v2410 = vadd.f32 %v2036, %v2377
    %v2411 = vadd.f32 %v2037, %v2306
    %v2412 = vadd.f32 %v2038, %v2308
    %v2413 = vadd.f32 %v2039, %v2379
    %v2414 = vadd.f32 %v2040, %v2381
    %v2415 = vxor.u32 %v2383, 2147483648
    %v2416 = vxor.u32 %v2387, 2147483648
    %v2417 = vxor.u32 %v2391, 2147483648
    %v2418 = vxor.u32 %v2395, 2147483648
    %v2419 = vxor.u32 %v2399, 2147483648
    %v2420 = vxor.u32 %v2403, 2147483648
    %v2421 = vxor.u32 %v2407, 2147483648
    %v2422 = vxor.u32 %v2411, 2147483648
    %v2423 = vmul.f32 %v2415, 1.442695
    %v2424 = vpow.pop %v2423
    %v2425 = vmul.f32 %v2416, 1.442695
    %v2426 = vpow.pop %v2425
    %v2427 = vmul.f32 %v2417, 1.442695
    %v2428 = vpow.pop %v2427
    %v2429 = vmul.f32 %v2418, 1.442695
    %v2430 = vpow.pop %v2429
    %v2431 = vmul.f32 %v2419, 1.442695
    %v2432 = vpow.pop %v2431
    %v2433 = vmul.f32 %v2420, 1.442695
    %v2434 = vpow.pop %v2433
    %v2435 = vmul.f32 %v2421, 1.442695
    %v2436 = vpow.pop %v2435
    %v2437 = vmul.f32 %v2422, 1.442695
    %v2438 = vpow.pop %v2437
    %v2439 = vadd.f32 %v2424, 1.0
    %v2440 = vadd.f32 %v2426, 1.0
    %v2441 = vadd.f32 %v2428, 1.0
    %v2442 = vadd.f32 %v2430, 1.0
    %v2443 = vadd.f32 %v2432, 1.0
    %v2444 = vadd.f32 %v2434, 1.0
    %v2445 = vadd.f32 %v2436, 1.0
    %v2446 = vadd.f32 %v2438, 1.0
    %v2447 = vrcp.pop %v2439
    %v2448 = vmul.f32 1.0, %v2447
    %v2449 = vrcp.pop %v2440
    %v2450 = vmul.f32 1.0, %v2449
    %v2451 = vrcp.pop %v2441
    %v2452 = vmul.f32 1.0, %v2451
    %v2453 = vrcp.pop %v2442
    %v2454 = vmul.f32 1.0, %v2453
    %v2455 = vrcp.pop %v2443
    %v2456 = vmul.f32 1.0, %v2455
    %v2457 = vrcp.pop %v2444
    %v2458 = vmul.f32 1.0, %v2457
    %v2459 = vrcp.pop %v2445
    %v2460 = vmul.f32 1.0, %v2459
    %v2461 = vrcp.pop %v2446
    %v2462 = vmul.f32 1.0, %v2461
    %v2463 = vxor.u32 %v2384, 2147483648
    %v2464 = vxor.u32 %v2388, 2147483648
    %v2465 = vxor.u32 %v2392, 2147483648
    %v2466 = vxor.u32 %v2396, 2147483648
    %v2467 = vxor.u32 %v2400, 2147483648
    %v2468 = vxor.u32 %v2404, 2147483648
    %v2469 = vxor.u32 %v2408, 2147483648
    %v2470 = vxor.u32 %v2412, 2147483648
    %v2471 = vmul.f32 %v2463, 1.442695
    %v2472 = vpow.pop %v2471
    %v2473 = vmul.f32 %v2464, 1.442695
    %v2474 = vpow.pop %v2473
    %v2475 = vmul.f32 %v2465, 1.442695
    %v2476 = vpow.pop %v2475
    %v2477 = vmul.f32 %v2466, 1.442695
    %v2478 = vpow.pop %v2477
    %v2479 = vmul.f32 %v2467, 1.442695
    %v2480 = vpow.pop %v2479
    %v2481 = vmul.f32 %v2468, 1.442695
    %v2482 = vpow.pop %v2481
    %v2483 = vmul.f32 %v2469, 1.442695
    %v2484 = vpow.pop %v2483
    %v2485 = vmul.f32 %v2470, 1.442695
    %v2486 = vpow.pop %v2485
    %v2487 = vadd.f32 %v2472, 1.0
    %v2488 = vadd.f32 %v2474, 1.0
    %v2489 = vadd.f32 %v2476, 1.0
    %v2490 = vadd.f32 %v2478, 1.0
    %v2491 = vadd.f32 %v2480, 1.0
    %v2492 = vadd.f32 %v2482, 1.0
    %v2493 = vadd.f32 %v2484, 1.0
    %v2494 = vadd.f32 %v2486, 1.0
    %v2495 = vrcp.pop %v2487
    %v2496 = vmul.f32 1.0, %v2495
    %v2497 = vrcp.pop %v2488
    %v2498 = vmul.f32 1.0, %v2497
    %v2499 = vrcp.pop %v2489
    %v2500 = vmul.f32 1.0, %v2499
    %v2501 = vrcp.pop %v2490
    %v2502 = vmul.f32 1.0, %v2501
    %v2503 = vrcp.pop %v2491
    %v2504 = vmul.f32 1.0, %v2503
    %v2505 = vrcp.pop %v2492
    %v2506 = vmul.f32 1.0, %v2505
    %v2507 = vrcp.pop %v2493
    %v2508 = vmul.f32 1.0, %v2507
    %v2509 = vrcp.pop %v2494
    %v2510 = vmul.f32 1.0, %v2509
    %v2511 = vtanh.pop %v2385
    %v2512 = vtanh.pop %v2389
    %v2513 = vtanh.pop %v2393
    %v2514 = vtanh.pop %v2397
    %v2515 = vtanh.pop %v2401
    %v2516 = vtanh.pop %v2405
    %v2517 = vtanh.pop %v2409
    %v2518 = vtanh.pop %v2413
    %v2519 = vxor.u32 %v2386, 2147483648
    %v2520 = vxor.u32 %v2390, 2147483648
    %v2521 = vxor.u32 %v2394, 2147483648
    %v2522 = vxor.u32 %v2398, 2147483648
    %v2523 = vxor.u32 %v2402, 2147483648
    %v2524 = vxor.u32 %v2406, 2147483648
    %v2525 = vxor.u32 %v2410, 2147483648
    %v2526 = vxor.u32 %v2414, 2147483648
    %v2527 = vmul.f32 %v2519, 1.442695
    %v2528 = vpow.pop %v2527
    %v2529 = vmul.f32 %v2520, 1.442695
    %v2530 = vpow.pop %v2529
    %v2531 = vmul.f32 %v2521, 1.442695
    %v2532 = vpow.pop %v2531
    %v2533 = vmul.f32 %v2522, 1.442695
    %v2534 = vpow.pop %v2533
    %v2535 = vmul.f32 %v2523, 1.442695
    %v2536 = vpow.pop %v2535
    %v2537 = vmul.f32 %v2524, 1.442695
    %v2538 = vpow.pop %v2537
    %v2539 = vmul.f32 %v2525, 1.442695
    %v2540 = vpow.pop %v2539
    %v2541 = vmul.f32 %v2526, 1.442695
    %v2542 = vpow.pop %v2541
    %v2543 = vadd.f32 %v2528, 1.0
    %v2544 = vadd.f32 %v2530, 1.0
    %v2545 = vadd.f32 %v2532, 1.0
    %v2546 = vadd.f32 %v2534, 1.0
    %v2547 = vadd.f32 %v2536, 1.0
    %v2548 = vadd.f32 %v2538, 1.0
    %v2549 = vadd.f32 %v2540, 1.0
    %v2550 = vadd.f32 %v2542, 1.0
    %v2551 = vrcp.pop %v2543
    %v2552 = vmul.f32 1.0, %v2551
    %v2553 = vrcp.pop %v2544
    %v2554 = vmul.f32 1.0, %v2553
    %v2555 = vrcp.pop %v2545
    %v2556 = vmul.f32 1.0, %v2555
    %v2557 = vrcp.pop %v2546
    %v2558 = vmul.f32 1.0, %v2557
    %v2559 = vrcp.pop %v2547
    %v2560 = vmul.f32 1.0, %v2559
    %v2561 = vrcp.pop %v2548
    %v2562 = vmul.f32 1.0, %v2561
    %v2563 = vrcp.pop %v2549
    %v2564 = vmul.f32 1.0, %v2563
    %v2565 = vrcp.pop %v2550
    %v2566 = vmul.f32 1.0, %v2565
    %v2567 = vmul.f32 %v2496, %v1995
    %v2568 = vmul.f32 %v2498, %v1996
    %v2569 = vmul.f32 %v2500, %v1997
    %v2570 = vmul.f32 %v2502, %v1998
    %v2571 = vmul.f32 %v2504, %v1999
    %v2572 = vmul.f32 %v2506, %v2000
    %v2573 = vmul.f32 %v2508, %v2001
    %v2574 = vmul.f32 %v2510, %v2002
    %v2575 = vmul.f32 %v2448, %v2511
    %v2576 = vmul.f32 %v2450, %v2512
    %v2577 = vmul.f32 %v2452, %v2513
    %v2578 = vmul.f32 %v2454, %v2514
    %v2579 = vmul.f32 %v2456, %v2515
    %v2580 = vmul.f32 %v2458, %v2516
    %v2581 = vmul.f32 %v2460, %v2517
    %v2582 = vmul.f32 %v2462, %v2518
    %v2583 = vadd.f32 %v2567, %v2575
    %v2584 = vadd.f32 %v2568, %v2576
    %v2585 = vadd.f32 %v2569, %v2577
    %v2586 = vadd.f32 %v2570, %v2578
    %v2587 = vadd.f32 %v2571, %v2579
    %v2588 = vadd.f32 %v2572, %v2580
    %v2589 = vadd.f32 %v2573, %v2581
    %v2590 = vadd.f32 %v2574, %v2582
    %v2591 = vtanh.pop %v2583
    %v2592 = vtanh.pop %v2584
    %v2593 = vtanh.pop %v2585
    %v2594 = vtanh.pop %v2586
    %v2595 = vtanh.pop %v2587
    %v2596 = vtanh.pop %v2588
    %v2597 = vtanh.pop %v2589
    %v2598 = vtanh.pop %v2590
    %v2599 = vmul.f32 %v2552, %v2591
    %v2600 = vmul.f32 %v2554, %v2592
    %v2601 = vmul.f32 %v2556, %v2593
    %v2602 = vmul.f32 %v2558, %v2594
    %v2603 = vmul.f32 %v2560, %v2595
    %v2604 = vmul.f32 %v2562, %v2596
    %v2605 = vmul.f32 %v2564, %v2597
    %v2606 = vmul.f32 %v2566, %v2598
    %s2607 = smul.u32 %s1982, 2
    %s2608 = sadd.s32 %s2607, 1
    %s2609 = smul.u32 %s2608, 64
    %s2610 = sshra.s32 %s2609, 3
    %s2611 = sand.u32 %s2609, 7
    %s2612 = smul.u32 %s2610, 4
    %s2613 = smul.addr %s2612, 8
    %s2614 = scalar_lea.vmem [#allocation2], %s2613
    %v2615 = vld [vmem:[%s2614] sm:$0xff]
    %v2616 = vld [vmem:[%s2614 + $0x8] sm:$0xff]
    %v2617 = vld [vmem:[%s2614 + $0x10] sm:$0xff]
    %v2618 = vld [vmem:[%s2614 + $0x18] sm:$0xff]
    %v2619 = vld [vmem:[%s2614 + $0x20] sm:$0xff]
    %v2620 = vld [vmem:[%s2614 + $0x28] sm:$0xff]
    %v2621 = vld [vmem:[%s2614 + $0x30] sm:$0xff]
    %v2622 = vld [vmem:[%s2614 + $0x38] sm:$0xff]
    %v2623 = vld [vmem:[%s2614 + $0x40] sm:$0xff]
    %v2624 = vld [vmem:[%s2614 + $0x48] sm:$0xff]
    %v2625 = vld [vmem:[%s2614 + $0x50] sm:$0xff]
    %v2626 = vld [vmem:[%s2614 + $0x58] sm:$0xff]
    %v2627 = vld [vmem:[%s2614 + $0x60] sm:$0xff]
    %v2628 = vld [vmem:[%s2614 + $0x68] sm:$0xff]
    %v2629 = vld [vmem:[%s2614 + $0x70] sm:$0xff]
    %v2630 = vld [vmem:[%s2614 + $0x78] sm:$0xff]
    %v2631 = vld [vmem:[%s2614 + $0x80] sm:$0xff]
    %v2632 = vld [vmem:[%s2614 + $0x88] sm:$0xff]
    %v2633 = vld [vmem:[%s2614 + $0x90] sm:$0xff]
    %v2634 = vld [vmem:[%s2614 + $0x98] sm:$0xff]
    %v2635 = vld [vmem:[%s2614 + $0xa0] sm:$0xff]
    %v2636 = vld [vmem:[%s2614 + $0xa8] sm:$0xff]
    %v2637 = vld [vmem:[%s2614 + $0xb0] sm:$0xff]
    %v2638 = vld [vmem:[%s2614 + $0xb8] sm:$0xff]
    %v2639 = vld [vmem:[%s2614 + $0xc0] sm:$0xff]
    %v2640 = vld [vmem:[%s2614 + $0xc8] sm:$0xff]
    %v2641 = vld [vmem:[%s2614 + $0xd0] sm:$0xff]
    %v2642 = vld [vmem:[%s2614 + $0xd8] sm:$0xff]
    %v2643 = vld [vmem:[%s2614 + $0xe0] sm:$0xff]
    %v2644 = vld [vmem:[%s2614 + $0xe8] sm:$0xff]
    %v2645 = vld [vmem:[%s2614 + $0xf0] sm:$0xff]
    %v2646 = vld [vmem:[%s2614 + $0xf8] sm:$0xff]
    %v2647 = vpack.c.bf16 %v2600, %v2599
    %v2648 = vpack.c.bf16 %v2602, %v2601
    %v2649 = vpack.c.bf16 %v2604, %v2603
    %v2650 = vpack.c.bf16 %v2606, %v2605
    %2651 = vmatprep.subr.bf16.mxu0 %v2174
    %2652 = vmatpush1.bf16.msra.mxu0 %v2173
    %2653 = vmatprep.subr.bf16.mxu0 %v2178
    %2654 = vmatpush1.bf16.msra.mxu0 %v2177
    %2655 = vmatprep.subr.bf16.mxu0 %v2182
    %2656 = vmatpush1.bf16.msra.mxu0 %v2181
    %2657 = vmatprep.subr.bf16.mxu0 %v2186
    %2658 = vmatpush1.bf16.msra.mxu0 %v2185
    %2659 = vmatprep.subr.bf16.mxu0 %v2190
    %2660 = vmatpush1.bf16.msra.mxu0 %v2189
    %2661 = vmatprep.subr.bf16.mxu0 %v2194
    %2662 = vmatpush1.bf16.msra.mxu0 %v2193
    %2663 = vmatprep.subr.bf16.mxu0 %v2198
    %2664 = vmatpush1.bf16.msra.mxu0 %v2197
    %2665 = vmatprep.subr.bf16.mxu0 %v2202
    %2666 = vmatpush1.bf16.msra.mxu0 %v2201
    %2667 = vmatprep.subr.bf16.mxu0 0
    %2668 = vmatpush1.bf16.msra.mxu0 0
    %2669 = vmatprep.subr.bf16.mxu0 0
    %2670 = vmatpush1.bf16.msra.mxu0 0
    %2671 = vmatprep.subr.bf16.mxu0 0
    %2672 = vmatpush1.bf16.msra.mxu0 0
    %2673 = vmatprep.subr.bf16.mxu0 0
    %2674 = vmatpush1.bf16.msra.mxu0 0
    %2675 = vmatprep.subr.bf16.mxu0 0
    %2676 = vmatpush1.bf16.msra.mxu0 0
    %2677 = vmatprep.subr.bf16.mxu0 0
    %2678 = vmatpush1.bf16.msra.mxu0 0
    %2679 = vmatprep.subr.bf16.mxu0 0
    %2680 = vmatpush1.bf16.msra.mxu0 0
    %2681 = vmatprep.subr.bf16.mxu0 0
    %2682 = vmatpush1.bf16.msra.mxu0 0
    %2683 = vmatprep.mubr.bf16.mxu0 0
    %2684 = vmatmul.mubr.bf16.gmra.mrb[0].mxu0 %v2647
    %v2685 = vpop.f32.mrb[0].mxu0
    %v2686 = vadd.f32 0.0, %v2685
    %v2687 = vpop.f32.mrb[0].mxu0
    %v2688 = vadd.f32 0.0, %v2687
    %v2689 = vpop.f32.mrb[0].mxu0
    %v2690 = vadd.f32 0.0, %v2689
    %v2691 = vpop.f32.mrb[0].mxu0
    %v2692 = vadd.f32 0.0, %v2691
    %2693 = vmatprep.mubr.bf16.mxu0 0
    %2694 = vmatmul.mubr.bf16.gmra.mrb[0].mxu0 %v2648
    %v2695 = vpop.f32.mrb[0].mxu0
    %v2696 = vadd.f32 0.0, %v2695
    %v2697 = vpop.f32.mrb[0].mxu0
    %v2698 = vadd.f32 0.0, %v2697
    %v2699 = vpop.f32.mrb[0].mxu0
    %v2700 = vadd.f32 0.0, %v2699
    %v2701 = vpop.f32.mrb[0].mxu0
    %v2702 = vadd.f32 0.0, %v2701
    %2703 = vmatprep.mubr.bf16.mxu0 0
    %2704 = vmatmul.mubr.bf16.gmra.mrb[0].mxu0 %v2649
    %v2705 = vpop.f32.mrb[0].mxu0
    %v2706 = vadd.f32 0.0, %v2705
    %v2707 = vpop.f32.mrb[0].mxu0
    %v2708 = vadd.f32 0.0, %v2707
    %v2709 = vpop.f32.mrb[0].mxu0
    %v2710 = vadd.f32 0.0, %v2709
    %v2711 = vpop.f32.mrb[0].mxu0
    %v2712 = vadd.f32 0.0, %v2711
    %2713 = vmatprep.mubr.bf16.mxu0 0
    %2714 = vmatmul.mubr.bf16.gmra.mrb[0].mxu0 %v2650
    %v2715 = vpop.f32.mrb[0].mxu0
    %v2716 = vadd.f32 0.0, %v2715
    %v2717 = vpop.f32.mrb[0].mxu0
    %v2718 = vadd.f32 0.0, %v2717
    %v2719 = vpop.f32.mrb[0].mxu0
    %v2720 = vadd.f32 0.0, %v2719
    %v2721 = vpop.f32.mrb[0].mxu0
    %v2722 = vadd.f32 0.0, %v2721
    %2723 = vdwg.mxu0
    %2724 = vmatprep.subr.bf16.mxu0 %v2176
    %2725 = vmatpush1.bf16.msra.mxu0 %v2175
    %2726 = vmatprep.subr.bf16.mxu0 %v2180
    %2727 = vmatpush1.bf16.msra.mxu0 %v2179
    %2728 = vmatprep.subr.bf16.mxu0 %v2184
    %2729 = vmatpush1.bf16.msra.mxu0 %v2183
    %2730 = vmatprep.subr.bf16.mxu0 %v2188
    %2731 = vmatpush1.bf16.msra.mxu0 %v2187
    %2732 = vmatprep.subr.bf16.mxu0 %v2192
    %2733 = vmatpush1.bf16.msra.mxu0 %v2191
    %2734 = vmatprep.subr.bf16.mxu0 %v2196
    %2735 = vmatpush1.bf16.msra.mxu0 %v2195
    %2736 = vmatprep.subr.bf16.mxu0 %v2200
    %2737 = vmatpush1.bf16.msra.mxu0 %v2199
    %2738 = vmatprep.subr.bf16.mxu0 %v2204
    %2739 = vmatpush1.bf16.msra.mxu0 %v2203
    %2740 = vmatprep.subr.bf16.mxu0 0
    %2741 = vmatpush1.bf16.msra.mxu0 0
    %2742 = vmatprep.subr.bf16.mxu0 0
    %2743 = vmatpush1.bf16.msra.mxu0 0
    %2744 = vmatprep.subr.bf16.mxu0 0
    %2745 = vmatpush1.bf16.msra.mxu0 0
    %2746 = vmatprep.subr.bf16.mxu0 0
    %2747 = vmatpush1.bf16.msra.mxu0 0
    %2748 = vmatprep.subr.bf16.mxu0 0
    %2749 = vmatpush1.bf16.msra.mxu0 0
    %2750 = vmatprep.subr.bf16.mxu0 0
    %2751 = vmatpush1.bf16.msra.mxu0 0
    %2752 = vmatprep.subr.bf16.mxu0 0
    %2753 = vmatpush1.bf16.msra.mxu0 0
    %2754 = vmatprep.subr.bf16.mxu0 0
    %2755 = vmatpush1.bf16.msra.mxu0 0
    %2756 = vmatprep.mubr.bf16.mxu0 0
    %2757 = vmatmul.mubr.bf16.gmra.mrb[0].mxu0 %v2647
    %v2758 = vpop.f32.mrb[0].mxu0
    %v2759 = vadd.f32 0.0, %v2758
    %v2760 = vpop.f32.mrb[0].mxu0
    %v2761 = vadd.f32 0.0, %v2760
    %v2762 = vpop.f32.mrb[0].mxu0
    %v2763 = vadd.f32 0.0, %v2762
    %v2764 = vpop.f32.mrb[0].mxu0
    %v2765 = vadd.f32 0.0, %v2764
    %2766 = vmatprep.mubr.bf16.mxu0 0
    %2767 = vmatmul.mubr.bf16.gmra.mrb[0].mxu0 %v2648
    %v2768 = vpop.f32.mrb[0].mxu0
    %v2769 = vadd.f32 0.0, %v2768
    %v2770 = vpop.f32.mrb[0].mxu0
    %v2771 = vadd.f32 0.0, %v2770
    %v2772 = vpop.f32.mrb[0].mxu0
    %v2773 = vadd.f32 0.0, %v2772
    %v2774 = vpop.f32.mrb[0].mxu0
    %v2775 = vadd.f32 0.0, %v2774
    %2776 = vmatprep.mubr.bf16.mxu0 0
    %2777 = vmatmul.mubr.bf16.gmra.mrb[0].mxu0 %v2649
    %v2778 = vpop.f32.mrb[0].mxu0
    %v2779 = vadd.f32 0.0, %v2778
    %v2780 = vpop.f32.mrb[0].mxu0
    %v2781 = vadd.f32 0.0, %v2780
    %v2782 = vpop.f32.mrb[0].mxu0
    %v2783 = vadd.f32 0.0, %v2782
    %v2784 = vpop.f32.mrb[0].mxu0
    %v2785 = vadd.f32 0.0, %v2784
    %2786 = vmatprep.mubr.bf16.mxu0 0
    %2787 = vmatmul.mubr.bf16.gmra.mrb[0].mxu0 %v2650
    %v2788 = vpop.f32.mrb[0].mxu0
    %v2789 = vadd.f32 0.0, %v2788
    %v2790 = vpop.f32.mrb[0].mxu0
    %v2791 = vadd.f32 0.0, %v2790
    %v2792 = vpop.f32.mrb[0].mxu0
    %v2793 = vadd.f32 0.0, %v2792
    %v2794 = vpop.f32.mrb[0].mxu0
    %v2795 = vadd.f32 0.0, %v2794
    %2796 = vdwg.mxu0
    %v2797 = vadd.f32 %v2615, %v2686
    %v2798 = vadd.f32 %v2616, %v2688
    %v2799 = vadd.f32 %v2617, %v2759
    %v2800 = vadd.f32 %v2618, %v2761
    %v2801 = vadd.f32 %v2619, %v2690
    %v2802 = vadd.f32 %v2620, %v2692
    %v2803 = vadd.f32 %v2621, %v2763
    %v2804 = vadd.f32 %v2622, %v2765
    %v2805 = vadd.f32 %v2623, %v2696
    %v2806 = vadd.f32 %v2624, %v2698
    %v2807 = vadd.f32 %v2625, %v2769
    %v2808 = vadd.f32 %v2626, %v2771
    %v2809 = vadd.f32 %v2627, %v2700
    %v2810 = vadd.f32 %v2628, %v2702
    %v2811 = vadd.f32 %v2629, %v2773
    %v2812 = vadd.f32 %v2630, %v2775
    %v2813 = vadd.f32 %v2631, %v2706
    %v2814 = vadd.f32 %v2632, %v2708
    %v2815 = vadd.f32 %v2633, %v2779
    %v2816 = vadd.f32 %v2634, %v2781
    %v2817 = vadd.f32 %v2635, %v2710
    %v2818 = vadd.f32 %v2636, %v2712
    %v2819 = vadd.f32 %v2637, %v2783
    %v2820 = vadd.f32 %v2638, %v2785
    %v2821 = vadd.f32 %v2639, %v2716
    %v2822 = vadd.f32 %v2640, %v2718
    %v2823 = vadd.f32 %v2641, %v2789
    %v2824 = vadd.f32 %v2642, %v2791
    %v2825 = vadd.f32 %v2643, %v2720
    %v2826 = vadd.f32 %v2644, %v2722
    %v2827 = vadd.f32 %v2645, %v2793
    %v2828 = vadd.f32 %v2646, %v2795
    %v2829 = vxor.u32 %v2797, 2147483648
    %v2830 = vxor.u32 %v2801, 2147483648
    %v2831 = vxor.u32 %v2805, 2147483648
    %v2832 = vxor.u32 %v2809, 2147483648
    %v2833 = vxor.u32 %v2813, 2147483648
    %v2834 = vxor.u32 %v2817, 2147483648
    %v2835 = vxor.u32 %v2821, 2147483648
    %v2836 = vxor.u32 %v2825, 2147483648
    %v2837 = vmul.f32 %v2829, 1.442695
    %v2838 = vpow.pop %v2837
    %v2839 = vmul.f32 %v2830, 1.442695
    %v2840 = vpow.pop %v2839
    %v2841 = vmul.f32 %v2831, 1.442695
    %v2842 = vpow.pop %v2841
    %v2843 = vmul.f32 %v2832, 1.442695
    %v2844 = vpow.pop %v2843
    %v2845 = vmul.f32 %v2833, 1.442695
    %v2846 = vpow.pop %v2845
    %v2847 = vmul.f32 %v2834, 1.442695
    %v2848 = vpow.pop %v2847
    %v2849 = vmul.f32 %v2835, 1.442695
    %v2850 = vpow.pop %v2849
    %v2851 = vmul.f32 %v2836, 1.442695
    %v2852 = vpow.pop %v2851
    %v2853 = vadd.f32 %v2838, 1.0
    %v2854 = vadd.f32 %v2840, 1.0
    %v2855 = vadd.f32 %v2842, 1.0
    %v2856 = vadd.f32 %v2844, 1.0
    %v2857 = vadd.f32 %v2846, 1.0
    %v2858 = vadd.f32 %v2848, 1.0
    %v2859 = vadd.f32 %v2850, 1.0
    %v2860 = vadd.f32 %v2852, 1.0
    %v2861 = vrcp.pop %v2853
    %v2862 = vmul.f32 1.0, %v2861
    %v2863 = vrcp.pop %v2854
    %v2864 = vmul.f32 1.0, %v2863
    %v2865 = vrcp.pop %v2855
    %v2866 = vmul.f32 1.0, %v2865
    %v2867 = vrcp.pop %v2856
    %v2868 = vmul.f32 1.0, %v2867
    %v2869 = vrcp.pop %v2857
    %v2870 = vmul.f32 1.0, %v2869
    %v2871 = vrcp.pop %v2858
    %v2872 = vmul.f32 1.0, %v2871
    %v2873 = vrcp.pop %v2859
    %v2874 = vmul.f32 1.0, %v2873
    %v2875 = vrcp.pop %v2860
    %v2876 = vmul.f32 1.0, %v2875
    %v2877 = vxor.u32 %v2798, 2147483648
    %v2878 = vxor.u32 %v2802, 2147483648
    %v2879 = vxor.u32 %v2806, 2147483648
    %v2880 = vxor.u32 %v2810, 2147483648
    %v2881 = vxor.u32 %v2814, 2147483648
    %v2882 = vxor.u32 %v2818, 2147483648
    %v2883 = vxor.u32 %v2822, 2147483648
    %v2884 = vxor.u32 %v2826, 2147483648
    %v2885 = vmul.f32 %v2877, 1.442695
    %v2886 = vpow.pop %v2885
    %v2887 = vmul.f32 %v2878, 1.442695
    %v2888 = vpow.pop %v2887
    %v2889 = vmul.f32 %v2879, 1.442695
    %v2890 = vpow.pop %v2889
    %v2891 = vmul.f32 %v2880, 1.442695
    %v2892 = vpow.pop %v2891
    %v2893 = vmul.f32 %v2881, 1.442695
    %v2894 = vpow.pop %v2893
    %v2895 = vmul.f32 %v2882, 1.442695
    %v2896 = vpow.pop %v2895
    %v2897 = vmul.f32 %v2883, 1.442695
    %v2898 = vpow.pop %v2897
    %v2899 = vmul.f32 %v2884, 1.442695
    %v2900 = vpow.pop %v2899
    %v2901 = vadd.f32 %v2886, 1.0
    %v2902 = vadd.f32 %v2888, 1.0
    %v2903 = vadd.f32 %v2890, 1.0
    %v2904 = vadd.f32 %v2892, 1.0
    %v2905 = vadd.f32 %v2894, 1.0
    %v2906 = vadd.f32 %v2896, 1.0
    %v2907 = vadd.f32 %v2898, 1.0
    %v2908 = vadd.f32 %v2900, 1.0
    %v2909 = vrcp.pop %v2901
    %v2910 = vmul.f32 1.0, %v2909
    %v2911 = vrcp.pop %v2902
    %v2912 = vmul.f32 1.0, %v2911
    %v2913 = vrcp.pop %v2903
    %v2914 = vmul.f32 1.0, %v2913
    %v2915 = vrcp.pop %v2904
    %v2916 = vmul.f32 1.0, %v2915
    %v2917 = vrcp.pop %v2905
    %v2918 = vmul.f32 1.0, %v2917
    %v2919 = vrcp.pop %v2906
    %v2920 = vmul.f32 1.0, %v2919
    %v2921 = vrcp.pop %v2907
    %v2922 = vmul.f32 1.0, %v2921
    %v2923 = vrcp.pop %v2908
    %v2924 = vmul.f32 1.0, %v2923
    %v2925 = vtanh.pop %v2799
    %v2926 = vtanh.pop %v2803
    %v2927 = vtanh.pop %v2807
    %v2928 = vtanh.pop %v2811
    %v2929 = vtanh.pop %v2815
    %v2930 = vtanh.pop %v2819
    %v2931 = vtanh.pop %v2823
    %v2932 = vtanh.pop %v2827
    %v2933 = vxor.u32 %v2800, 2147483648
    %v2934 = vxor.u32 %v2804, 2147483648
    %v2935 = vxor.u32 %v2808, 2147483648
    %v2936 = vxor.u32 %v2812, 2147483648
    %v2937 = vxor.u32 %v2816, 2147483648
    %v2938 = vxor.u32 %v2820, 2147483648
    %v2939 = vxor.u32 %v2824, 2147483648
    %v2940 = vxor.u32 %v2828, 2147483648
    %v2941 = vmul.f32 %v2933, 1.442695
    %v2942 = vpow.pop %v2941
    %v2943 = vmul.f32 %v2934, 1.442695
    %v2944 = vpow.pop %v2943
    %v2945 = vmul.f32 %v2935, 1.442695
    %v2946 = vpow.pop %v2945
    %v2947 = vmul.f32 %v2936, 1.442695
    %v2948 = vpow.pop %v2947
    %v2949 = vmul.f32 %v2937, 1.442695
    %v2950 = vpow.pop %v2949
    %v2951 = vmul.f32 %v2938, 1.442695
    %v2952 = vpow.pop %v2951
    %v2953 = vmul.f32 %v2939, 1.442695
    %v2954 = vpow.pop %v2953
    %v2955 = vmul.f32 %v2940, 1.442695
    %v2956 = vpow.pop %v2955
    %v2957 = vadd.f32 %v2942, 1.0
    %v2958 = vadd.f32 %v2944, 1.0
    %v2959 = vadd.f32 %v2946, 1.0
    %v2960 = vadd.f32 %v2948, 1.0
    %v2961 = vadd.f32 %v2950, 1.0
    %v2962 = vadd.f32 %v2952, 1.0
    %v2963 = vadd.f32 %v2954, 1.0
    %v2964 = vadd.f32 %v2956, 1.0
    %v2965 = vrcp.pop %v2957
    %v2966 = vmul.f32 1.0, %v2965
    %v2967 = vrcp.pop %v2958
    %v2968 = vmul.f32 1.0, %v2967
    %v2969 = vrcp.pop %v2959
    %v2970 = vmul.f32 1.0, %v2969
    %v2971 = vrcp.pop %v2960
    %v2972 = vmul.f32 1.0, %v2971
    %v2973 = vrcp.pop %v2961
    %v2974 = vmul.f32 1.0, %v2973
    %v2975 = vrcp.pop %v2962
    %v2976 = vmul.f32 1.0, %v2975
    %v2977 = vrcp.pop %v2963
    %v2978 = vmul.f32 1.0, %v2977
    %v2979 = vrcp.pop %v2964
    %v2980 = vmul.f32 1.0, %v2979
    %v2981 = vmul.f32 %v2910, %v2583
    %v2982 = vmul.f32 %v2912, %v2584
    %v2983 = vmul.f32 %v2914, %v2585
    %v2984 = vmul.f32 %v2916, %v2586
    %v2985 = vmul.f32 %v2918, %v2587
    %v2986 = vmul.f32 %v2920, %v2588
    %v2987 = vmul.f32 %v2922, %v2589
    %v2988 = vmul.f32 %v2924, %v2590
    %v2989 = vmul.f32 %v2862, %v2925
    %v2990 = vmul.f32 %v2864, %v2926
    %v2991 = vmul.f32 %v2866, %v2927
    %v2992 = vmul.f32 %v2868, %v2928
    %v2993 = vmul.f32 %v2870, %v2929
    %v2994 = vmul.f32 %v2872, %v2930
    %v2995 = vmul.f32 %v2874, %v2931
    %v2996 = vmul.f32 %v2876, %v2932
    %v2997 = vadd.f32 %v2981, %v2989
    %v2998 = vadd.f32 %v2982, %v2990
    %v2999 = vadd.f32 %v2983, %v2991
    %v3000 = vadd.f32 %v2984, %v2992
    %v3001 = vadd.f32 %v2985, %v2993
    %v3002 = vadd.f32 %v2986, %v2994
    %v3003 = vadd.f32 %v2987, %v2995
    %v3004 = vadd.f32 %v2988, %v2996
    %v3005 = vtanh.pop %v2997
    %v3006 = vtanh.pop %v2998
    %v3007 = vtanh.pop %v2999
    %v3008 = vtanh.pop %v3000
    %v3009 = vtanh.pop %v3001
    %v3010 = vtanh.pop %v3002
    %v3011 = vtanh.pop %v3003
    %v3012 = vtanh.pop %v3004
    %v3013 = vmul.f32 %v2966, %v3005
    %v3014 = vmul.f32 %v2968, %v3006
    %v3015 = vmul.f32 %v2970, %v3007
    %v3016 = vmul.f32 %v2972, %v3008
    %v3017 = vmul.f32 %v2974, %v3009
    %v3018 = vmul.f32 %v2976, %v3010
    %v3019 = vmul.f32 %v2978, %v3011
    %v3020 = vmul.f32 %v2980, %v3012
  $region42: #{lstm_baseline_forward.1} parent=0 // loop_footer
    %s1986 = sadd.s32 1, %s1982
  $region43: #{lstm_baseline_forward.1} parent=0 // loop_footer_branch
    %1981 = sbr.rel target = $region39
  $region44: #{lstm_baseline_forward.1} parent=0 // loop_exit
    _
  %v3021 = vpack.c.bf16 %v1988, %v1987
  %v3022 = vpack.c.bf16 %v1990, %v1989
  %v3023 = vpack.c.bf16 %v1992, %v1991
  %v3024 = vpack.c.bf16 %v1994, %v1993
  %v3025 = vld [vmem:[%s4] sm:$0xff]
  %v3026 = vld [vmem:[%s4 + $0x8] sm:$0xff]
  %v3027 = vld [vmem:[%s4 + $0x10] sm:$0xff]
  %v3028 = vld [vmem:[%s4 + $0x18] sm:$0xff]
  %v3029 = vld [vmem:[%s4 + $0x20] sm:$0xff]
  %v3030 = vld [vmem:[%s4 + $0x28] sm:$0xff]
  %v3031 = vld [vmem:[%s4 + $0x30] sm:$0xff]
  %v3032 = vld [vmem:[%s4 + $0x38] sm:$0xff]
  %v3033 = vld [vmem:[%s4 + $0x40] sm:$0xff]
  %v3034 = vld [vmem:[%s4 + $0x48] sm:$0xff]
  %v3035 = vld [vmem:[%s4 + $0x50] sm:$0xff]
  %v3036 = vld [vmem:[%s4 + $0x58] sm:$0xff]
  %v3037 = vld [vmem:[%s4 + $0x60] sm:$0xff]
  %v3038 = vld [vmem:[%s4 + $0x68] sm:$0xff]
  %v3039 = vld [vmem:[%s4 + $0x70] sm:$0xff]
  %v3040 = vld [vmem:[%s4 + $0x78] sm:$0xff]
  %v3041 = vld [vmem:[%s4 + $0x80] sm:$0xff]
  %v3042 = vld [vmem:[%s4 + $0x88] sm:$0xff]
  %v3043 = vld [vmem:[%s4 + $0x90] sm:$0xff]
  %v3044 = vld [vmem:[%s4 + $0x98] sm:$0xff]
  %v3045 = vld [vmem:[%s4 + $0xa0] sm:$0xff]
  %v3046 = vld [vmem:[%s4 + $0xa8] sm:$0xff]
  %v3047 = vld [vmem:[%s4 + $0xb0] sm:$0xff]
  %v3048 = vld [vmem:[%s4 + $0xb8] sm:$0xff]
  %v3049 = vld [vmem:[%s4 + $0xc0] sm:$0xff]
  %v3050 = vld [vmem:[%s4 + $0xc8] sm:$0xff]
  %v3051 = vld [vmem:[%s4 + $0xd0] sm:$0xff]
  %v3052 = vld [vmem:[%s4 + $0xd8] sm:$0xff]
  %v3053 = vld [vmem:[%s4 + $0xe0] sm:$0xff]
  %v3054 = vld [vmem:[%s4 + $0xe8] sm:$0xff]
  %v3055 = vld [vmem:[%s4 + $0xf0] sm:$0xff]
  %v3056 = vld [vmem:[%s4 + $0xf8] sm:$0xff]
  %v3057 = vld [vmem:[%s6] sm:$0xf]
  %v3059 = vlaneseq
  %v3060 = vshrl.u32 %v3059, 7
  %v3061 = vsub.s32 0, %v3060
  %v3062 = vrot.slane %v3057, %v3061
  %v3063 = vlaneseq
  %v3064 = vshrl.u32 %v3063, 7
  %v3065 = vsub.s32 1, %v3064
  %v3066 = vrot.slane %v3057, %v3065
  %v3067 = vlaneseq
  %v3068 = vshrl.u32 %v3067, 7
  %v3069 = vsub.s32 2, %v3068
  %v3070 = vrot.slane %v3057, %v3069
  %v3071 = vlaneseq
  %v3072 = vshrl.u32 %v3071, 7
  %v3073 = vsub.s32 3, %v3072
  %v3074 = vrot.slane %v3057, %v3073
  %v3111 = vunpack.c.l.b16 %v3025
  %v3112 = vunpack.c.h.b16 %v3025
  %v3113 = vunpack.c.l.b16 %v3026
  %v3114 = vunpack.c.h.b16 %v3026
  %v3115 = vunpack.c.l.b16 %v3027
  %v3116 = vunpack.c.h.b16 %v3027
  %v3117 = vunpack.c.l.b16 %v3028
  %v3118 = vunpack.c.h.b16 %v3028
  %v3119 = vunpack.c.l.b16 %v3029
  %v3120 = vunpack.c.h.b16 %v3029
  %v3121 = vunpack.c.l.b16 %v3030
  %v3122 = vunpack.c.h.b16 %v3030
  %v3123 = vunpack.c.l.b16 %v3031
  %v3124 = vunpack.c.h.b16 %v3031
  %v3125 = vunpack.c.l.b16 %v3032
  %v3126 = vunpack.c.h.b16 %v3032
  %v3127 = vunpack.c.l.b16 %v3033
  %v3128 = vunpack.c.h.b16 %v3033
  %v3129 = vunpack.c.l.b16 %v3034
  %v3130 = vunpack.c.h.b16 %v3034
  %v3131 = vunpack.c.l.b16 %v3035
  %v3132 = vunpack.c.h.b16 %v3035
  %v3133 = vunpack.c.l.b16 %v3036
  %v3134 = vunpack.c.h.b16 %v3036
  %v3135 = vunpack.c.l.b16 %v3037
  %v3136 = vunpack.c.h.b16 %v3037
  %v3137 = vunpack.c.l.b16 %v3038
  %v3138 = vunpack.c.h.b16 %v3038
  %v3139 = vunpack.c.l.b16 %v3039
  %v3140 = vunpack.c.h.b16 %v3039
  %v3141 = vunpack.c.l.b16 %v3040
  %v3142 = vunpack.c.h.b16 %v3040
  %v3143 = vunpack.c.l.b16 %v3041
  %v3144 = vunpack.c.h.b16 %v3041
  %v3145 = vunpack.c.l.b16 %v3042
  %v3146 = vunpack.c.h.b16 %v3042
  %v3147 = vunpack.c.l.b16 %v3043
  %v3148 = vunpack.c.h.b16 %v3043
  %v3149 = vunpack.c.l.b16 %v3044
  %v3150 = vunpack.c.h.b16 %v3044
  %v3151 = vunpack.c.l.b16 %v3045
  %v3152 = vunpack.c.h.b16 %v3045
  %v3153 = vunpack.c.l.b16 %v3046
  %v3154 = vunpack.c.h.b16 %v3046
  %v3155 = vunpack.c.l.b16 %v3047
  %v3156 = vunpack.c.h.b16 %v3047
  %v3157 = vunpack.c.l.b16 %v3048
  %v3158 = vunpack.c.h.b16 %v3048
  %v3159 = vunpack.c.l.b16 %v3049
  %v3160 = vunpack.c.h.b16 %v3049
  %v3161 = vunpack.c.l.b16 %v3050
  %v3162 = vunpack.c.h.b16 %v3050
  %v3163 = vunpack.c.l.b16 %v3051
  %v3164 = vunpack.c.h.b16 %v3051
  %v3165 = vunpack.c.l.b16 %v3052
  %v3166 = vunpack.c.h.b16 %v3052
  %v3167 = vunpack.c.l.b16 %v3053
  %v3168 = vunpack.c.h.b16 %v3053
  %v3169 = vunpack.c.l.b16 %v3054
  %v3170 = vunpack.c.h.b16 %v3054
  %v3171 = vunpack.c.l.b16 %v3055
  %v3172 = vunpack.c.h.b16 %v3055
  %v3173 = vunpack.c.l.b16 %v3056
  %v3174 = vunpack.c.h.b16 %v3056
  %v3175 = vpack.c.b16 %v3115, %v3111
  %v3176 = vpack.c.b16 %v3116, %v3112
  %v3177 = vpack.c.b16 %v3117, %v3113
  %v3178 = vpack.c.b16 %v3118, %v3114
  %v3179 = vpack.c.b16 %v3123, %v3119
  %v3180 = vpack.c.b16 %v3124, %v3120
  %v3181 = vpack.c.b16 %v3125, %v3121
  %v3182 = vpack.c.b16 %v3126, %v3122
  %v3183 = vpack.c.b16 %v3131, %v3127
  %v3184 = vpack.c.b16 %v3132, %v3128
  %v3185 = vpack.c.b16 %v3133, %v3129
  %v3186 = vpack.c.b16 %v3134, %v3130
  %v3187 = vpack.c.b16 %v3139, %v3135
  %v3188 = vpack.c.b16 %v3140, %v3136
  %v3189 = vpack.c.b16 %v3141, %v3137
  %v3190 = vpack.c.b16 %v3142, %v3138
  %v3191 = vpack.c.b16 %v3147, %v3143
  %v3192 = vpack.c.b16 %v3148, %v3144
  %v3193 = vpack.c.b16 %v3149, %v3145
  %v3194 = vpack.c.b16 %v3150, %v3146
  %v3195 = vpack.c.b16 %v3155, %v3151
  %v3196 = vpack.c.b16 %v3156, %v3152
  %v3197 = vpack.c.b16 %v3157, %v3153
  %v3198 = vpack.c.b16 %v3158, %v3154
  %v3199 = vpack.c.b16 %v3163, %v3159
  %v3200 = vpack.c.b16 %v3164, %v3160
  %v3201 = vpack.c.b16 %v3165, %v3161
  %v3202 = vpack.c.b16 %v3166, %v3162
  %v3203 = vpack.c.b16 %v3171, %v3167
  %v3204 = vpack.c.b16 %v3172, %v3168
  %v3205 = vpack.c.b16 %v3173, %v3169
  %v3206 = vpack.c.b16 %v3174, %v3170
  %3239 = vmatprep.subr.bf16.mxu0 %v3176
  %3240 = vmatpush1.bf16.msra.mxu0 %v3175
  %3241 = vmatprep.subr.bf16.mxu0 %v3180
  %3242 = vmatpush1.bf16.msra.mxu0 %v3179
  %3243 = vmatprep.subr.bf16.mxu0 %v3184
  %3244 = vmatpush1.bf16.msra.mxu0 %v3183
  %3245 = vmatprep.subr.bf16.mxu0 %v3188
  %3246 = vmatpush1.bf16.msra.mxu0 %v3187
  %3247 = vmatprep.subr.bf16.mxu0 %v3192
  %3248 = vmatpush1.bf16.msra.mxu0 %v3191
  %3249 = vmatprep.subr.bf16.mxu0 %v3196
  %3250 = vmatpush1.bf16.msra.mxu0 %v3195
  %3251 = vmatprep.subr.bf16.mxu0 %v3200
  %3252 = vmatpush1.bf16.msra.mxu0 %v3199
  %3253 = vmatprep.subr.bf16.mxu0 %v3204
  %3254 = vmatpush1.bf16.msra.mxu0 %v3203
  %3255 = vmatprep.subr.bf16.mxu0 0
  %3256 = vmatpush1.bf16.msra.mxu0 0
  %3257 = vmatprep.subr.bf16.mxu0 0
  %3258 = vmatpush1.bf16.msra.mxu0 0
  %3259 = vmatprep.subr.bf16.mxu0 0
  %3260 = vmatpush1.bf16.msra.mxu0 0
  %3261 = vmatprep.subr.bf16.mxu0 0
  %3262 = vmatpush1.bf16.msra.mxu0 0
  %3263 = vmatprep.subr.bf16.mxu0 0
  %3264 = vmatpush1.bf16.msra.mxu0 0
  %3265 = vmatprep.subr.bf16.mxu0 0
  %3266 = vmatpush1.bf16.msra.mxu0 0
  %3267 = vmatprep.subr.bf16.mxu0 0
  %3268 = vmatpush1.bf16.msra.mxu0 0
  %3269 = vmatprep.subr.bf16.mxu0 0
  %3270 = vmatpush1.bf16.msra.mxu0 0
  %3271 = vmatprep.mubr.bf16.mxu0 0
  %3272 = vmatmul.mubr.bf16.gmra.mrb[0].mxu0 %v3021
  %v3273 = vpop.f32.mrb[0].mxu0
  %v3274 = vadd.f32 %v3062, %v3273
  %v3275 = vpop.f32.mrb[0].mxu0
  %v3276 = vadd.f32 %v3066, %v3275
  %v3277 = vpop.f32.mrb[0].mxu0
  %v3278 = vadd.f32 %v3062, %v3277
  %v3279 = vpop.f32.mrb[0].mxu0
  %v3280 = vadd.f32 %v3066, %v3279
  %3281 = vmatprep.mubr.bf16.mxu0 0
  %3282 = vmatmul.mubr.bf16.gmra.mrb[0].mxu0 %v3022
  %v3283 = vpop.f32.mrb[0].mxu0
  %v3284 = vadd.f32 %v3062, %v3283
  %v3285 = vpop.f32.mrb[0].mxu0
  %v3286 = vadd.f32 %v3066, %v3285
  %v3287 = vpop.f32.mrb[0].mxu0
  %v3288 = vadd.f32 %v3062, %v3287
  %v3289 = vpop.f32.mrb[0].mxu0
  %v3290 = vadd.f32 %v3066, %v3289
  %3291 = vmatprep.mubr.bf16.mxu0 0
  %3292 = vmatmul.mubr.bf16.gmra.mrb[0].mxu0 %v3023
  %v3293 = vpop.f32.mrb[0].mxu0
  %v3294 = vadd.f32 %v3062, %v3293
  %v3295 = vpop.f32.mrb[0].mxu0
  %v3296 = vadd.f32 %v3066, %v3295
  %v3297 = vpop.f32.mrb[0].mxu0
  %v3298 = vadd.f32 %v3062, %v3297
  %v3299 = vpop.f32.mrb[0].mxu0
  %v3300 = vadd.f32 %v3066, %v3299
  %3301 = vmatprep.mubr.bf16.mxu0 0
  %3302 = vmatmul.mubr.bf16.gmra.mrb[0].mxu0 %v3024
  %v3303 = vpop.f32.mrb[0].mxu0
  %v3304 = vadd.f32 %v3062, %v3303
  %v3305 = vpop.f32.mrb[0].mxu0
  %v3306 = vadd.f32 %v3066, %v3305
  %v3307 = vpop.f32.mrb[0].mxu0
  %v3308 = vadd.f32 %v3062, %v3307
  %v3309 = vpop.f32.mrb[0].mxu0
  %v3310 = vadd.f32 %v3066, %v3309
  %3311 = vdwg.mxu0
  %3312 = vmatprep.subr.bf16.mxu0 %v3178
  %3313 = vmatpush1.bf16.msra.mxu0 %v3177
  %3314 = vmatprep.subr.bf16.mxu0 %v3182
  %3315 = vmatpush1.bf16.msra.mxu0 %v3181
  %3316 = vmatprep.subr.bf16.mxu0 %v3186
  %3317 = vmatpush1.bf16.msra.mxu0 %v3185
  %3318 = vmatprep.subr.bf16.mxu0 %v3190
  %3319 = vmatpush1.bf16.msra.mxu0 %v3189
  %3320 = vmatprep.subr.bf16.mxu0 %v3194
  %3321 = vmatpush1.bf16.msra.mxu0 %v3193
  %3322 = vmatprep.subr.bf16.mxu0 %v3198
  %3323 = vmatpush1.bf16.msra.mxu0 %v3197
  %3324 = vmatprep.subr.bf16.mxu0 %v3202
  %3325 = vmatpush1.bf16.msra.mxu0 %v3201
  %3326 = vmatprep.subr.bf16.mxu0 %v3206
  %3327 = vmatpush1.bf16.msra.mxu0 %v3205
  %3328 = vmatprep.subr.bf16.mxu0 0
  %3329 = vmatpush1.bf16.msra.mxu0 0
  %3330 = vmatprep.subr.bf16.mxu0 0
  %3331 = vmatpush1.bf16.msra.mxu0 0
  %3332 = vmatprep.subr.bf16.mxu0 0
  %3333 = vmatpush1.bf16.msra.mxu0 0
  %3334 = vmatprep.subr.bf16.mxu0 0
  %3335 = vmatpush1.bf16.msra.mxu0 0
  %3336 = vmatprep.subr.bf16.mxu0 0
  %3337 = vmatpush1.bf16.msra.mxu0 0
  %3338 = vmatprep.subr.bf16.mxu0 0
  %3339 = vmatpush1.bf16.msra.mxu0 0
  %3340 = vmatprep.subr.bf16.mxu0 0
  %3341 = vmatpush1.bf16.msra.mxu0 0
  %3342 = vmatprep.subr.bf16.mxu0 0
  %3343 = vmatpush1.bf16.msra.mxu0 0
  %3344 = vmatprep.mubr.bf16.mxu0 0
  %3345 = vmatmul.mubr.bf16.gmra.mrb[0].mxu0 %v3021
  %v3346 = vpop.f32.mrb[0].mxu0
  %v3347 = vadd.f32 %v3070, %v3346
  %v3348 = vpop.f32.mrb[0].mxu0
  %v3349 = vadd.f32 %v3074, %v3348
  %v3350 = vpop.f32.mrb[0].mxu0
  %v3351 = vadd.f32 %v3070, %v3350
  %v3352 = vpop.f32.mrb[0].mxu0
  %v3353 = vadd.f32 %v3074, %v3352
  %3354 = vmatprep.mubr.bf16.mxu0 0
  %3355 = vmatmul.mubr.bf16.gmra.mrb[0].mxu0 %v3022
  %v3356 = vpop.f32.mrb[0].mxu0
  %v3357 = vadd.f32 %v3070, %v3356
  %v3358 = vpop.f32.mrb[0].mxu0
  %v3359 = vadd.f32 %v3074, %v3358
  %v3360 = vpop.f32.mrb[0].mxu0
  %v3361 = vadd.f32 %v3070, %v3360
  %v3362 = vpop.f32.mrb[0].mxu0
  %v3363 = vadd.f32 %v3074, %v3362
  %3364 = vmatprep.mubr.bf16.mxu0 0
  %3365 = vmatmul.mubr.bf16.gmra.mrb[0].mxu0 %v3023
  %v3366 = vpop.f32.mrb[0].mxu0
  %v3367 = vadd.f32 %v3070, %v3366
  %v3368 = vpop.f32.mrb[0].mxu0
  %v3369 = vadd.f32 %v3074, %v3368
  %v3370 = vpop.f32.mrb[0].mxu0
  %v3371 = vadd.f32 %v3070, %v3370
  %v3372 = vpop.f32.mrb[0].mxu0
  %v3373 = vadd.f32 %v3074, %v3372
  %3374 = vmatprep.mubr.bf16.mxu0 0
  %3375 = vmatmul.mubr.bf16.gmra.mrb[0].mxu0 %v3024
  %v3376 = vpop.f32.mrb[0].mxu0
  %v3377 = vadd.f32 %v3070, %v3376
  %v3378 = vpop.f32.mrb[0].mxu0
  %v3379 = vadd.f32 %v3074, %v3378
  %v3380 = vpop.f32.mrb[0].mxu0
  %v3381 = vadd.f32 %v3070, %v3380
  %v3382 = vpop.f32.mrb[0].mxu0
  %v3383 = vadd.f32 %v3074, %v3382
  %3384 = vdwg.mxu0
  %3385 = vst [vmem:[#allocation3] sm:$0xff] %v3274
  %3386 = vst [vmem:[#allocation3 + $0x8] sm:$0xff] %v3276
  %3387 = vst [vmem:[#allocation3 + $0x10] sm:$0xff] %v3347
  %3388 = vst [vmem:[#allocation3 + $0x18] sm:$0xff] %v3349
  %3389 = vst [vmem:[#allocation3 + $0x20] sm:$0xff] %v3278
  %3390 = vst [vmem:[#allocation3 + $0x28] sm:$0xff] %v3280
  %3391 = vst [vmem:[#allocation3 + $0x30] sm:$0xff] %v3351
  %3392 = vst [vmem:[#allocation3 + $0x38] sm:$0xff] %v3353
  %3393 = vst [vmem:[#allocation3 + $0x40] sm:$0xff] %v3284
  %3394 = vst [vmem:[#allocation3 + $0x48] sm:$0xff] %v3286
  %3395 = vst [vmem:[#allocation3 + $0x50] sm:$0xff] %v3357
  %3396 = vst [vmem:[#allocation3 + $0x58] sm:$0xff] %v3359
  %3397 = vst [vmem:[#allocation3 + $0x60] sm:$0xff] %v3288
  %3398 = vst [vmem:[#allocation3 + $0x68] sm:$0xff] %v3290
  %3399 = vst [vmem:[#allocation3 + $0x70] sm:$0xff] %v3361
  %3400 = vst [vmem:[#allocation3 + $0x78] sm:$0xff] %v3363
  %3401 = vst [vmem:[#allocation3 + $0x80] sm:$0xff] %v3294
  %3402 = vst [vmem:[#allocation3 + $0x88] sm:$0xff] %v3296
  %3403 = vst [vmem:[#allocation3 + $0x90] sm:$0xff] %v3367
  %3404 = vst [vmem:[#allocation3 + $0x98] sm:$0xff] %v3369
  %3405 = vst [vmem:[#allocation3 + $0xa0] sm:$0xff] %v3298
  %3406 = vst [vmem:[#allocation3 + $0xa8] sm:$0xff] %v3300
  %3407 = vst [vmem:[#allocation3 + $0xb0] sm:$0xff] %v3371
  %3408 = vst [vmem:[#allocation3 + $0xb8] sm:$0xff] %v3373
  %3409 = vst [vmem:[#allocation3 + $0xc0] sm:$0xff] %v3304
  %3410 = vst [vmem:[#allocation3 + $0xc8] sm:$0xff] %v3306
  %3411 = vst [vmem:[#allocation3 + $0xd0] sm:$0xff] %v3377
  %3412 = vst [vmem:[#allocation3 + $0xd8] sm:$0xff] %v3379
  %3413 = vst [vmem:[#allocation3 + $0xe0] sm:$0xff] %v3308
  %3414 = vst [vmem:[#allocation3 + $0xe8] sm:$0xff] %v3310
  %3415 = vst [vmem:[#allocation3 + $0xf0] sm:$0xff] %v3381
  %3416 = vst [vmem:[#allocation3 + $0xf8] sm:$0xff] %v3383
  loop: start=0, step=1, limit=4
  $region45: #{lstm_baseline_forward.1} parent=0 // loop_pre_header
    _
  $region46: #{lstm_baseline_forward.1} parent=0 // loop_header
    %s3418 = sphi 0, %s3422
    %p3419 = scmp.ge.s32.totalorder %s3418, 4
    %v3423 = vphi 0.0, %v3860
    %v3424 = vphi 0.0, %v3858
  $region47: #{lstm_baseline_forward.1} parent=0 // loop_header_branch
    %3421 = sbr.rel (%p3419) target = $region51
  $region48: #{lstm_baseline_forward.1} parent=0 // loop_body
    %s3425 = smul.u32 %s3418, 16
    %s3426 = sshra.s32 %s3425, 3
    %s3427 = sand.u32 %s3425, 7
    %s3428 = smul.u32 %s3426, 4
    %s3429 = smul.addr %s3428, 8
    %s3430 = scalar_lea.vmem [#allocation3], %s3429
    %v3431 = vld [vmem:[%s3430] sm:$0xff]
    %v3432 = vld [vmem:[%s3430 + $0x8] sm:$0xff]
    %v3433 = vld [vmem:[%s3430 + $0x10] sm:$0xff]
    %v3434 = vld [vmem:[%s3430 + $0x18] sm:$0xff]
    %v3435 = vpack.c.bf16 %v3423, %v3423
    %v3436 = vld [vmem:[%s5] sm:$0xff]
    %v3437 = vld [vmem:[%s5 + $0x8] sm:$0xff]
    %v3438 = vld [vmem:[%s5 + $0x10] sm:$0xff]
    %v3439 = vld [vmem:[%s5 + $0x18] sm:$0xff]
    %v3440 = vld [vmem:[%s5 + $0x20] sm:$0xff]
    %v3441 = vld [vmem:[%s5 + $0x28] sm:$0xff]
    %v3442 = vld [vmem:[%s5 + $0x30] sm:$0xff]
    %v3443 = vld [vmem:[%s5 + $0x38] sm:$0xff]
    %v3444 = vld [vmem:[%s5 + $0x40] sm:$0xff]
    %v3445 = vld [vmem:[%s5 + $0x48] sm:$0xff]
    %v3446 = vld [vmem:[%s5 + $0x50] sm:$0xff]
    %v3447 = vld [vmem:[%s5 + $0x58] sm:$0xff]
    %v3448 = vld [vmem:[%s5 + $0x60] sm:$0xff]
    %v3449 = vld [vmem:[%s5 + $0x68] sm:$0xff]
    %v3450 = vld [vmem:[%s5 + $0x70] sm:$0xff]
    %v3451 = vld [vmem:[%s5 + $0x78] sm:$0xff]
    %v3452 = vld [vmem:[%s5 + $0x80] sm:$0xff]
    %v3453 = vld [vmem:[%s5 + $0x88] sm:$0xff]
    %v3454 = vld [vmem:[%s5 + $0x90] sm:$0xff]
    %v3455 = vld [vmem:[%s5 + $0x98] sm:$0xff]
    %v3456 = vld [vmem:[%s5 + $0xa0] sm:$0xff]
    %v3457 = vld [vmem:[%s5 + $0xa8] sm:$0xff]
    %v3458 = vld [vmem:[%s5 + $0xb0] sm:$0xff]
    %v3459 = vld [vmem:[%s5 + $0xb8] sm:$0xff]
    %v3460 = vld [vmem:[%s5 + $0xc0] sm:$0xff]
    %v3461 = vld [vmem:[%s5 + $0xc8] sm:$0xff]
    %v3462 = vld [vmem:[%s5 + $0xd0] sm:$0xff]
    %v3463 = vld [vmem:[%s5 + $0xd8] sm:$0xff]
    %v3464 = vld [vmem:[%s5 + $0xe0] sm:$0xff]
    %v3465 = vld [vmem:[%s5 + $0xe8] sm:$0xff]
    %v3466 = vld [vmem:[%s5 + $0xf0] sm:$0xff]
    %v3467 = vld [vmem:[%s5 + $0xf8] sm:$0xff]
    %v3500 = vunpack.c.l.b16 %v3436
    %v3501 = vunpack.c.h.b16 %v3436
    %v3502 = vunpack.c.l.b16 %v3437
    %v3503 = vunpack.c.h.b16 %v3437
    %v3504 = vunpack.c.l.b16 %v3438
    %v3505 = vunpack.c.h.b16 %v3438
    %v3506 = vunpack.c.l.b16 %v3439
    %v3507 = vunpack.c.h.b16 %v3439
    %v3508 = vunpack.c.l.b16 %v3440
    %v3509 = vunpack.c.h.b16 %v3440
    %v3510 = vunpack.c.l.b16 %v3441
    %v3511 = vunpack.c.h.b16 %v3441
    %v3512 = vunpack.c.l.b16 %v3442
    %v3513 = vunpack.c.h.b16 %v3442
    %v3514 = vunpack.c.l.b16 %v3443
    %v3515 = vunpack.c.h.b16 %v3443
    %v3516 = vunpack.c.l.b16 %v3444
    %v3517 = vunpack.c.h.b16 %v3444
    %v3518 = vunpack.c.l.b16 %v3445
    %v3519 = vunpack.c.h.b16 %v3445
    %v3520 = vunpack.c.l.b16 %v3446
    %v3521 = vunpack.c.h.b16 %v3446
    %v3522 = vunpack.c.l.b16 %v3447
    %v3523 = vunpack.c.h.b16 %v3447
    %v3524 = vunpack.c.l.b16 %v3448
    %v3525 = vunpack.c.h.b16 %v3448
    %v3526 = vunpack.c.l.b16 %v3449
    %v3527 = vunpack.c.h.b16 %v3449
    %v3528 = vunpack.c.l.b16 %v3450
    %v3529 = vunpack.c.h.b16 %v3450
    %v3530 = vunpack.c.l.b16 %v3451
    %v3531 = vunpack.c.h.b16 %v3451
    %v3532 = vunpack.c.l.b16 %v3452
    %v3533 = vunpack.c.h.b16 %v3452
    %v3534 = vunpack.c.l.b16 %v3453
    %v3535 = vunpack.c.h.b16 %v3453
    %v3536 = vunpack.c.l.b16 %v3454
    %v3537 = vunpack.c.h.b16 %v3454
    %v3538 = vunpack.c.l.b16 %v3455
    %v3539 = vunpack.c.h.b16 %v3455
    %v3540 = vunpack.c.l.b16 %v3456
    %v3541 = vunpack.c.h.b16 %v3456
    %v3542 = vunpack.c.l.b16 %v3457
    %v3543 = vunpack.c.h.b16 %v3457
    %v3544 = vunpack.c.l.b16 %v3458
    %v3545 = vunpack.c.h.b16 %v3458
    %v3546 = vunpack.c.l.b16 %v3459
    %v3547 = vunpack.c.h.b16 %v3459
    %v3548 = vunpack.c.l.b16 %v3460
    %v3549 = vunpack.c.h.b16 %v3460
    %v3550 = vunpack.c.l.b16 %v3461
    %v3551 = vunpack.c.h.b16 %v3461
    %v3552 = vunpack.c.l.b16 %v3462
    %v3553 = vunpack.c.h.b16 %v3462
    %v3554 = vunpack.c.l.b16 %v3463
    %v3555 = vunpack.c.h.b16 %v3463
    %v3556 = vunpack.c.l.b16 %v3464
    %v3557 = vunpack.c.h.b16 %v3464
    %v3558 = vunpack.c.l.b16 %v3465
    %v3559 = vunpack.c.h.b16 %v3465
    %v3560 = vunpack.c.l.b16 %v3466
    %v3561 = vunpack.c.h.b16 %v3466
    %v3562 = vunpack.c.l.b16 %v3467
    %v3563 = vunpack.c.h.b16 %v3467
    %v3564 = vpack.c.b16 %v3504, %v3500
    %v3565 = vpack.c.b16 %v3505, %v3501
    %v3566 = vpack.c.b16 %v3506, %v3502
    %v3567 = vpack.c.b16 %v3507, %v3503
    %v3568 = vpack.c.b16 %v3512, %v3508
    %v3569 = vpack.c.b16 %v3513, %v3509
    %v3570 = vpack.c.b16 %v3514, %v3510
    %v3571 = vpack.c.b16 %v3515, %v3511
    %v3572 = vpack.c.b16 %v3520, %v3516
    %v3573 = vpack.c.b16 %v3521, %v3517
    %v3574 = vpack.c.b16 %v3522, %v3518
    %v3575 = vpack.c.b16 %v3523, %v3519
    %v3576 = vpack.c.b16 %v3528, %v3524
    %v3577 = vpack.c.b16 %v3529, %v3525
    %v3578 = vpack.c.b16 %v3530, %v3526
    %v3579 = vpack.c.b16 %v3531, %v3527
    %v3580 = vpack.c.b16 %v3536, %v3532
    %v3581 = vpack.c.b16 %v3537, %v3533
    %v3582 = vpack.c.b16 %v3538, %v3534
    %v3583 = vpack.c.b16 %v3539, %v3535
    %v3584 = vpack.c.b16 %v3544, %v3540
    %v3585 = vpack.c.b16 %v3545, %v3541
    %v3586 = vpack.c.b16 %v3546, %v3542
    %v3587 = vpack.c.b16 %v3547, %v3543
    %v3588 = vpack.c.b16 %v3552, %v3548
    %v3589 = vpack.c.b16 %v3553, %v3549
    %v3590 = vpack.c.b16 %v3554, %v3550
    %v3591 = vpack.c.b16 %v3555, %v3551
    %v3592 = vpack.c.b16 %v3560, %v3556
    %v3593 = vpack.c.b16 %v3561, %v3557
    %v3594 = vpack.c.b16 %v3562, %v3558
    %v3595 = vpack.c.b16 %v3563, %v3559
    %3628 = vmatprep.subr.bf16.mxu0 %v3565
    %3629 = vmatpush1.bf16.msra.mxu0 %v3564
    %3630 = vmatprep.subr.bf16.mxu0 %v3569
    %3631 = vmatpush1.bf16.msra.mxu0 %v3568
    %3632 = vmatprep.subr.bf16.mxu0 %v3573
    %3633 = vmatpush1.bf16.msra.mxu0 %v3572
    %3634 = vmatprep.subr.bf16.mxu0 %v3577
    %3635 = vmatpush1.bf16.msra.mxu0 %v3576
    %3636 = vmatprep.subr.bf16.mxu0 %v3581
    %3637 = vmatpush1.bf16.msra.mxu0 %v3580
    %3638 = vmatprep.subr.bf16.mxu0 %v3585
    %3639 = vmatpush1.bf16.msra.mxu0 %v3584
    %3640 = vmatprep.subr.bf16.mxu0 %v3589
    %3641 = vmatpush1.bf16.msra.mxu0 %v3588
    %3642 = vmatprep.subr.bf16.mxu0 %v3593
    %3643 = vmatpush1.bf16.msra.mxu0 %v3592
    %3644 = vmatprep.subr.bf16.mxu0 0
    %3645 = vmatpush1.bf16.msra.mxu0 0
    %3646 = vmatprep.subr.bf16.mxu0 0
    %3647 = vmatpush1.bf16.msra.mxu0 0
    %3648 = vmatprep.subr.bf16.mxu0 0
    %3649 = vmatpush1.bf16.msra.mxu0 0
    %3650 = vmatprep.subr.bf16.mxu0 0
    %3651 = vmatpush1.bf16.msra.mxu0 0
    %3652 = vmatprep.subr.bf16.mxu0 0
    %3653 = vmatpush1.bf16.msra.mxu0 0
    %3654 = vmatprep.subr.bf16.mxu0 0
    %3655 = vmatpush1.bf16.msra.mxu0 0
    %3656 = vmatprep.subr.bf16.mxu0 0
    %3657 = vmatpush1.bf16.msra.mxu0 0
    %3658 = vmatprep.subr.bf16.mxu0 0
    %3659 = vmatpush1.bf16.msra.mxu0 0
    %3660 = vmatprep.mubr.bf16.mxu0 0
    %3661 = vmatmul.mubr.bf16.gmra.mrb[0].mxu0 %v3435
    %v3662 = vpop.f32.mrb[0].mxu0
    %v3663 = vadd.f32 0.0, %v3662
    %v3664 = vpop.f32.mrb[0].mxu0
    %v3665 = vadd.f32 0.0, %v3664
    %v3666 = vpop.f32.mrb[0].mxu0
    %v3667 = vpop.f32.mrb[0].mxu0
    %3668 = vdwg.mxu0
    %3669 = vmatprep.subr.bf16.mxu0 %v3567
    %3670 = vmatpush1.bf16.msra.mxu0 %v3566
    %3671 = vmatprep.subr.bf16.mxu0 %v3571
    %3672 = vmatpush1.bf16.msra.mxu0 %v3570
    %3673 = vmatprep.subr.bf16.mxu0 %v3575
    %3674 = vmatpush1.bf16.msra.mxu0 %v3574
    %3675 = vmatprep.subr.bf16.mxu0 %v3579
    %3676 = vmatpush1.bf16.msra.mxu0 %v3578
    %3677 = vmatprep.subr.bf16.mxu0 %v3583
    %3678 = vmatpush1.bf16.msra.mxu0 %v3582
    %3679 = vmatprep.subr.bf16.mxu0 %v3587
    %3680 = vmatpush1.bf16.msra.mxu0 %v3586
    %3681 = vmatprep.subr.bf16.mxu0 %v3591
    %3682 = vmatpush1.bf16.msra.mxu0 %v3590
    %3683 = vmatprep.subr.bf16.mxu0 %v3595
    %3684 = vmatpush1.bf16.msra.mxu0 %v3594
    %3685 = vmatprep.subr.bf16.mxu0 0
    %3686 = vmatpush1.bf16.msra.mxu0 0
    %3687 = vmatprep.subr.bf16.mxu0 0
    %3688 = vmatpush1.bf16.msra.mxu0 0
    %3689 = vmatprep.subr.bf16.mxu0 0
    %3690 = vmatpush1.bf16.msra.mxu0 0
    %3691 = vmatprep.subr.bf16.mxu0 0
    %3692 = vmatpush1.bf16.msra.mxu0 0
    %3693 = vmatprep.subr.bf16.mxu0 0
    %3694 = vmatpush1.bf16.msra.mxu0 0
    %3695 = vmatprep.subr.bf16.mxu0 0
    %3696 = vmatpush1.bf16.msra.mxu0 0
    %3697 = vmatprep.subr.bf16.mxu0 0
    %3698 = vmatpush1.bf16.msra.mxu0 0
    %3699 = vmatprep.subr.bf16.mxu0 0
    %3700 = vmatpush1.bf16.msra.mxu0 0
    %3701 = vmatprep.mubr.bf16.mxu0 0
    %3702 = vmatmul.mubr.bf16.gmra.mrb[0].mxu0 %v3435
    %v3703 = vpop.f32.mrb[0].mxu0
    %v3704 = vadd.f32 0.0, %v3703
    %v3705 = vpop.f32.mrb[0].mxu0
    %v3706 = vadd.f32 0.0, %v3705
    %v3707 = vpop.f32.mrb[0].mxu0
    %v3708 = vpop.f32.mrb[0].mxu0
    %3709 = vdwg.mxu0
    %v3710 = vadd.f32 %v3431, %v3663
    %v3711 = vadd.f32 %v3432, %v3665
    %v3712 = vadd.f32 %v3433, %v3704
    %v3713 = vadd.f32 %v3434, %v3706
    %v3714 = vxor.u32 %v3710, 2147483648
    %v3715 = vmul.f32 %v3714, 1.442695
    %v3716 = vpow.pop %v3715
    %v3717 = vadd.f32 %v3716, 1.0
    %v3718 = vrcp.pop %v3717
    %v3719 = vmul.f32 1.0, %v3718
    %v3720 = vxor.u32 %v3711, 2147483648
    %v3721 = vmul.f32 %v3720, 1.442695
    %v3722 = vpow.pop %v3721
    %v3723 = vadd.f32 %v3722, 1.0
    %v3724 = vrcp.pop %v3723
    %v3725 = vmul.f32 1.0, %v3724
    %v3726 = vtanh.pop %v3712
    %v3727 = vxor.u32 %v3713, 2147483648
    %v3728 = vmul.f32 %v3727, 1.442695
    %v3729 = vpow.pop %v3728
    %v3730 = vadd.f32 %v3729, 1.0
    %v3731 = vrcp.pop %v3730
    %v3732 = vmul.f32 1.0, %v3731
    %v3733 = vmul.f32 %v3725, %v3424
    %v3734 = vmul.f32 %v3719, %v3726
    %v3735 = vadd.f32 %v3733, %v3734
    %v3736 = vtanh.pop %v3735
    %v3737 = vmul.f32 %v3732, %v3736
    %s3738 = smul.u32 %s3418, 2
    %s3739 = sadd.s32 %s3738, 1
    %s3740 = smul.u32 %s3739, 8
    %s3741 = sshra.s32 %s3740, 3
    %s3742 = sand.u32 %s3740, 7
    %s3743 = smul.u32 %s3741, 4
    %s3744 = smul.addr %s3743, 8
    %s3745 = scalar_lea.vmem [#allocation3], %s3744
    %v3746 = vld [vmem:[%s3745] sm:$0xff]
    %v3747 = vld [vmem:[%s3745 + $0x8] sm:$0xff]
    %v3748 = vld [vmem:[%s3745 + $0x10] sm:$0xff]
    %v3749 = vld [vmem:[%s3745 + $0x18] sm:$0xff]
    %v3750 = vpack.c.bf16 %v3737, %v3737
    %3751 = vmatprep.subr.bf16.mxu0 %v3565
    %3752 = vmatpush1.bf16.msra.mxu0 %v3564
    %3753 = vmatprep.subr.bf16.mxu0 %v3569
    %3754 = vmatpush1.bf16.msra.mxu0 %v3568
    %3755 = vmatprep.subr.bf16.mxu0 %v3573
    %3756 = vmatpush1.bf16.msra.mxu0 %v3572
    %3757 = vmatprep.subr.bf16.mxu0 %v3577
    %3758 = vmatpush1.bf16.msra.mxu0 %v3576
    %3759 = vmatprep.subr.bf16.mxu0 %v3581
    %3760 = vmatpush1.bf16.msra.mxu0 %v3580
    %3761 = vmatprep.subr.bf16.mxu0 %v3585
    %3762 = vmatpush1.bf16.msra.mxu0 %v3584
    %3763 = vmatprep.subr.bf16.mxu0 %v3589
    %3764 = vmatpush1.bf16.msra.mxu0 %v3588
    %3765 = vmatprep.subr.bf16.mxu0 %v3593
    %3766 = vmatpush1.bf16.msra.mxu0 %v3592
    %3767 = vmatprep.subr.bf16.mxu0 0
    %3768 = vmatpush1.bf16.msra.mxu0 0
    %3769 = vmatprep.subr.bf16.mxu0 0
    %3770 = vmatpush1.bf16.msra.mxu0 0
    %3771 = vmatprep.subr.bf16.mxu0 0
    %3772 = vmatpush1.bf16.msra.mxu0 0
    %3773 = vmatprep.subr.bf16.mxu0 0
    %3774 = vmatpush1.bf16.msra.mxu0 0
    %3775 = vmatprep.subr.bf16.mxu0 0
    %3776 = vmatpush1.bf16.msra.mxu0 0
    %3777 = vmatprep.subr.bf16.mxu0 0
    %3778 = vmatpush1.bf16.msra.mxu0 0
    %3779 = vmatprep.subr.bf16.mxu0 0
    %3780 = vmatpush1.bf16.msra.mxu0 0
    %3781 = vmatprep.subr.bf16.mxu0 0
    %3782 = vmatpush1.bf16.msra.mxu0 0
    %3783 = vmatprep.mubr.bf16.mxu0 0
    %3784 = vmatmul.mubr.bf16.gmra.mrb[0].mxu0 %v3750
    %v3785 = vpop.f32.mrb[0].mxu0
    %v3786 = vadd.f32 0.0, %v3785
    %v3787 = vpop.f32.mrb[0].mxu0
    %v3788 = vadd.f32 0.0, %v3787
    %v3789 = vpop.f32.mrb[0].mxu0
    %v3790 = vpop.f32.mrb[0].mxu0
    %3791 = vdwg.mxu0
    %3792 = vmatprep.subr.bf16.mxu0 %v3567
    %3793 = vmatpush1.bf16.msra.mxu0 %v3566
    %3794 = vmatprep.subr.bf16.mxu0 %v3571
    %3795 = vmatpush1.bf16.msra.mxu0 %v3570
    %3796 = vmatprep.subr.bf16.mxu0 %v3575
    %3797 = vmatpush1.bf16.msra.mxu0 %v3574
    %3798 = vmatprep.subr.bf16.mxu0 %v3579
    %3799 = vmatpush1.bf16.msra.mxu0 %v3578
    %3800 = vmatprep.subr.bf16.mxu0 %v3583
    %3801 = vmatpush1.bf16.msra.mxu0 %v3582
    %3802 = vmatprep.subr.bf16.mxu0 %v3587
    %3803 = vmatpush1.bf16.msra.mxu0 %v3586
    %3804 = vmatprep.subr.bf16.mxu0 %v3591
    %3805 = vmatpush1.bf16.msra.mxu0 %v3590
    %3806 = vmatprep.subr.bf16.mxu0 %v3595
    %3807 = vmatpush1.bf16.msra.mxu0 %v3594
    %3808 = vmatprep.subr.bf16.mxu0 0
    %3809 = vmatpush1.bf16.msra.mxu0 0
    %3810 = vmatprep.subr.bf16.mxu0 0
    %3811 = vmatpush1.bf16.msra.mxu0 0
    %3812 = vmatprep.subr.bf16.mxu0 0
    %3813 = vmatpush1.bf16.msra.mxu0 0
    %3814 = vmatprep.subr.bf16.mxu0 0
    %3815 = vmatpush1.bf16.msra.mxu0 0
    %3816 = vmatprep.subr.bf16.mxu0 0
    %3817 = vmatpush1.bf16.msra.mxu0 0
    %3818 = vmatprep.subr.bf16.mxu0 0
    %3819 = vmatpush1.bf16.msra.mxu0 0
    %3820 = vmatprep.subr.bf16.mxu0 0
    %3821 = vmatpush1.bf16.msra.mxu0 0
    %3822 = vmatprep.subr.bf16.mxu0 0
    %3823 = vmatpush1.bf16.msra.mxu0 0
    %3824 = vmatprep.mubr.bf16.mxu0 0
    %3825 = vmatmul.mubr.bf16.gmra.mrb[0].mxu0 %v3750
    %v3826 = vpop.f32.mrb[0].mxu0
    %v3827 = vadd.f32 0.0, %v3826
    %v3828 = vpop.f32.mrb[0].mxu0
    %v3829 = vadd.f32 0.0, %v3828
    %v3830 = vpop.f32.mrb[0].mxu0
    %v3831 = vpop.f32.mrb[0].mxu0
    %3832 = vdwg.mxu0
    %v3833 = vadd.f32 %v3746, %v3786
    %v3834 = vadd.f32 %v3747, %v3788
    %v3835 = vadd.f32 %v3748, %v3827
    %v3836 = vadd.f32 %v3749, %v3829
    %v3837 = vxor.u32 %v3833, 2147483648
    %v3838 = vmul.f32 %v3837, 1.442695
    %v3839 = vpow.pop %v3838
    %v3840 = vadd.f32 %v3839, 1.0
    %v3841 = vrcp.pop %v3840
    %v3842 = vmul.f32 1.0, %v3841
    %v3843 = vxor.u32 %v3834, 2147483648
    %v3844 = vmul.f32 %v3843, 1.442695
    %v3845 = vpow.pop %v3844
    %v3846 = vadd.f32 %v3845, 1.0
    %v3847 = vrcp.pop %v3846
    %v3848 = vmul.f32 1.0, %v3847
    %v3849 = vtanh.pop %v3835
    %v3850 = vxor.u32 %v3836, 2147483648
    %v3851 = vmul.f32 %v3850, 1.442695
    %v3852 = vpow.pop %v3851
    %v3853 = vadd.f32 %v3852, 1.0
    %v3854 = vrcp.pop %v3853
    %v3855 = vmul.f32 1.0, %v3854
    %v3856 = vmul.f32 %v3848, %v3735
    %v3857 = vmul.f32 %v3842, %v3849
    %v3858 = vadd.f32 %v3856, %v3857
    %v3859 = vtanh.pop %v3858
    %v3860 = vmul.f32 %v3855, %v3859
  $region49: #{lstm_baseline_forward.1} parent=0 // loop_footer
    %s3422 = sadd.s32 1, %s3418
  $region50: #{lstm_baseline_forward.1} parent=0 // loop_footer_branch
    %3417 = sbr.rel target = $region46
  $region51: #{lstm_baseline_forward.1} parent=0 // loop_exit
    _
  %v3861 = vld [vmem:[%s7] sm:$0x1]
  %v3863 = vlaneseq
  %v3864 = vshrl.u32 %v3863, 7
  %v3865 = vsub.s32 0, %v3864
  %v3866 = vrot.slane %v3861, %v3865
  %v3868 = vmul.f32 %v3423, %v3866
  %3869 = vadd.xlane.f32.xlu0 %v3868
  %v3870 = vpop.xlane.xlu0 %3869
  %v3871 = vld [vmem:[#allocation4] sm:$0x1]
  %v3873 = vlaneseq
  %v3874 = vshrl.u32 %v3873, 7
  %v3875 = vsub.s32 0, %v3874
  %v3876 = vrot.slane %v3871, %v3875
  %v3878 = vadd.f32 %v3870, %v3876
  %v3879 = vxor.u32 %v3878, 2147483648
  %v3880 = vmul.f32 %v3879, 1.442695
  %v3881 = vpow.pop %v3880
  %v3882 = vadd.f32 %v3881, 1.0
  %v3883 = vrcp.pop %v3882
  %v3884 = vmul.f32 1.0, %v3883
  %vm3885 = vcmask 7168
  %3886 = vst.msk [vmem:[%s9] sm:$0xff] %vm3885, %v3884
  // Predicated region
  $region52: #{lstm_baseline_forward.1} parent=0 // pred_check
    _
  $region53: #{lstm_baseline_forward.1} parent=0 // pred_check_branch
    %3888 = sbr.rel (0) target = $region55
  $region54: #{lstm_baseline_forward.1} parent=0 // pred_region
    _
  $region55: #{lstm_baseline_forward.1} parent=0 // pred_fallthru
    _
  // Predicated region
  $region56: #{lstm_baseline_forward.1} parent=0 // pred_check
    _
  $region57: #{lstm_baseline_forward.1} parent=0 // pred_check_branch
    %3890 = sbr.rel (0) target = $region59
  $region58: #{lstm_baseline_forward.1} parent=0 // pred_region
    _
  $region59: #{lstm_baseline_forward.1} parent=0 // pred_fallthru
    _

</llo_original>
